<compile_context>
chip_gen: v6e
topology: v6e:2x2x1
jax: 0.10.0
libtpu: 0.0.40
codegen_flags: <defaults>
</compile_context>

<pallas_src>
import functools

import jax
import jax.numpy as jnp
from jax import lax
from jax.experimental import pallas as pl
from jax.experimental.pallas import tpu as pltpu


# ------------------------------- Kernels -----------------------------------
def _encoder_kernel(x_ref, wx_ref, wh_ref, bx_ref, bh_ref, hT_ref, gx_scr,
                    *, tc, unroll):
    """GRU encoder over one T-chunk; hidden carried in the resident output."""
    bc, H = hT_ref.shape

    @pl.when(pl.program_id(1) == 0)
    def _init():
        hT_ref[...] = jnp.zeros_like(hT_ref)

    # Hoisted input-side gates for the whole chunk: one big MXU matmul.
    x2d = x_ref[...].reshape(tc * bc, x_ref.shape[-1])          # (Tc*Bc, E) bf16
    gx = jnp.dot(x2d, wx_ref[...], preferred_element_type=jnp.float32)
    gx_scr[...] = gx.reshape(tc, bc, 3 * H) + bx_ref[...]       # (Tc, Bc, 3H) f32

    # Hoist recurrent weights/bias out of the unrolled loop (no CSE otherwise).
    wh = wh_ref[...]
    bh = bh_ref[...]

    def step(t, h):
        gxt = gx_scr[t]                                          # (Bc, 3H) f32
        gh = jnp.dot(h.astype(jnp.bfloat16), wh,
                     preferred_element_type=jnp.float32) + bh    # (Bc, 3H) f32
        r = jax.nn.sigmoid(gxt[:, :H] + gh[:, :H])
        z = jax.nn.sigmoid(gxt[:, H:2 * H] + gh[:, H:2 * H])
        n = jnp.tanh(gxt[:, 2 * H:] + r * gh[:, 2 * H:])
        return (1.0 - z) * n + z * h

    hT_ref[...] = lax.fori_loop(0, tc, step, hT_ref[...], unroll=unroll)


def _decoder_kernel(x_ref, h0_ref, wx_ref, wh_ref, wc_ref, bx_ref, bh_ref,
                    hs_ref, h_scr, ctx_scr, gx_scr, *, tc, unroll):
    """GRU decoder over one T-chunk; h carried in VMEM scratch across chunks.

    The context (= encoder final hidden for a single-layer GRU) is
    time-invariant; its gate contribution ctx @ Wc is computed once (chunk 0)
    and cached in VMEM scratch.
    """
    bc, H = h0_ref.shape

    @pl.when(pl.program_id(1) == 0)
    def _init():
        h0 = h0_ref[...]
        h_scr[...] = h0
        ctx_scr[...] = jnp.dot(h0.astype(jnp.bfloat16), wc_ref[...],
                               preferred_element_type=jnp.float32)

    # Hoisted input-side gates for the chunk (+ bias + time-invariant context).
    x2d = x_ref[...].reshape(tc * bc, x_ref.shape[-1])           # (Tc*Bc, E) bf16
    gx = jnp.dot(x2d, wx_ref[...], preferred_element_type=jnp.float32)
    gx_scr[...] = (gx.reshape(tc, bc, 3 * H) + bx_ref[...]
                   + ctx_scr[...][None])                          # (Tc, Bc, 3H)

    wh = wh_ref[...]
    bh = bh_ref[...]

    def step(t, h):
        gxt = gx_scr[t]                                          # (Bc, 3H) f32
        gh = jnp.dot(h.astype(jnp.bfloat16), wh,
                     preferred_element_type=jnp.float32) + bh
        r = jax.nn.sigmoid(gxt[:, :H] + gh[:, :H])
        z = jax.nn.sigmoid(gxt[:, H:2 * H] + gh[:, H:2 * H])
        n = jnp.tanh(gxt[:, 2 * H:] + r * gh[:, 2 * H:])
        h_new = (1.0 - z) * n + z * h
        hs_ref[t] = h_new.astype(hs_ref.dtype)
        return h_new

    h_scr[...] = lax.fori_loop(0, tc, step, h_scr[...], unroll=unroll)


def _proj_kernel(h_ref, w_ref, b_ref, out_ref):
    """Lane-dense dense layer tile: one MXU matmul + bias."""
    out_ref[...] = (jnp.dot(h_ref[...], w_ref[...],
                            preferred_element_type=jnp.float32)
                    + b_ref[...]).astype(out_ref.dtype)


# ------------------------------- Wrappers -----------------------------------
def _chunking(T, B, t_chunk, nb):
    tc = t_chunk if (t_chunk <= T and T % t_chunk == 0) else T
    nt = T // tc
    if nb < 1 or B % nb != 0 or (B // nb) % 8 != 0:
        nb = 1                      # batch blocks must keep sublane alignment
    bc = B // nb
    unroll = True if tc <= 16 else 8
    return tc, nt, nb, bc, unroll


def encoder_gru(x, wx, wh, bx, bh, *, t_chunk=8, nb=1):
    """x: (T, B, E) bf16 -> final hidden state (B, H) f32.

    Set nb=2 on v7x (when B//2 is a multiple of 8) to run half the batch's
    recurrence on each TensorCore.
    """
    T, B, E = x.shape
    H = wh.shape[0]
    tc, nt, nb, bc, unroll = _chunking(T, B, t_chunk, nb)
    return pl.pallas_call(
        functools.partial(_encoder_kernel, tc=tc, unroll=unroll),
        out_shape=jax.ShapeDtypeStruct((B, H), jnp.float32),
        grid_spec=pltpu.PrefetchScalarGridSpec(
            num_scalar_prefetch=0,
            grid=(nb, nt),
            in_specs=[
                pl.BlockSpec((tc, bc, E), lambda b, t: (t, b, 0)),
                pl.BlockSpec((E, 3 * H), lambda b, t: (0, 0)),
                pl.BlockSpec((H, 3 * H), lambda b, t: (0, 0)),
                pl.BlockSpec((1, 3 * H), lambda b, t: (0, 0)),
                pl.BlockSpec((1, 3 * H), lambda b, t: (0, 0)),
            ],
            out_specs=pl.BlockSpec((bc, H), lambda b, t: (b, 0)),
            scratch_shapes=[pltpu.VMEM((tc, bc, 3 * H), jnp.float32)],
        ),
        compiler_params=pltpu.CompilerParams(
            dimension_semantics=("parallel", "arbitrary")),
    )(x, wx, wh, bx, bh)


def decoder_gru(x, h0, wx, wh, wc, bx, bh, *, t_chunk=8, nb=1):
    """x: (T, B, E) bf16, h0: (B, H) f32 -> hidden states (T, B, H) bf16."""
    T, B, E = x.shape
    H = wh.shape[0]
    tc, nt, nb, bc, unroll = _chunking(T, B, t_chunk, nb)
    return pl.pallas_call(
        functools.partial(_decoder_kernel, tc=tc, unroll=unroll),
        out_shape=jax.ShapeDtypeStruct((T, B, H), jnp.bfloat16),
        grid_spec=pltpu.PrefetchScalarGridSpec(
            num_scalar_prefetch=0,
            grid=(nb, nt),
            in_specs=[
                pl.BlockSpec((tc, bc, E), lambda b, t: (t, b, 0)),
                pl.BlockSpec((bc, H), lambda b, t: (b, 0)),
                pl.BlockSpec((E, 3 * H), lambda b, t: (0, 0)),
                pl.BlockSpec((H, 3 * H), lambda b, t: (0, 0)),
                pl.BlockSpec((H, 3 * H), lambda b, t: (0, 0)),
                pl.BlockSpec((1, 3 * H), lambda b, t: (0, 0)),
                pl.BlockSpec((1, 3 * H), lambda b, t: (0, 0)),
            ],
            out_specs=pl.BlockSpec((tc, bc, H), lambda b, t: (t, b, 0)),
            scratch_shapes=[
                pltpu.VMEM((bc, H), jnp.float32),          # hidden carry
                pltpu.VMEM((bc, 3 * H), jnp.float32),      # ctx @ Wc (cached)
                pltpu.VMEM((tc, bc, 3 * H), jnp.float32),  # hoisted input gates
            ],
        ),
        compiler_params=pltpu.CompilerParams(
            dimension_semantics=("parallel", "arbitrary")),
    )(x, h0, wx, wh, wc, bx, bh)


def vocab_projection(h2d, w, b, *, tm_pref=512, tn_pref=1024):
    """h2d: (M, H) bf16, w: (H, V) bf16, b: (1, V) f32 -> (M, V) f32.

    Grid = (V tiles outer, M tiles inner): the W block index is constant along
    the innermost axis, so W streams from HBM exactly once while the (small)
    activation tiles re-stream — the projection is HBM-bound at real sizes.
    """
    M, H = h2d.shape
    V = w.shape[1]
    tm = M if M <= tm_pref else tm_pref          # multiple of 8
    tn = V if V <= tn_pref else tn_pref          # multiple of 128
    return pl.pallas_call(
        _proj_kernel,
        out_shape=jax.ShapeDtypeStruct((M, V), jnp.float32),
        grid_spec=pltpu.PrefetchScalarGridSpec(
            num_scalar_prefetch=0,
            grid=(pl.cdiv(V, tn), pl.cdiv(M, tm)),
            in_specs=[
                pl.BlockSpec((tm, H), lambda j, i: (i, 0)),
                pl.BlockSpec((H, tn), lambda j, i: (0, j)),
                pl.BlockSpec((1, tn), lambda j, i: (0, j)),
            ],
            out_specs=pl.BlockSpec((tm, tn), lambda j, i: (i, j)),
        ),
        compiler_params=pltpu.CompilerParams(
            dimension_semantics=("parallel", "parallel")),
    )(h2d, w, b)


# --------------------------- Params & forward -------------------------------
def init_params(key, vocab_src, vocab_tgt, embed, hidden):
    ks = jax.random.split(key, 13)
    s = 0.1

    def g(k, shape, dtype=jnp.float32):
        return (s * jax.random.normal(k, shape, jnp.float32)).astype(dtype)

    # Gate packing along the last dim is [r | z | n] with weights stored
    # (in_features, 3H); importing PyTorch checkpoints (weight_ih: (3H, in))
    # requires a transpose (gate order already matches torch's r,z,n).
    return {
        "enc_emb": g(ks[0], (vocab_src, embed), jnp.bfloat16),
        "dec_emb": g(ks[1], (vocab_tgt, embed), jnp.bfloat16),
        "enc_wx": g(ks[2], (embed, 3 * hidden), jnp.bfloat16),
        "enc_wh": g(ks[3], (hidden, 3 * hidden), jnp.bfloat16),
        "enc_bx": g(ks[4], (1, 3 * hidden)),
        "enc_bh": g(ks[5], (1, 3 * hidden)),
        "dec_wx": g(ks[6], (embed, 3 * hidden), jnp.bfloat16),
        "dec_wh": g(ks[7], (hidden, 3 * hidden), jnp.bfloat16),
        "dec_wc": g(ks[8], (hidden, 3 * hidden), jnp.bfloat16),  # context -> gates
        "dec_bx": g(ks[9], (1, 3 * hidden)),
        "dec_bh": g(ks[10], (1, 3 * hidden)),
        "out_w": g(ks[11], (hidden, vocab_tgt), jnp.bfloat16),
        "out_b": g(ks[12], (1, vocab_tgt)),
    }


@jax.jit
def encoder_decoder_forward(params, enc_tokens, dec_tokens):
    """Mirrors EncoderDecoder.forward(enc_X, dec_X) -> decoder(dec_X, state)[0]."""
    # --- encoder(enc_X) ---
    enc_emb = jnp.take(params["enc_emb"], enc_tokens, axis=0)   # (B, Te, E) bf16
    enc_x = jnp.transpose(enc_emb, (1, 0, 2))                   # (Te, B, E)
    h_final = encoder_gru(enc_x, params["enc_wx"], params["enc_wh"],
                          params["enc_bx"], params["enc_bh"])   # (B, H) f32

    # --- decoder.init_state(enc_all_outputs) ---
    # Single-layer GRU: context (= enc_outputs[-1]) == final hidden state.
    h0 = h_final

    # --- decoder(dec_X, dec_state)[0] ---
    dec_emb = jnp.take(params["dec_emb"], dec_tokens, axis=0)   # (B, Td, E) bf16
    dec_x = jnp.transpose(dec_emb, (1, 0, 2))                   # (Td, B, E)
    hidden = decoder_gru(dec_x, h0, params["dec_wx"], params["dec_wh"],
                         params["dec_wc"], params["dec_bx"],
                         params["dec_bh"])                      # (Td, B, H) bf16

    Td, B, H = hidden.shape
    V = params["out_w"].shape[1]
    # Transpose the SMALL bf16 hidden tensor (not the big f32 logits) so the
    # projection output is already (B*Td, V) and the final reshape is free.
    h2d = jnp.transpose(hidden, (1, 0, 2)).reshape(B * Td, H)
    logits = vocab_projection(h2d, params["out_w"], params["out_b"])
    return logits.reshape(B, Td, V)                             # (B, Td, V) f32


if __name__ == "__main__":
    # B multiple of 8 (sublanes), H multiple of 128 (lane-aligned gate slices),
    # V_TGT multiple of 128 (lane-dense projection stores).
    B, T_ENC, T_DEC = 8, 8, 8
    V_SRC, V_TGT, E, H = 64, 256, 32, 128

    key = jax.random.PRNGKey(0)
    k_par, k_src, k_tgt = jax.random.split(key, 3)
    params = init_params(k_par, V_SRC, V_TGT, E, H)

    enc_tokens = jax.random.randint(k_src, (B, T_ENC), 0, V_SRC, dtype=jnp.int32)
    dec_tokens = jax.random.randint(k_tgt, (B, T_DEC), 0, V_TGT, dtype=jnp.int32)

    out = encoder_decoder_forward(params, enc_tokens, dec_tokens)
    out = jax.block_until_ready(out)

    assert out.shape == (B, T_DEC, V_TGT), out.shape
    assert out.dtype == jnp.float32
    assert bool(jnp.all(jnp.isfinite(out)))
    print("KERNEL_OK")
</pallas_src>

<mosaic_0001>
module attributes {stable_mosaic.version = 11 : i64} {
  func.func @_proj_kernel(%arg0: i32, %arg1: i32, %arg2: memref<64x128xbf16, #tpu.memory_space<vmem>>, %arg3: memref<128x256xbf16, #tpu.memory_space<vmem>>, %arg4: memref<1x256xf32, #tpu.memory_space<vmem>>, %arg5: memref<64x256xf32, #tpu.memory_space<vmem>>) attributes {dimension_semantics = [#tpu.dimension_semantics<parallel>, #tpu.dimension_semantics<parallel>], iteration_bounds = array<i64: 1, 1>, scalar_prefetch = 0 : i64, scratch_operands = 0 : i64, tpu.core_type = #tpu.core_type<tc>, window_params = [{transform_indices = @transform_0, window_bounds = array<i64: 64, 128>}, {transform_indices = @transform_1, window_bounds = array<i64: 128, 256>}, {transform_indices = @transform_2, window_bounds = array<i64: 1, 256>}, {transform_indices = @transform_3, window_bounds = array<i64: 64, 256>}]} {
    %c0 = arith.constant 0 : index
    %c0_0 = arith.constant 0 : index
    %0 = vector.load %arg2[%c0, %c0_0] : memref<64x128xbf16, #tpu.memory_space<vmem>>, vector<64x128xbf16>
    %c0_1 = arith.constant 0 : index
    %c0_2 = arith.constant 0 : index
    %1 = vector.load %arg3[%c0_1, %c0_2] : memref<128x256xbf16, #tpu.memory_space<vmem>>, vector<128x256xbf16>
    %cst = arith.constant dense<0.000000e+00> : vector<64x256xf32>
    %2 = tpu.matmul %0, %1, %cst {dimension_numbers = #tpu.dot_dimension_numbers<[1], [0], [0], [1], [0, 0, 1, 1], [], []>} : vector<64x128xbf16>, vector<128x256xbf16>, vector<64x256xf32> -> vector<64x256xf32>
    %c0_3 = arith.constant 0 : index
    %c0_4 = arith.constant 0 : index
    %3 = vector.load %arg4[%c0_3, %c0_4] : memref<1x256xf32, #tpu.memory_space<vmem>>, vector<1x256xf32>
    %4 = vector.broadcast %3 : vector<1x256xf32> to vector<64x256xf32>
    %5 = arith.addf %2, %4 : vector<64x256xf32>
    %c0_5 = arith.constant 0 : index
    %c0_6 = arith.constant 0 : index
    %6 = vector.load %arg5[%c0_5, %c0_6] : memref<64x256xf32, #tpu.memory_space<vmem>>, vector<64x256xf32>
    tpu.vector_store %arg5[%c0_5, %c0_6], %5 {strides = array<i32>} : memref<64x256xf32, #tpu.memory_space<vmem>>, vector<64x256xf32>,
    return
  }
  func.func @transform_0(%arg0: i32, %arg1: i32) -> (i32, i32) {
    %c0_i32 = arith.constant 0 : i32
    %c0_i32_0 = arith.constant 0 : i32
    return %arg1, %c0_i32 : i32, i32
  }
  func.func @transform_1(%arg0: i32, %arg1: i32) -> (i32, i32) {
    %c0_i32 = arith.constant 0 : i32
    %c0_i32_0 = arith.constant 0 : i32
    return %c0_i32, %arg0 : i32, i32
  }
  func.func @transform_2(%arg0: i32, %arg1: i32) -> (i32, i32) {
    %c0_i32 = arith.constant 0 : i32
    %c0_i32_0 = arith.constant 0 : i32
    return %c0_i32, %arg0 : i32, i32
  }
  func.func @transform_3(%arg0: i32, %arg1: i32) -> (i32, i32) {
    %c0_i32 = arith.constant 0 : i32
    return %arg1, %arg0 : i32, i32
  }
}

module attributes {stable_mosaic.version = 11 : i64} {
  func.func @_encoder_kernel(%arg0: i32, %arg1: i32, %arg2: memref<8x8x32xbf16, #tpu.memory_space<vmem>>, %arg3: memref<32x384xbf16, #tpu.memory_space<vmem>>, %arg4: memref<128x384xbf16, #tpu.memory_space<vmem>>, %arg5: memref<1x384xf32, #tpu.memory_space<vmem>>, %arg6: memref<1x384xf32, #tpu.memory_space<vmem>>, %arg7: memref<8x128xf32, #tpu.memory_space<vmem>>, %arg8: memref<8x8x384xf32, #tpu.memory_space<vmem>>) attributes {dimension_semantics = [#tpu.dimension_semantics<parallel>, #tpu.dimension_semantics<arbitrary>], iteration_bounds = array<i64: 1, 1>, scalar_prefetch = 0 : i64, scratch_operands = 1 : i64, tpu.core_type = #tpu.core_type<tc>, window_params = [{transform_indices = @transform_0, window_bounds = array<i64: 8, 8, 32>}, {pipeline_mode = #tpu.pipeline_mode<synchronous>, transform_indices = @transform_1, window_bounds = array<i64: 32, 384>}, {pipeline_mode = #tpu.pipeline_mode<synchronous>, transform_indices = @transform_2, window_bounds = array<i64: 128, 384>}, {pipeline_mode = #tpu.pipeline_mode<synchronous>, transform_indices = @transform_3, window_bounds = array<i64: 1, 384>}, {pipeline_mode = #tpu.pipeline_mode<synchronous>, transform_indices = @transform_4, window_bounds = array<i64: 1, 384>}, {transform_indices = @transform_5, window_bounds = array<i64: 8, 128>}]} {
    %c0_i32 = arith.constant 0 : i32
    %0 = arith.cmpi eq, %arg1, %c0_i32 : i32
    %1 = arith.extui %0 : i1 to i32
    %c0_i32_0 = arith.constant 0 : i32
    %2 = arith.cmpi ne, %1, %c0_i32_0 : i32
    scf.if %2 {
      %cst_67 = arith.constant 0.000000e+00 : f32
      %281 = vector.broadcast %cst_67 : f32 to vector<8x128xf32>
      %c0_68 = arith.constant 0 : index
      %c0_69 = arith.constant 0 : index
      %282 = vector.load %arg7[%c0_68, %c0_69] : memref<8x128xf32, #tpu.memory_space<vmem>>, vector<8x128xf32>
      tpu.vector_store %arg7[%c0_68, %c0_69], %281 {strides = array<i32>} : memref<8x128xf32, #tpu.memory_space<vmem>>, vector<8x128xf32>,
    } else {
    }
    %c0 = arith.constant 0 : index
    %c0_1 = arith.constant 0 : index
    %c0_2 = arith.constant 0 : index
    %3 = vector.load %arg2[%c0, %c0_1, %c0_2] : memref<8x8x32xbf16, #tpu.memory_space<vmem>>, vector<8x8x32xbf16>
    %4 = vector.shape_cast %3 : vector<8x8x32xbf16> to vector<64x32xbf16>
    %c0_3 = arith.constant 0 : index
    %c0_4 = arith.constant 0 : index
    %5 = vector.load %arg3[%c0_3, %c0_4] : memref<32x384xbf16, #tpu.memory_space<vmem>>, vector<32x384xbf16>
    %cst = arith.constant dense<0.000000e+00> : vector<64x384xf32>
    %6 = tpu.matmul %4, %5, %cst {dimension_numbers = #tpu.dot_dimension_numbers<[1], [0], [0], [1], [0, 0, 1, 1], [], []>} : vector<64x32xbf16>, vector<32x384xbf16>, vector<64x384xf32> -> vector<64x384xf32>
    %7 = vector.shape_cast %6 : vector<64x384xf32> to vector<8x8x384xf32>
    %c0_5 = arith.constant 0 : index
    %c0_6 = arith.constant 0 : index
    %8 = vector.load %arg5[%c0_5, %c0_6] : memref<1x384xf32, #tpu.memory_space<vmem>>, vector<1x384xf32>
    %9 = vector.shape_cast %8 : vector<1x384xf32> to vector<1x1x384xf32>
    %10 = vector.broadcast %9 : vector<1x1x384xf32> to vector<8x8x384xf32>
    %11 = arith.addf %7, %10 : vector<8x8x384xf32>
    %c0_7 = arith.constant 0 : index
    %c0_8 = arith.constant 0 : index
    %c0_9 = arith.constant 0 : index
    %12 = vector.load %arg8[%c0_7, %c0_8, %c0_9] : memref<8x8x384xf32, #tpu.memory_space<vmem>>, vector<8x8x384xf32>
    tpu.vector_store %arg8[%c0_7, %c0_8, %c0_9], %11 {strides = array<i32>} : memref<8x8x384xf32, #tpu.memory_space<vmem>>, vector<8x8x384xf32>,
    %c0_10 = arith.constant 0 : index
    %c0_11 = arith.constant 0 : index
    %13 = vector.load %arg4[%c0_10, %c0_11] : memref<128x384xbf16, #tpu.memory_space<vmem>>, vector<128x384xbf16>
    %c0_12 = arith.constant 0 : index
    %c0_13 = arith.constant 0 : index
    %14 = vector.load %arg6[%c0_12, %c0_13] : memref<1x384xf32, #tpu.memory_space<vmem>>, vector<1x384xf32>
    %c0_14 = arith.constant 0 : index
    %c0_15 = arith.constant 0 : index
    %15 = vector.load %arg7[%c0_14, %c0_15] : memref<8x128xf32, #tpu.memory_space<vmem>>, vector<8x128xf32>
    %c0_i32_16 = arith.constant 0 : i32
    %16 = arith.index_cast %c0_i32_16 : i32 to index
    %c0_17 = arith.constant 0 : index
    %c0_18 = arith.constant 0 : index
    %17 = vector.load %arg8[%16, %c0_17, %c0_18] : memref<8x8x384xf32, #tpu.memory_space<vmem>>, vector<1x8x384xf32>
    %18 = vector.shape_cast %17 : vector<1x8x384xf32> to vector<8x384xf32>
    %19 = arith.truncf %15 : vector<8x128xf32> to vector<8x128xbf16>
    %cst_19 = arith.constant dense<0.000000e+00> : vector<8x384xf32>
    %20 = tpu.matmul %19, %13, %cst_19 {dimension_numbers = #tpu.dot_dimension_numbers<[1], [0], [0], [1], [0, 0, 1, 1], [], []>} : vector<8x128xbf16>, vector<128x384xbf16>, vector<8x384xf32> -> vector<8x384xf32>
    %21 = vector.broadcast %14 : vector<1x384xf32> to vector<8x384xf32>
    %22 = arith.addf %20, %21 : vector<8x384xf32>
    %23 = vector.extract_strided_slice %18 {offsets = [0, 0], sizes = [8, 128], strides = [1, 1]} : vector<8x384xf32> to vector<8x128xf32>
    %24 = vector.extract_strided_slice %22 {offsets = [0, 0], sizes = [8, 128], strides = [1, 1]} : vector<8x384xf32> to vector<8x128xf32>
    %25 = arith.addf %23, %24 : vector<8x128xf32>
    %26 = arith.negf %25 : vector<8x128xf32>
    %27 = math.exp %26 : vector<8x128xf32>
    %cst_20 = arith.constant 1.000000e+00 : f32
    %28 = vector.broadcast %cst_20 : f32 to vector<8x128xf32>
    %29 = arith.addf %28, %27 : vector<8x128xf32>
    %30 = arith.divf %28, %29 : vector<8x128xf32>
    %31 = vector.extract_strided_slice %18 {offsets = [0, 128], sizes = [8, 128], strides = [1, 1]} : vector<8x384xf32> to vector<8x128xf32>
    %32 = vector.extract_strided_slice %22 {offsets = [0, 128], sizes = [8, 128], strides = [1, 1]} : vector<8x384xf32> to vector<8x128xf32>
    %33 = arith.addf %31, %32 : vector<8x128xf32>
    %34 = arith.negf %33 : vector<8x128xf32>
    %35 = math.exp %34 : vector<8x128xf32>
    %cst_21 = arith.constant 1.000000e+00 : f32
    %36 = vector.broadcast %cst_21 : f32 to vector<8x128xf32>
    %37 = arith.addf %36, %35 : vector<8x128xf32>
    %38 = arith.divf %36, %37 : vector<8x128xf32>
    %39 = vector.extract_strided_slice %18 {offsets = [0, 256], sizes = [8, 128], strides = [1, 1]} : vector<8x384xf32> to vector<8x128xf32>
    %40 = vector.extract_strided_slice %22 {offsets = [0, 256], sizes = [8, 128], strides = [1, 1]} : vector<8x384xf32> to vector<8x128xf32>
    %41 = arith.mulf %30, %40 : vector<8x128xf32>
    %42 = arith.addf %39, %41 : vector<8x128xf32>
    %43 = math.tanh %42 : vector<8x128xf32>
    %cst_22 = arith.constant 1.000000e+00 : f32
    %44 = vector.broadcast %cst_22 : f32 to vector<8x128xf32>
    %45 = arith.subf %44, %38 : vector<8x128xf32>
    %46 = arith.mulf %45, %43 : vector<8x128xf32>
    %47 = arith.mulf %38, %15 : vector<8x128xf32>
    %48 = arith.addf %46, %47 : vector<8x128xf32>
    %c1_i32 = arith.constant 1 : i32
    %49 = arith.index_cast %c1_i32 : i32 to index
    %c0_23 = arith.constant 0 : index
    %c0_24 = arith.constant 0 : index
    %50 = vector.load %arg8[%49, %c0_23, %c0_24] : memref<8x8x384xf32, #tpu.memory_space<vmem>>, vector<1x8x384xf32>
    %51 = vector.shape_cast %50 : vector<1x8x384xf32> to vector<8x384xf32>
    %52 = arith.truncf %48 : vector<8x128xf32> to vector<8x128xbf16>
    %cst_25 = arith.constant dense<0.000000e+00> : vector<8x384xf32>
    %53 = tpu.matmul %52, %13, %cst_25 {dimension_numbers = #tpu.dot_dimension_numbers<[1], [0], [0], [1], [0, 0, 1, 1], [], []>} : vector<8x128xbf16>, vector<128x384xbf16>, vector<8x384xf32> -> vector<8x384xf32>
    %54 = vector.broadcast %14 : vector<1x384xf32> to vector<8x384xf32>
    %55 = arith.addf %53, %54 : vector<8x384xf32>
    %56 = vector.extract_strided_slice %51 {offsets = [0, 0], sizes = [8, 128], strides = [1, 1]} : vector<8x384xf32> to vector<8x128xf32>
    %57 = vector.extract_strided_slice %55 {offsets = [0, 0], sizes = [8, 128], strides = [1, 1]} : vector<8x384xf32> to vector<8x128xf32>
    %58 = arith.addf %56, %57 : vector<8x128xf32>
    %59 = arith.negf %58 : vector<8x128xf32>
    %60 = math.exp %59 : vector<8x128xf32>
    %cst_26 = arith.constant 1.000000e+00 : f32
    %61 = vector.broadcast %cst_26 : f32 to vector<8x128xf32>
    %62 = arith.addf %61, %60 : vector<8x128xf32>
    %63 = arith.divf %61, %62 : vector<8x128xf32>
    %64 = vector.extract_strided_slice %51 {offsets = [0, 128], sizes = [8, 128], strides = [1, 1]} : vector<8x384xf32> to vector<8x128xf32>
    %65 = vector.extract_strided_slice %55 {offsets = [0, 128], sizes = [8, 128], strides = [1, 1]} : vector<8x384xf32> to vector<8x128xf32>
    %66 = arith.addf %64, %65 : vector<8x128xf32>
    %67 = arith.negf %66 : vector<8x128xf32>
    %68 = math.exp %67 : vector<8x128xf32>
    %cst_27 = arith.constant 1.000000e+00 : f32
    %69 = vector.broadcast %cst_27 : f32 to vector<8x128xf32>
    %70 = arith.addf %69, %68 : vector<8x128xf32>
    %71 = arith.divf %69, %70 : vector<8x128xf32>
    %72 = vector.extract_strided_slice %51 {offsets = [0, 256], sizes = [8, 128], strides = [1, 1]} : vector<8x384xf32> to vector<8x128xf32>
    %73 = vector.extract_strided_slice %55 {offsets = [0, 256], sizes = [8, 128], strides = [1, 1]} : vector<8x384xf32> to vector<8x128xf32>
    %74 = arith.mulf %63, %73 : vector<8x128xf32>
    %75 = arith.addf %72, %74 : vector<8x128xf32>
    %76 = math.tanh %75 : vector<8x128xf32>
    %cst_28 = arith.constant 1.000000e+00 : f32
    %77 = vector.broadcast %cst_28 : f32 to vector<8x128xf32>
    %78 = arith.subf %77, %71 : vector<8x128xf32>
    %79 = arith.mulf %78, %76 : vector<8x128xf32>
    %80 = arith.mulf %71, %48 : vector<8x128xf32>
    %81 = arith.addf %79, %80 : vector<8x128xf32>
    %c2_i32 = arith.constant 2 : i32
    %82 = arith.index_cast %c2_i32 : i32 to index
    %c0_29 = arith.constant 0 : index
    %c0_30 = arith.constant 0 : index
    %83 = vector.load %arg8[%82, %c0_29, %c0_30] : memref<8x8x384xf32, #tpu.memory_space<vmem>>, vector<1x8x384xf32>
    %84 = vector.shape_cast %83 : vector<1x8x384xf32> to vector<8x384xf32>
    %85 = arith.truncf %81 : vector<8x128xf32> to vector<8x128xbf16>
    %cst_31 = arith.constant dense<0.000000e+00> : vector<8x384xf32>
    %86 = tpu.matmul %85, %13, %cst_31 {dimension_numbers = #tpu.dot_dimension_numbers<[1], [0], [0], [1], [0, 0, 1, 1], [], []>} : vector<8x128xbf16>, vector<128x384xbf16>, vector<8x384xf32> -> vector<8x384xf32>
    %87 = vector.broadcast %14 : vector<1x384xf32> to vector<8x384xf32>
    %88 = arith.addf %86, %87 : vector<8x384xf32>
    %89 = vector.extract_strided_slice %84 {offsets = [0, 0], sizes = [8, 128], strides = [1, 1]} : vector<8x384xf32> to vector<8x128xf32>
    %90 = vector.extract_strided_slice %88 {offsets = [0, 0], sizes = [8, 128], strides = [1, 1]} : vector<8x384xf32> to vector<8x128xf32>
    %91 = arith.addf %89, %90 : vector<8x128xf32>
    %92 = arith.negf %91 : vector<8x128xf32>
    %93 = math.exp %92 : vector<8x128xf32>
    %cst_32 = arith.constant 1.000000e+00 : f32
    %94 = vector.broadcast %cst_32 : f32 to vector<8x128xf32>
    %95 = arith.addf %94, %93 : vector<8x128xf32>
    %96 = arith.divf %94, %95 : vector<8x128xf32>
    %97 = vector.extract_strided_slice %84 {offsets = [0, 128], sizes = [8, 128], strides = [1, 1]} : vector<8x384xf32> to vector<8x128xf32>
    %98 = vector.extract_strided_slice %88 {offsets = [0, 128], sizes = [8, 128], strides = [1, 1]} : vector<8x384xf32> to vector<8x128xf32>
    %99 = arith.addf %97, %98 : vector<8x128xf32>
    %100 = arith.negf %99 : vector<8x128xf32>
    %101 = math.exp %100 : vector<8x128xf32>
    %cst_33 = arith.constant 1.000000e+00 : f32
    %102 = vector.broadcast %cst_33 : f32 to vector<8x128xf32>
    %103 = arith.addf %102, %101 : vector<8x128xf32>
    %104 = arith.divf %102, %103 : vector<8x128xf32>
    %105 = vector.extract_strided_slice %84 {offsets = [0, 256], sizes = [8, 128], strides = [1, 1]} : vector<8x384xf32> to vector<8x128xf32>
    %106 = vector.extract_strided_slice %88 {offsets = [0, 256], sizes = [8, 128], strides = [1, 1]} : vector<8x384xf32> to vector<8x128xf32>
    %107 = arith.mulf %96, %106 : vector<8x128xf32>
    %108 = arith.addf %105, %107 : vector<8x128xf32>
    %109 = math.tanh %108 : vector<8x128xf32>
    %cst_34 = arith.constant 1.000000e+00 : f32
    %110 = vector.broadcast %cst_34 : f32 to vector<8x128xf32>
    %111 = arith.subf %110, %104 : vector<8x128xf32>
    %112 = arith.mulf %111, %109 : vector<8x128xf32>
    %113 = arith.mulf %104, %81 : vector<8x128xf32>
    %114 = arith.addf %112, %113 : vector<8x128xf32>
    %c3_i32 = arith.constant 3 : i32
    %115 = arith.index_cast %c3_i32 : i32 to index
    %c0_35 = arith.constant 0 : index
    %c0_36 = arith.constant 0 : index
    %116 = vector.load %arg8[%115, %c0_35, %c0_36] : memref<8x8x384xf32, #tpu.memory_space<vmem>>, vector<1x8x384xf32>
    %117 = vector.shape_cast %116 : vector<1x8x384xf32> to vector<8x384xf32>
    %118 = arith.truncf %114 : vector<8x128xf32> to vector<8x128xbf16>
    %cst_37 = arith.constant dense<0.000000e+00> : vector<8x384xf32>
    %119 = tpu.matmul %118, %13, %cst_37 {dimension_numbers = #tpu.dot_dimension_numbers<[1], [0], [0], [1], [0, 0, 1, 1], [], []>} : vector<8x128xbf16>, vector<128x384xbf16>, vector<8x384xf32> -> vector<8x384xf32>
    %120 = vector.broadcast %14 : vector<1x384xf32> to vector<8x384xf32>
    %121 = arith.addf %119, %120 : vector<8x384xf32>
    %122 = vector.extract_strided_slice %117 {offsets = [0, 0], sizes = [8, 128], strides = [1, 1]} : vector<8x384xf32> to vector<8x128xf32>
    %123 = vector.extract_strided_slice %121 {offsets = [0, 0], sizes = [8, 128], strides = [1, 1]} : vector<8x384xf32> to vector<8x128xf32>
    %124 = arith.addf %122, %123 : vector<8x128xf32>
    %125 = arith.negf %124 : vector<8x128xf32>
    %126 = math.exp %125 : vector<8x128xf32>
    %cst_38 = arith.constant 1.000000e+00 : f32
    %127 = vector.broadcast %cst_38 : f32 to vector<8x128xf32>
    %128 = arith.addf %127, %126 : vector<8x128xf32>
    %129 = arith.divf %127, %128 : vector<8x128xf32>
    %130 = vector.extract_strided_slice %117 {offsets = [0, 128], sizes = [8, 128], strides = [1, 1]} : vector<8x384xf32> to vector<8x128xf32>
    %131 = vector.extract_strided_slice %121 {offsets = [0, 128], sizes = [8, 128], strides = [1, 1]} : vector<8x384xf32> to vector<8x128xf32>
    %132 = arith.addf %130, %131 : vector<8x128xf32>
    %133 = arith.negf %132 : vector<8x128xf32>
    %134 = math.exp %133 : vector<8x128xf32>
    %cst_39 = arith.constant 1.000000e+00 : f32
    %135 = vector.broadcast %cst_39 : f32 to vector<8x128xf32>
    %136 = arith.addf %135, %134 : vector<8x128xf32>
    %137 = arith.divf %135, %136 : vector<8x128xf32>
    %138 = vector.extract_strided_slice %117 {offsets = [0, 256], sizes = [8, 128], strides = [1, 1]} : vector<8x384xf32> to vector<8x128xf32>
    %139 = vector.extract_strided_slice %121 {offsets = [0, 256], sizes = [8, 128], strides = [1, 1]} : vector<8x384xf32> to vector<8x128xf32>
    %140 = arith.mulf %129, %139 : vector<8x128xf32>
    %141 = arith.addf %138, %140 : vector<8x128xf32>
    %142 = math.tanh %141 : vector<8x128xf32>
    %cst_40 = arith.constant 1.000000e+00 : f32
    %143 = vector.broadcast %cst_40 : f32 to vector<8x128xf32>
    %144 = arith.subf %143, %137 : vector<8x128xf32>
    %145 = arith.mulf %144, %142 : vector<8x128xf32>
    %146 = arith.mulf %137, %114 : vector<8x128xf32>
    %147 = arith.addf %145, %146 : vector<8x128xf32>
    %c4_i32 = arith.constant 4 : i32
    %148 = arith.index_cast %c4_i32 : i32 to index
    %c0_41 = arith.constant 0 : index
    %c0_42 = arith.constant 0 : index
    %149 = vector.load %arg8[%148, %c0_41, %c0_42] : memref<8x8x384xf32, #tpu.memory_space<vmem>>, vector<1x8x384xf32>
    %150 = vector.shape_cast %149 : vector<1x8x384xf32> to vector<8x384xf32>
    %151 = arith.truncf %147 : vector<8x128xf32> to vector<8x128xbf16>
    %cst_43 = arith.constant dense<0.000000e+00> : vector<8x384xf32>
    %152 = tpu.matmul %151, %13, %cst_43 {dimension_numbers = #tpu.dot_dimension_numbers<[1], [0], [0], [1], [0, 0, 1, 1], [], []>} : vector<8x128xbf16>, vector<128x384xbf16>, vector<8x384xf32> -> vector<8x384xf32>
    %153 = vector.broadcast %14 : vector<1x384xf32> to vector<8x384xf32>
    %154 = arith.addf %152, %153 : vector<8x384xf32>
    %155 = vector.extract_strided_slice %150 {offsets = [0, 0], sizes = [8, 128], strides = [1, 1]} : vector<8x384xf32> to vector<8x128xf32>
    %156 = vector.extract_strided_slice %154 {offsets = [0, 0], sizes = [8, 128], strides = [1, 1]} : vector<8x384xf32> to vector<8x128xf32>
    %157 = arith.addf %155, %156 : vector<8x128xf32>
    %158 = arith.negf %157 : vector<8x128xf32>
    %159 = math.exp %158 : vector<8x128xf32>
    %cst_44 = arith.constant 1.000000e+00 : f32
    %160 = vector.broadcast %cst_44 : f32 to vector<8x128xf32>
    %161 = arith.addf %160, %159 : vector<8x128xf32>
    %162 = arith.divf %160, %161 : vector<8x128xf32>
    %163 = vector.extract_strided_slice %150 {offsets = [0, 128], sizes = [8, 128], strides = [1, 1]} : vector<8x384xf32> to vector<8x128xf32>
    %164 = vector.extract_strided_slice %154 {offsets = [0, 128], sizes = [8, 128], strides = [1, 1]} : vector<8x384xf32> to vector<8x128xf32>
    %165 = arith.addf %163, %164 : vector<8x128xf32>
    %166 = arith.negf %165 : vector<8x128xf32>
    %167 = math.exp %166 : vector<8x128xf32>
    %cst_45 = arith.constant 1.000000e+00 : f32
    %168 = vector.broadcast %cst_45 : f32 to vector<8x128xf32>
    %169 = arith.addf %168, %167 : vector<8x128xf32>
    %170 = arith.divf %168, %169 : vector<8x128xf32>
    %171 = vector.extract_strided_slice %150 {offsets = [0, 256], sizes = [8, 128], strides = [1, 1]} : vector<8x384xf32> to vector<8x128xf32>
    %172 = vector.extract_strided_slice %154 {offsets = [0, 256], sizes = [8, 128], strides = [1, 1]} : vector<8x384xf32> to vector<8x128xf32>
    %173 = arith.mulf %162, %172 : vector<8x128xf32>
    %174 = arith.addf %171, %173 : vector<8x128xf32>
    %175 = math.tanh %174 : vector<8x128xf32>
    %cst_46 = arith.constant 1.000000e+00 : f32
    %176 = vector.broadcast %cst_46 : f32 to vector<8x128xf32>
    %177 = arith.subf %176, %170 : vector<8x128xf32>
    %178 = arith.mulf %177, %175 : vector<8x128xf32>
    %179 = arith.mulf %170, %147 : vector<8x128xf32>
    %180 = arith.addf %178, %179 : vector<8x128xf32>
    %c5_i32 = arith.constant 5 : i32
    %181 = arith.index_cast %c5_i32 : i32 to index
    %c0_47 = arith.constant 0 : index
    %c0_48 = arith.constant 0 : index
    %182 = vector.load %arg8[%181, %c0_47, %c0_48] : memref<8x8x384xf32, #tpu.memory_space<vmem>>, vector<1x8x384xf32>
    %183 = vector.shape_cast %182 : vector<1x8x384xf32> to vector<8x384xf32>
    %184 = arith.truncf %180 : vector<8x128xf32> to vector<8x128xbf16>
    %cst_49 = arith.constant dense<0.000000e+00> : vector<8x384xf32>
    %185 = tpu.matmul %184, %13, %cst_49 {dimension_numbers = #tpu.dot_dimension_numbers<[1], [0], [0], [1], [0, 0, 1, 1], [], []>} : vector<8x128xbf16>, vector<128x384xbf16>, vector<8x384xf32> -> vector<8x384xf32>
    %186 = vector.broadcast %14 : vector<1x384xf32> to vector<8x384xf32>
    %187 = arith.addf %185, %186 : vector<8x384xf32>
    %188 = vector.extract_strided_slice %183 {offsets = [0, 0], sizes = [8, 128], strides = [1, 1]} : vector<8x384xf32> to vector<8x128xf32>
    %189 = vector.extract_strided_slice %187 {offsets = [0, 0], sizes = [8, 128], strides = [1, 1]} : vector<8x384xf32> to vector<8x128xf32>
    %190 = arith.addf %188, %189 : vector<8x128xf32>
    %191 = arith.negf %190 : vector<8x128xf32>
    %192 = math.exp %191 : vector<8x128xf32>
    %cst_50 = arith.constant 1.000000e+00 : f32
    %193 = vector.broadcast %cst_50 : f32 to vector<8x128xf32>
    %194 = arith.addf %193, %192 : vector<8x128xf32>
    %195 = arith.divf %193, %194 : vector<8x128xf32>
    %196 = vector.extract_strided_slice %183 {offsets = [0, 128], sizes = [8, 128], strides = [1, 1]} : vector<8x384xf32> to vector<8x128xf32>
    %197 = vector.extract_strided_slice %187 {offsets = [0, 128], sizes = [8, 128], strides = [1, 1]} : vector<8x384xf32> to vector<8x128xf32>
    %198 = arith.addf %196, %197 : vector<8x128xf32>
    %199 = arith.negf %198 : vector<8x128xf32>
    %200 = math.exp %199 : vector<8x128xf32>
    %cst_51 = arith.constant 1.000000e+00 : f32
    %201 = vector.broadcast %cst_51 : f32 to vector<8x128xf32>
    %202 = arith.addf %201, %200 : vector<8x128xf32>
    %203 = arith.divf %201, %202 : vector<8x128xf32>
    %204 = vector.extract_strided_slice %183 {offsets = [0, 256], sizes = [8, 128], strides = [1, 1]} : vector<8x384xf32> to vector<8x128xf32>
    %205 = vector.extract_strided_slice %187 {offsets = [0, 256], sizes = [8, 128], strides = [1, 1]} : vector<8x384xf32> to vector<8x128xf32>
    %206 = arith.mulf %195, %205 : vector<8x128xf32>
    %207 = arith.addf %204, %206 : vector<8x128xf32>
    %208 = math.tanh %207 : vector<8x128xf32>
    %cst_52 = arith.constant 1.000000e+00 : f32
    %209 = vector.broadcast %cst_52 : f32 to vector<8x128xf32>
    %210 = arith.subf %209, %203 : vector<8x128xf32>
    %211 = arith.mulf %210, %208 : vector<8x128xf32>
    %212 = arith.mulf %203, %180 : vector<8x128xf32>
    %213 = arith.addf %211, %212 : vector<8x128xf32>
    %c6_i32 = arith.constant 6 : i32
    %214 = arith.index_cast %c6_i32 : i32 to index
    %c0_53 = arith.constant 0 : index
    %c0_54 = arith.constant 0 : index
    %215 = vector.load %arg8[%214, %c0_53, %c0_54] : memref<8x8x384xf32, #tpu.memory_space<vmem>>, vector<1x8x384xf32>
    %216 = vector.shape_cast %215 : vector<1x8x384xf32> to vector<8x384xf32>
    %217 = arith.truncf %213 : vector<8x128xf32> to vector<8x128xbf16>
    %cst_55 = arith.constant dense<0.000000e+00> : vector<8x384xf32>
    %218 = tpu.matmul %217, %13, %cst_55 {dimension_numbers = #tpu.dot_dimension_numbers<[1], [0], [0], [1], [0, 0, 1, 1], [], []>} : vector<8x128xbf16>, vector<128x384xbf16>, vector<8x384xf32> -> vector<8x384xf32>
    %219 = vector.broadcast %14 : vector<1x384xf32> to vector<8x384xf32>
    %220 = arith.addf %218, %219 : vector<8x384xf32>
    %221 = vector.extract_strided_slice %216 {offsets = [0, 0], sizes = [8, 128], strides = [1, 1]} : vector<8x384xf32> to vector<8x128xf32>
    %222 = vector.extract_strided_slice %220 {offsets = [0, 0], sizes = [8, 128], strides = [1, 1]} : vector<8x384xf32> to vector<8x128xf32>
    %223 = arith.addf %221, %222 : vector<8x128xf32>
    %224 = arith.negf %223 : vector<8x128xf32>
    %225 = math.exp %224 : vector<8x128xf32>
    %cst_56 = arith.constant 1.000000e+00 : f32
    %226 = vector.broadcast %cst_56 : f32 to vector<8x128xf32>
    %227 = arith.addf %226, %225 : vector<8x128xf32>
    %228 = arith.divf %226, %227 : vector<8x128xf32>
    %229 = vector.extract_strided_slice %216 {offsets = [0, 128], sizes = [8, 128], strides = [1, 1]} : vector<8x384xf32> to vector<8x128xf32>
    %230 = vector.extract_strided_slice %220 {offsets = [0, 128], sizes = [8, 128], strides = [1, 1]} : vector<8x384xf32> to vector<8x128xf32>
    %231 = arith.addf %229, %230 : vector<8x128xf32>
    %232 = arith.negf %231 : vector<8x128xf32>
    %233 = math.exp %232 : vector<8x128xf32>
    %cst_57 = arith.constant 1.000000e+00 : f32
    %234 = vector.broadcast %cst_57 : f32 to vector<8x128xf32>
    %235 = arith.addf %234, %233 : vector<8x128xf32>
    %236 = arith.divf %234, %235 : vector<8x128xf32>
    %237 = vector.extract_strided_slice %216 {offsets = [0, 256], sizes = [8, 128], strides = [1, 1]} : vector<8x384xf32> to vector<8x128xf32>
    %238 = vector.extract_strided_slice %220 {offsets = [0, 256], sizes = [8, 128], strides = [1, 1]} : vector<8x384xf32> to vector<8x128xf32>
    %239 = arith.mulf %228, %238 : vector<8x128xf32>
    %240 = arith.addf %237, %239 : vector<8x128xf32>
    %241 = math.tanh %240 : vector<8x128xf32>
    %cst_58 = arith.constant 1.000000e+00 : f32
    %242 = vector.broadcast %cst_58 : f32 to vector<8x128xf32>
    %243 = arith.subf %242, %236 : vector<8x128xf32>
    %244 = arith.mulf %243, %241 : vector<8x128xf32>
    %245 = arith.mulf %236, %213 : vector<8x128xf32>
    %246 = arith.addf %244, %245 : vector<8x128xf32>
    %c7_i32 = arith.constant 7 : i32
    %247 = arith.index_cast %c7_i32 : i32 to index
    %c0_59 = arith.constant 0 : index
    %c0_60 = arith.constant 0 : index
    %248 = vector.load %arg8[%247, %c0_59, %c0_60] : memref<8x8x384xf32, #tpu.memory_space<vmem>>, vector<1x8x384xf32>
    %249 = vector.shape_cast %248 : vector<1x8x384xf32> to vector<8x384xf32>
    %250 = arith.truncf %246 : vector<8x128xf32> to vector<8x128xbf16>
    %cst_61 = arith.constant dense<0.000000e+00> : vector<8x384xf32>
    %251 = tpu.matmul %250, %13, %cst_61 {dimension_numbers = #tpu.dot_dimension_numbers<[1], [0], [0], [1], [0, 0, 1, 1], [], []>} : vector<8x128xbf16>, vector<128x384xbf16>, vector<8x384xf32> -> vector<8x384xf32>
    %252 = vector.broadcast %14 : vector<1x384xf32> to vector<8x384xf32>
    %253 = arith.addf %251, %252 : vector<8x384xf32>
    %254 = vector.extract_strided_slice %249 {offsets = [0, 0], sizes = [8, 128], strides = [1, 1]} : vector<8x384xf32> to vector<8x128xf32>
    %255 = vector.extract_strided_slice %253 {offsets = [0, 0], sizes = [8, 128], strides = [1, 1]} : vector<8x384xf32> to vector<8x128xf32>
    %256 = arith.addf %254, %255 : vector<8x128xf32>
    %257 = arith.negf %256 : vector<8x128xf32>
    %258 = math.exp %257 : vector<8x128xf32>
    %cst_62 = arith.constant 1.000000e+00 : f32
    %259 = vector.broadcast %cst_62 : f32 to vector<8x128xf32>
    %260 = arith.addf %259, %258 : vector<8x128xf32>
    %261 = arith.divf %259, %260 : vector<8x128xf32>
    %262 = vector.extract_strided_slice %249 {offsets = [0, 128], sizes = [8, 128], strides = [1, 1]} : vector<8x384xf32> to vector<8x128xf32>
    %263 = vector.extract_strided_slice %253 {offsets = [0, 128], sizes = [8, 128], strides = [1, 1]} : vector<8x384xf32> to vector<8x128xf32>
    %264 = arith.addf %262, %263 : vector<8x128xf32>
    %265 = arith.negf %264 : vector<8x128xf32>
    %266 = math.exp %265 : vector<8x128xf32>
    %cst_63 = arith.constant 1.000000e+00 : f32
    %267 = vector.broadcast %cst_63 : f32 to vector<8x128xf32>
    %268 = arith.addf %267, %266 : vector<8x128xf32>
    %269 = arith.divf %267, %268 : vector<8x128xf32>
    %270 = vector.extract_strided_slice %249 {offsets = [0, 256], sizes = [8, 128], strides = [1, 1]} : vector<8x384xf32> to vector<8x128xf32>
    %271 = vector.extract_strided_slice %253 {offsets = [0, 256], sizes = [8, 128], strides = [1, 1]} : vector<8x384xf32> to vector<8x128xf32>
    %272 = arith.mulf %261, %271 : vector<8x128xf32>
    %273 = arith.addf %270, %272 : vector<8x128xf32>
    %274 = math.tanh %273 : vector<8x128xf32>
    %cst_64 = arith.constant 1.000000e+00 : f32
    %275 = vector.broadcast %cst_64 : f32 to vector<8x128xf32>
    %276 = arith.subf %275, %269 : vector<8x128xf32>
    %277 = arith.mulf %276, %274 : vector<8x128xf32>
    %278 = arith.mulf %269, %246 : vector<8x128xf32>
    %279 = arith.addf %277, %278 : vector<8x128xf32>
    %c8_i32 = arith.constant 8 : i32
    %c0_65 = arith.constant 0 : index
    %c0_66 = arith.constant 0 : index
    %280 = vector.load %arg7[%c0_65, %c0_66] : memref<8x128xf32, #tpu.memory_space<vmem>>, vector<8x128xf32>
    tpu.vector_store %arg7[%c0_65, %c0_66], %279 {strides = array<i32>} : memref<8x128xf32, #tpu.memory_space<vmem>>, vector<8x128xf32>,
    return
  }
  func.func @transform_0(%arg0: i32, %arg1: i32) -> (i32, i32, i32) {
    %c0_i32 = arith.constant 0 : i32
    %c0_i32_0 = arith.constant 0 : i32
    return %arg1, %arg0, %c0_i32 : i32, i32, i32
  }
  func.func @transform_1(%arg0: i32, %arg1: i32) -> (i32, i32) {
    %c0_i32 = arith.constant 0 : i32
    %c0_i32_0 = arith.constant 0 : i32
    %c0_i32_1 = arith.constant 0 : i32
    return %c0_i32, %c0_i32_0 : i32, i32
  }
  func.func @transform_2(%arg0: i32, %arg1: i32) -> (i32, i32) {
    %c0_i32 = arith.constant 0 : i32
    %c0_i32_0 = arith.constant 0 : i32
    %c0_i32_1 = arith.constant 0 : i32
    return %c0_i32, %c0_i32_0 : i32, i32
  }
  func.func @transform_3(%arg0: i32, %arg1: i32) -> (i32, i32) {
    %c0_i32 = arith.constant 0 : i32
    %c0_i32_0 = arith.constant 0 : i32
    %c0_i32_1 = arith.constant 0 : i32
    return %c0_i32, %c0_i32_0 : i32, i32
  }
  func.func @transform_4(%arg0: i32, %arg1: i32) -> (i32, i32) {
    %c0_i32 = arith.constant 0 : i32
    %c0_i32_0 = arith.constant 0 : i32
    %c0_i32_1 = arith.constant 0 : i32
    return %c0_i32, %c0_i32_0 : i32, i32
  }
  func.func @transform_5(%arg0: i32, %arg1: i32) -> (i32, i32) {
    %c0_i32 = arith.constant 0 : i32
    %c0_i32_0 = arith.constant 0 : i32
    return %arg0, %c0_i32 : i32, i32
  }
}

module attributes {stable_mosaic.version = 11 : i64} {
  func.func @_decoder_kernel(%arg0: i32, %arg1: i32, %arg2: memref<8x8x32xbf16, #tpu.memory_space<vmem>>, %arg3: memref<8x128xf32, #tpu.memory_space<vmem>>, %arg4: memref<32x384xbf16, #tpu.memory_space<vmem>>, %arg5: memref<128x384xbf16, #tpu.memory_space<vmem>>, %arg6: memref<128x384xbf16, #tpu.memory_space<vmem>>, %arg7: memref<1x384xf32, #tpu.memory_space<vmem>>, %arg8: memref<1x384xf32, #tpu.memory_space<vmem>>, %arg9: memref<8x8x128xbf16, #tpu.memory_space<vmem>>, %arg10: memref<8x128xf32, #tpu.memory_space<vmem>>, %arg11: memref<8x384xf32, #tpu.memory_space<vmem>>, %arg12: memref<8x8x384xf32, #tpu.memory_space<vmem>>) attributes {dimension_semantics = [#tpu.dimension_semantics<parallel>, #tpu.dimension_semantics<arbitrary>], iteration_bounds = array<i64: 1, 1>, scalar_prefetch = 0 : i64, scratch_operands = 3 : i64, tpu.core_type = #tpu.core_type<tc>, window_params = [{transform_indices = @transform_0, window_bounds = array<i64: 8, 8, 32>}, {transform_indices = @transform_1, window_bounds = array<i64: 8, 128>}, {pipeline_mode = #tpu.pipeline_mode<synchronous>, transform_indices = @transform_2, window_bounds = array<i64: 32, 384>}, {pipeline_mode = #tpu.pipeline_mode<synchronous>, transform_indices = @transform_3, window_bounds = array<i64: 128, 384>}, {pipeline_mode = #tpu.pipeline_mode<synchronous>, transform_indices = @transform_4, window_bounds = array<i64: 128, 384>}, {pipeline_mode = #tpu.pipeline_mode<synchronous>, transform_indices = @transform_5, window_bounds = array<i64: 1, 384>}, {pipeline_mode = #tpu.pipeline_mode<synchronous>, transform_indices = @transform_6, window_bounds = array<i64: 1, 384>}, {transform_indices = @transform_7, window_bounds = array<i64: 8, 8, 128>}]} {
    %c0_i32 = arith.constant 0 : i32
    %0 = arith.cmpi eq, %arg1, %c0_i32 : i32
    %1 = arith.extui %0 : i1 to i32
    %c0_i32_0 = arith.constant 0 : i32
    %2 = arith.cmpi ne, %1, %c0_i32_0 : i32
    scf.if %2 {
      %c0_85 = arith.constant 0 : index
      %c0_86 = arith.constant 0 : index
      %325 = vector.load %arg3[%c0_85, %c0_86] : memref<8x128xf32, #tpu.memory_space<vmem>>, vector<8x128xf32>
      %c0_87 = arith.constant 0 : index
      %c0_88 = arith.constant 0 : index
      %326 = vector.load %arg10[%c0_87, %c0_88] : memref<8x128xf32, #tpu.memory_space<vmem>>, vector<8x128xf32>
      tpu.vector_store %arg10[%c0_87, %c0_88], %325 {strides = array<i32>} : memref<8x128xf32, #tpu.memory_space<vmem>>, vector<8x128xf32>,
      %327 = arith.truncf %325 : vector<8x128xf32> to vector<8x128xbf16>
      %c0_89 = arith.constant 0 : index
      %c0_90 = arith.constant 0 : index
      %328 = vector.load %arg6[%c0_89, %c0_90] : memref<128x384xbf16, #tpu.memory_space<vmem>>, vector<128x384xbf16>
      %cst_91 = arith.constant dense<0.000000e+00> : vector<8x384xf32>
      %329 = tpu.matmul %327, %328, %cst_91 {dimension_numbers = #tpu.dot_dimension_numbers<[1], [0], [0], [1], [0, 0, 1, 1], [], []>} : vector<8x128xbf16>, vector<128x384xbf16>, vector<8x384xf32> -> vector<8x384xf32>
      %c0_92 = arith.constant 0 : index
      %c0_93 = arith.constant 0 : index
      %330 = vector.load %arg11[%c0_92, %c0_93] : memref<8x384xf32, #tpu.memory_space<vmem>>, vector<8x384xf32>
      tpu.vector_store %arg11[%c0_92, %c0_93], %329 {strides = array<i32>} : memref<8x384xf32, #tpu.memory_space<vmem>>, vector<8x384xf32>,
    } else {
    }
    %c0 = arith.constant 0 : index
    %c0_1 = arith.constant 0 : index
    %c0_2 = arith.constant 0 : index
    %3 = vector.load %arg2[%c0, %c0_1, %c0_2] : memref<8x8x32xbf16, #tpu.memory_space<vmem>>, vector<8x8x32xbf16>
    %4 = vector.shape_cast %3 : vector<8x8x32xbf16> to vector<64x32xbf16>
    %c0_3 = arith.constant 0 : index
    %c0_4 = arith.constant 0 : index
    %5 = vector.load %arg4[%c0_3, %c0_4] : memref<32x384xbf16, #tpu.memory_space<vmem>>, vector<32x384xbf16>
    %cst = arith.constant dense<0.000000e+00> : vector<64x384xf32>
    %6 = tpu.matmul %4, %5, %cst {dimension_numbers = #tpu.dot_dimension_numbers<[1], [0], [0], [1], [0, 0, 1, 1], [], []>} : vector<64x32xbf16>, vector<32x384xbf16>, vector<64x384xf32> -> vector<64x384xf32>
    %7 = vector.shape_cast %6 : vector<64x384xf32> to vector<8x8x384xf32>
    %c0_5 = arith.constant 0 : index
    %c0_6 = arith.constant 0 : index
    %8 = vector.load %arg7[%c0_5, %c0_6] : memref<1x384xf32, #tpu.memory_space<vmem>>, vector<1x384xf32>
    %9 = vector.shape_cast %8 : vector<1x384xf32> to vector<1x1x384xf32>
    %10 = vector.broadcast %9 : vector<1x1x384xf32> to vector<8x8x384xf32>
    %11 = arith.addf %7, %10 : vector<8x8x384xf32>
    %c0_7 = arith.constant 0 : index
    %c0_8 = arith.constant 0 : index
    %12 = vector.load %arg11[%c0_7, %c0_8] : memref<8x384xf32, #tpu.memory_space<vmem>>, vector<8x384xf32>
    %13 = vector.shape_cast %12 : vector<8x384xf32> to vector<1x8x384xf32>
    %14 = vector.broadcast %13 : vector<1x8x384xf32> to vector<8x8x384xf32>
    %15 = arith.addf %11, %14 : vector<8x8x384xf32>
    %c0_9 = arith.constant 0 : index
    %c0_10 = arith.constant 0 : index
    %c0_11 = arith.constant 0 : index
    %16 = vector.load %arg12[%c0_9, %c0_10, %c0_11] : memref<8x8x384xf32, #tpu.memory_space<vmem>>, vector<8x8x384xf32>
    tpu.vector_store %arg12[%c0_9, %c0_10, %c0_11], %15 {strides = array<i32>} : memref<8x8x384xf32, #tpu.memory_space<vmem>>, vector<8x8x384xf32>,
    %c0_12 = arith.constant 0 : index
    %c0_13 = arith.constant 0 : index
    %17 = vector.load %arg5[%c0_12, %c0_13] : memref<128x384xbf16, #tpu.memory_space<vmem>>, vector<128x384xbf16>
    %c0_14 = arith.constant 0 : index
    %c0_15 = arith.constant 0 : index
    %18 = vector.load %arg8[%c0_14, %c0_15] : memref<1x384xf32, #tpu.memory_space<vmem>>, vector<1x384xf32>
    %c0_16 = arith.constant 0 : index
    %c0_17 = arith.constant 0 : index
    %19 = vector.load %arg10[%c0_16, %c0_17] : memref<8x128xf32, #tpu.memory_space<vmem>>, vector<8x128xf32>
    %c0_i32_18 = arith.constant 0 : i32
    %20 = arith.index_cast %c0_i32_18 : i32 to index
    %c0_19 = arith.constant 0 : index
    %c0_20 = arith.constant 0 : index
    %21 = vector.load %arg12[%20, %c0_19, %c0_20] : memref<8x8x384xf32, #tpu.memory_space<vmem>>, vector<1x8x384xf32>
    %22 = vector.shape_cast %21 : vector<1x8x384xf32> to vector<8x384xf32>
    %23 = arith.truncf %19 : vector<8x128xf32> to vector<8x128xbf16>
    %cst_21 = arith.constant dense<0.000000e+00> : vector<8x384xf32>
    %24 = tpu.matmul %23, %17, %cst_21 {dimension_numbers = #tpu.dot_dimension_numbers<[1], [0], [0], [1], [0, 0, 1, 1], [], []>} : vector<8x128xbf16>, vector<128x384xbf16>, vector<8x384xf32> -> vector<8x384xf32>
    %25 = vector.broadcast %18 : vector<1x384xf32> to vector<8x384xf32>
    %26 = arith.addf %24, %25 : vector<8x384xf32>
    %27 = vector.extract_strided_slice %22 {offsets = [0, 0], sizes = [8, 128], strides = [1, 1]} : vector<8x384xf32> to vector<8x128xf32>
    %28 = vector.extract_strided_slice %26 {offsets = [0, 0], sizes = [8, 128], strides = [1, 1]} : vector<8x384xf32> to vector<8x128xf32>
    %29 = arith.addf %27, %28 : vector<8x128xf32>
    %30 = arith.negf %29 : vector<8x128xf32>
    %31 = math.exp %30 : vector<8x128xf32>
    %cst_22 = arith.constant 1.000000e+00 : f32
    %32 = vector.broadcast %cst_22 : f32 to vector<8x128xf32>
    %33 = arith.addf %32, %31 : vector<8x128xf32>
    %34 = arith.divf %32, %33 : vector<8x128xf32>
    %35 = vector.extract_strided_slice %22 {offsets = [0, 128], sizes = [8, 128], strides = [1, 1]} : vector<8x384xf32> to vector<8x128xf32>
    %36 = vector.extract_strided_slice %26 {offsets = [0, 128], sizes = [8, 128], strides = [1, 1]} : vector<8x384xf32> to vector<8x128xf32>
    %37 = arith.addf %35, %36 : vector<8x128xf32>
    %38 = arith.negf %37 : vector<8x128xf32>
    %39 = math.exp %38 : vector<8x128xf32>
    %cst_23 = arith.constant 1.000000e+00 : f32
    %40 = vector.broadcast %cst_23 : f32 to vector<8x128xf32>
    %41 = arith.addf %40, %39 : vector<8x128xf32>
    %42 = arith.divf %40, %41 : vector<8x128xf32>
    %43 = vector.extract_strided_slice %22 {offsets = [0, 256], sizes = [8, 128], strides = [1, 1]} : vector<8x384xf32> to vector<8x128xf32>
    %44 = vector.extract_strided_slice %26 {offsets = [0, 256], sizes = [8, 128], strides = [1, 1]} : vector<8x384xf32> to vector<8x128xf32>
    %45 = arith.mulf %34, %44 : vector<8x128xf32>
    %46 = arith.addf %43, %45 : vector<8x128xf32>
    %47 = math.tanh %46 : vector<8x128xf32>
    %cst_24 = arith.constant 1.000000e+00 : f32
    %48 = vector.broadcast %cst_24 : f32 to vector<8x128xf32>
    %49 = arith.subf %48, %42 : vector<8x128xf32>
    %50 = arith.mulf %49, %47 : vector<8x128xf32>
    %51 = arith.mulf %42, %19 : vector<8x128xf32>
    %52 = arith.addf %50, %51 : vector<8x128xf32>
    %53 = arith.truncf %52 : vector<8x128xf32> to vector<8x128xbf16>
    %54 = arith.index_cast %c0_i32_18 : i32 to index
    %c0_25 = arith.constant 0 : index
    %c0_26 = arith.constant 0 : index
    %55 = vector.load %arg9[%54, %c0_25, %c0_26] : memref<8x8x128xbf16, #tpu.memory_space<vmem>>, vector<1x8x128xbf16>
    %56 = vector.shape_cast %55 : vector<1x8x128xbf16> to vector<8x128xbf16>
    %57 = vector.shape_cast %53 : vector<8x128xbf16> to vector<1x8x128xbf16>
    tpu.vector_store %arg9[%54, %c0_25, %c0_26], %57 {strides = array<i32>} : memref<8x8x128xbf16, #tpu.memory_space<vmem>>, vector<1x8x128xbf16>,
    %c1_i32 = arith.constant 1 : i32
    %58 = arith.index_cast %c1_i32 : i32 to index
    %c0_27 = arith.constant 0 : index
    %c0_28 = arith.constant 0 : index
    %59 = vector.load %arg12[%58, %c0_27, %c0_28] : memref<8x8x384xf32, #tpu.memory_space<vmem>>, vector<1x8x384xf32>
    %60 = vector.shape_cast %59 : vector<1x8x384xf32> to vector<8x384xf32>
    %61 = arith.truncf %52 : vector<8x128xf32> to vector<8x128xbf16>
    %cst_29 = arith.constant dense<0.000000e+00> : vector<8x384xf32>
    %62 = tpu.matmul %61, %17, %cst_29 {dimension_numbers = #tpu.dot_dimension_numbers<[1], [0], [0], [1], [0, 0, 1, 1], [], []>} : vector<8x128xbf16>, vector<128x384xbf16>, vector<8x384xf32> -> vector<8x384xf32>
    %63 = vector.broadcast %18 : vector<1x384xf32> to vector<8x384xf32>
    %64 = arith.addf %62, %63 : vector<8x384xf32>
    %65 = vector.extract_strided_slice %60 {offsets = [0, 0], sizes = [8, 128], strides = [1, 1]} : vector<8x384xf32> to vector<8x128xf32>
    %66 = vector.extract_strided_slice %64 {offsets = [0, 0], sizes = [8, 128], strides = [1, 1]} : vector<8x384xf32> to vector<8x128xf32>
    %67 = arith.addf %65, %66 : vector<8x128xf32>
    %68 = arith.negf %67 : vector<8x128xf32>
    %69 = math.exp %68 : vector<8x128xf32>
    %cst_30 = arith.constant 1.000000e+00 : f32
    %70 = vector.broadcast %cst_30 : f32 to vector<8x128xf32>
    %71 = arith.addf %70, %69 : vector<8x128xf32>
    %72 = arith.divf %70, %71 : vector<8x128xf32>
    %73 = vector.extract_strided_slice %60 {offsets = [0, 128], sizes = [8, 128], strides = [1, 1]} : vector<8x384xf32> to vector<8x128xf32>
    %74 = vector.extract_strided_slice %64 {offsets = [0, 128], sizes = [8, 128], strides = [1, 1]} : vector<8x384xf32> to vector<8x128xf32>
    %75 = arith.addf %73, %74 : vector<8x128xf32>
    %76 = arith.negf %75 : vector<8x128xf32>
    %77 = math.exp %76 : vector<8x128xf32>
    %cst_31 = arith.constant 1.000000e+00 : f32
    %78 = vector.broadcast %cst_31 : f32 to vector<8x128xf32>
    %79 = arith.addf %78, %77 : vector<8x128xf32>
    %80 = arith.divf %78, %79 : vector<8x128xf32>
    %81 = vector.extract_strided_slice %60 {offsets = [0, 256], sizes = [8, 128], strides = [1, 1]} : vector<8x384xf32> to vector<8x128xf32>
    %82 = vector.extract_strided_slice %64 {offsets = [0, 256], sizes = [8, 128], strides = [1, 1]} : vector<8x384xf32> to vector<8x128xf32>
    %83 = arith.mulf %72, %82 : vector<8x128xf32>
    %84 = arith.addf %81, %83 : vector<8x128xf32>
    %85 = math.tanh %84 : vector<8x128xf32>
    %cst_32 = arith.constant 1.000000e+00 : f32
    %86 = vector.broadcast %cst_32 : f32 to vector<8x128xf32>
    %87 = arith.subf %86, %80 : vector<8x128xf32>
    %88 = arith.mulf %87, %85 : vector<8x128xf32>
    %89 = arith.mulf %80, %52 : vector<8x128xf32>
    %90 = arith.addf %88, %89 : vector<8x128xf32>
    %91 = arith.truncf %90 : vector<8x128xf32> to vector<8x128xbf16>
    %92 = arith.index_cast %c1_i32 : i32 to index
    %c0_33 = arith.constant 0 : index
    %c0_34 = arith.constant 0 : index
    %93 = vector.load %arg9[%92, %c0_33, %c0_34] : memref<8x8x128xbf16, #tpu.memory_space<vmem>>, vector<1x8x128xbf16>
    %94 = vector.shape_cast %93 : vector<1x8x128xbf16> to vector<8x128xbf16>
    %95 = vector.shape_cast %91 : vector<8x128xbf16> to vector<1x8x128xbf16>
    tpu.vector_store %arg9[%92, %c0_33, %c0_34], %95 {strides = array<i32>} : memref<8x8x128xbf16, #tpu.memory_space<vmem>>, vector<1x8x128xbf16>,
    %c2_i32 = arith.constant 2 : i32
    %96 = arith.index_cast %c2_i32 : i32 to index
    %c0_35 = arith.constant 0 : index
    %c0_36 = arith.constant 0 : index
    %97 = vector.load %arg12[%96, %c0_35, %c0_36] : memref<8x8x384xf32, #tpu.memory_space<vmem>>, vector<1x8x384xf32>
    %98 = vector.shape_cast %97 : vector<1x8x384xf32> to vector<8x384xf32>
    %99 = arith.truncf %90 : vector<8x128xf32> to vector<8x128xbf16>
    %cst_37 = arith.constant dense<0.000000e+00> : vector<8x384xf32>
    %100 = tpu.matmul %99, %17, %cst_37 {dimension_numbers = #tpu.dot_dimension_numbers<[1], [0], [0], [1], [0, 0, 1, 1], [], []>} : vector<8x128xbf16>, vector<128x384xbf16>, vector<8x384xf32> -> vector<8x384xf32>
    %101 = vector.broadcast %18 : vector<1x384xf32> to vector<8x384xf32>
    %102 = arith.addf %100, %101 : vector<8x384xf32>
    %103 = vector.extract_strided_slice %98 {offsets = [0, 0], sizes = [8, 128], strides = [1, 1]} : vector<8x384xf32> to vector<8x128xf32>
    %104 = vector.extract_strided_slice %102 {offsets = [0, 0], sizes = [8, 128], strides = [1, 1]} : vector<8x384xf32> to vector<8x128xf32>
    %105 = arith.addf %103, %104 : vector<8x128xf32>
    %106 = arith.negf %105 : vector<8x128xf32>
    %107 = math.exp %106 : vector<8x128xf32>
    %cst_38 = arith.constant 1.000000e+00 : f32
    %108 = vector.broadcast %cst_38 : f32 to vector<8x128xf32>
    %109 = arith.addf %108, %107 : vector<8x128xf32>
    %110 = arith.divf %108, %109 : vector<8x128xf32>
    %111 = vector.extract_strided_slice %98 {offsets = [0, 128], sizes = [8, 128], strides = [1, 1]} : vector<8x384xf32> to vector<8x128xf32>
    %112 = vector.extract_strided_slice %102 {offsets = [0, 128], sizes = [8, 128], strides = [1, 1]} : vector<8x384xf32> to vector<8x128xf32>
    %113 = arith.addf %111, %112 : vector<8x128xf32>
    %114 = arith.negf %113 : vector<8x128xf32>
    %115 = math.exp %114 : vector<8x128xf32>
    %cst_39 = arith.constant 1.000000e+00 : f32
    %116 = vector.broadcast %cst_39 : f32 to vector<8x128xf32>
    %117 = arith.addf %116, %115 : vector<8x128xf32>
    %118 = arith.divf %116, %117 : vector<8x128xf32>
    %119 = vector.extract_strided_slice %98 {offsets = [0, 256], sizes = [8, 128], strides = [1, 1]} : vector<8x384xf32> to vector<8x128xf32>
    %120 = vector.extract_strided_slice %102 {offsets = [0, 256], sizes = [8, 128], strides = [1, 1]} : vector<8x384xf32> to vector<8x128xf32>
    %121 = arith.mulf %110, %120 : vector<8x128xf32>
    %122 = arith.addf %119, %121 : vector<8x128xf32>
    %123 = math.tanh %122 : vector<8x128xf32>
    %cst_40 = arith.constant 1.000000e+00 : f32
    %124 = vector.broadcast %cst_40 : f32 to vector<8x128xf32>
    %125 = arith.subf %124, %118 : vector<8x128xf32>
    %126 = arith.mulf %125, %123 : vector<8x128xf32>
    %127 = arith.mulf %118, %90 : vector<8x128xf32>
    %128 = arith.addf %126, %127 : vector<8x128xf32>
    %129 = arith.truncf %128 : vector<8x128xf32> to vector<8x128xbf16>
    %130 = arith.index_cast %c2_i32 : i32 to index
    %c0_41 = arith.constant 0 : index
    %c0_42 = arith.constant 0 : index
    %131 = vector.load %arg9[%130, %c0_41, %c0_42] : memref<8x8x128xbf16, #tpu.memory_space<vmem>>, vector<1x8x128xbf16>
    %132 = vector.shape_cast %131 : vector<1x8x128xbf16> to vector<8x128xbf16>
    %133 = vector.shape_cast %129 : vector<8x128xbf16> to vector<1x8x128xbf16>
    tpu.vector_store %arg9[%130, %c0_41, %c0_42], %133 {strides = array<i32>} : memref<8x8x128xbf16, #tpu.memory_space<vmem>>, vector<1x8x128xbf16>,
    %c3_i32 = arith.constant 3 : i32
    %134 = arith.index_cast %c3_i32 : i32 to index
    %c0_43 = arith.constant 0 : index
    %c0_44 = arith.constant 0 : index
    %135 = vector.load %arg12[%134, %c0_43, %c0_44] : memref<8x8x384xf32, #tpu.memory_space<vmem>>, vector<1x8x384xf32>
    %136 = vector.shape_cast %135 : vector<1x8x384xf32> to vector<8x384xf32>
    %137 = arith.truncf %128 : vector<8x128xf32> to vector<8x128xbf16>
    %cst_45 = arith.constant dense<0.000000e+00> : vector<8x384xf32>
    %138 = tpu.matmul %137, %17, %cst_45 {dimension_numbers = #tpu.dot_dimension_numbers<[1], [0], [0], [1], [0, 0, 1, 1], [], []>} : vector<8x128xbf16>, vector<128x384xbf16>, vector<8x384xf32> -> vector<8x384xf32>
    %139 = vector.broadcast %18 : vector<1x384xf32> to vector<8x384xf32>
    %140 = arith.addf %138, %139 : vector<8x384xf32>
    %141 = vector.extract_strided_slice %136 {offsets = [0, 0], sizes = [8, 128], strides = [1, 1]} : vector<8x384xf32> to vector<8x128xf32>
    %142 = vector.extract_strided_slice %140 {offsets = [0, 0], sizes = [8, 128], strides = [1, 1]} : vector<8x384xf32> to vector<8x128xf32>
    %143 = arith.addf %141, %142 : vector<8x128xf32>
    %144 = arith.negf %143 : vector<8x128xf32>
    %145 = math.exp %144 : vector<8x128xf32>
    %cst_46 = arith.constant 1.000000e+00 : f32
    %146 = vector.broadcast %cst_46 : f32 to vector<8x128xf32>
    %147 = arith.addf %146, %145 : vector<8x128xf32>
    %148 = arith.divf %146, %147 : vector<8x128xf32>
    %149 = vector.extract_strided_slice %136 {offsets = [0, 128], sizes = [8, 128], strides = [1, 1]} : vector<8x384xf32> to vector<8x128xf32>
    %150 = vector.extract_strided_slice %140 {offsets = [0, 128], sizes = [8, 128], strides = [1, 1]} : vector<8x384xf32> to vector<8x128xf32>
    %151 = arith.addf %149, %150 : vector<8x128xf32>
    %152 = arith.negf %151 : vector<8x128xf32>
    %153 = math.exp %152 : vector<8x128xf32>
    %cst_47 = arith.constant 1.000000e+00 : f32
    %154 = vector.broadcast %cst_47 : f32 to vector<8x128xf32>
    %155 = arith.addf %154, %153 : vector<8x128xf32>
    %156 = arith.divf %154, %155 : vector<8x128xf32>
    %157 = vector.extract_strided_slice %136 {offsets = [0, 256], sizes = [8, 128], strides = [1, 1]} : vector<8x384xf32> to vector<8x128xf32>
    %158 = vector.extract_strided_slice %140 {offsets = [0, 256], sizes = [8, 128], strides = [1, 1]} : vector<8x384xf32> to vector<8x128xf32>
    %159 = arith.mulf %148, %158 : vector<8x128xf32>
    %160 = arith.addf %157, %159 : vector<8x128xf32>
    %161 = math.tanh %160 : vector<8x128xf32>
    %cst_48 = arith.constant 1.000000e+00 : f32
    %162 = vector.broadcast %cst_48 : f32 to vector<8x128xf32>
    %163 = arith.subf %162, %156 : vector<8x128xf32>
    %164 = arith.mulf %163, %161 : vector<8x128xf32>
    %165 = arith.mulf %156, %128 : vector<8x128xf32>
    %166 = arith.addf %164, %165 : vector<8x128xf32>
    %167 = arith.truncf %166 : vector<8x128xf32> to vector<8x128xbf16>
    %168 = arith.index_cast %c3_i32 : i32 to index
    %c0_49 = arith.constant 0 : index
    %c0_50 = arith.constant 0 : index
    %169 = vector.load %arg9[%168, %c0_49, %c0_50] : memref<8x8x128xbf16, #tpu.memory_space<vmem>>, vector<1x8x128xbf16>
    %170 = vector.shape_cast %169 : vector<1x8x128xbf16> to vector<8x128xbf16>
    %171 = vector.shape_cast %167 : vector<8x128xbf16> to vector<1x8x128xbf16>
    tpu.vector_store %arg9[%168, %c0_49, %c0_50], %171 {strides = array<i32>} : memref<8x8x128xbf16, #tpu.memory_space<vmem>>, vector<1x8x128xbf16>,
    %c4_i32 = arith.constant 4 : i32
    %172 = arith.index_cast %c4_i32 : i32 to index
    %c0_51 = arith.constant 0 : index
    %c0_52 = arith.constant 0 : index
    %173 = vector.load %arg12[%172, %c0_51, %c0_52] : memref<8x8x384xf32, #tpu.memory_space<vmem>>, vector<1x8x384xf32>
    %174 = vector.shape_cast %173 : vector<1x8x384xf32> to vector<8x384xf32>
    %175 = arith.truncf %166 : vector<8x128xf32> to vector<8x128xbf16>
    %cst_53 = arith.constant dense<0.000000e+00> : vector<8x384xf32>
    %176 = tpu.matmul %175, %17, %cst_53 {dimension_numbers = #tpu.dot_dimension_numbers<[1], [0], [0], [1], [0, 0, 1, 1], [], []>} : vector<8x128xbf16>, vector<128x384xbf16>, vector<8x384xf32> -> vector<8x384xf32>
    %177 = vector.broadcast %18 : vector<1x384xf32> to vector<8x384xf32>
    %178 = arith.addf %176, %177 : vector<8x384xf32>
    %179 = vector.extract_strided_slice %174 {offsets = [0, 0], sizes = [8, 128], strides = [1, 1]} : vector<8x384xf32> to vector<8x128xf32>
    %180 = vector.extract_strided_slice %178 {offsets = [0, 0], sizes = [8, 128], strides = [1, 1]} : vector<8x384xf32> to vector<8x128xf32>
    %181 = arith.addf %179, %180 : vector<8x128xf32>
    %182 = arith.negf %181 : vector<8x128xf32>
    %183 = math.exp %182 : vector<8x128xf32>
    %cst_54 = arith.constant 1.000000e+00 : f32
    %184 = vector.broadcast %cst_54 : f32 to vector<8x128xf32>
    %185 = arith.addf %184, %183 : vector<8x128xf32>
    %186 = arith.divf %184, %185 : vector<8x128xf32>
    %187 = vector.extract_strided_slice %174 {offsets = [0, 128], sizes = [8, 128], strides = [1, 1]} : vector<8x384xf32> to vector<8x128xf32>
    %188 = vector.extract_strided_slice %178 {offsets = [0, 128], sizes = [8, 128], strides = [1, 1]} : vector<8x384xf32> to vector<8x128xf32>
    %189 = arith.addf %187, %188 : vector<8x128xf32>
    %190 = arith.negf %189 : vector<8x128xf32>
    %191 = math.exp %190 : vector<8x128xf32>
    %cst_55 = arith.constant 1.000000e+00 : f32
    %192 = vector.broadcast %cst_55 : f32 to vector<8x128xf32>
    %193 = arith.addf %192, %191 : vector<8x128xf32>
    %194 = arith.divf %192, %193 : vector<8x128xf32>
    %195 = vector.extract_strided_slice %174 {offsets = [0, 256], sizes = [8, 128], strides = [1, 1]} : vector<8x384xf32> to vector<8x128xf32>
    %196 = vector.extract_strided_slice %178 {offsets = [0, 256], sizes = [8, 128], strides = [1, 1]} : vector<8x384xf32> to vector<8x128xf32>
    %197 = arith.mulf %186, %196 : vector<8x128xf32>
    %198 = arith.addf %195, %197 : vector<8x128xf32>
    %199 = math.tanh %198 : vector<8x128xf32>
    %cst_56 = arith.constant 1.000000e+00 : f32
    %200 = vector.broadcast %cst_56 : f32 to vector<8x128xf32>
    %201 = arith.subf %200, %194 : vector<8x128xf32>
    %202 = arith.mulf %201, %199 : vector<8x128xf32>
    %203 = arith.mulf %194, %166 : vector<8x128xf32>
    %204 = arith.addf %202, %203 : vector<8x128xf32>
    %205 = arith.truncf %204 : vector<8x128xf32> to vector<8x128xbf16>
    %206 = arith.index_cast %c4_i32 : i32 to index
    %c0_57 = arith.constant 0 : index
    %c0_58 = arith.constant 0 : index
    %207 = vector.load %arg9[%206, %c0_57, %c0_58] : memref<8x8x128xbf16, #tpu.memory_space<vmem>>, vector<1x8x128xbf16>
    %208 = vector.shape_cast %207 : vector<1x8x128xbf16> to vector<8x128xbf16>
    %209 = vector.shape_cast %205 : vector<8x128xbf16> to vector<1x8x128xbf16>
    tpu.vector_store %arg9[%206, %c0_57, %c0_58], %209 {strides = array<i32>} : memref<8x8x128xbf16, #tpu.memory_space<vmem>>, vector<1x8x128xbf16>,
    %c5_i32 = arith.constant 5 : i32
    %210 = arith.index_cast %c5_i32 : i32 to index
    %c0_59 = arith.constant 0 : index
    %c0_60 = arith.constant 0 : index
    %211 = vector.load %arg12[%210, %c0_59, %c0_60] : memref<8x8x384xf32, #tpu.memory_space<vmem>>, vector<1x8x384xf32>
    %212 = vector.shape_cast %211 : vector<1x8x384xf32> to vector<8x384xf32>
    %213 = arith.truncf %204 : vector<8x128xf32> to vector<8x128xbf16>
    %cst_61 = arith.constant dense<0.000000e+00> : vector<8x384xf32>
    %214 = tpu.matmul %213, %17, %cst_61 {dimension_numbers = #tpu.dot_dimension_numbers<[1], [0], [0], [1], [0, 0, 1, 1], [], []>} : vector<8x128xbf16>, vector<128x384xbf16>, vector<8x384xf32> -> vector<8x384xf32>
    %215 = vector.broadcast %18 : vector<1x384xf32> to vector<8x384xf32>
    %216 = arith.addf %214, %215 : vector<8x384xf32>
    %217 = vector.extract_strided_slice %212 {offsets = [0, 0], sizes = [8, 128], strides = [1, 1]} : vector<8x384xf32> to vector<8x128xf32>
    %218 = vector.extract_strided_slice %216 {offsets = [0, 0], sizes = [8, 128], strides = [1, 1]} : vector<8x384xf32> to vector<8x128xf32>
    %219 = arith.addf %217, %218 : vector<8x128xf32>
    %220 = arith.negf %219 : vector<8x128xf32>
    %221 = math.exp %220 : vector<8x128xf32>
    %cst_62 = arith.constant 1.000000e+00 : f32
    %222 = vector.broadcast %cst_62 : f32 to vector<8x128xf32>
    %223 = arith.addf %222, %221 : vector<8x128xf32>
    %224 = arith.divf %222, %223 : vector<8x128xf32>
    %225 = vector.extract_strided_slice %212 {offsets = [0, 128], sizes = [8, 128], strides = [1, 1]} : vector<8x384xf32> to vector<8x128xf32>
    %226 = vector.extract_strided_slice %216 {offsets = [0, 128], sizes = [8, 128], strides = [1, 1]} : vector<8x384xf32> to vector<8x128xf32>
    %227 = arith.addf %225, %226 : vector<8x128xf32>
    %228 = arith.negf %227 : vector<8x128xf32>
    %229 = math.exp %228 : vector<8x128xf32>
    %cst_63 = arith.constant 1.000000e+00 : f32
    %230 = vector.broadcast %cst_63 : f32 to vector<8x128xf32>
    %231 = arith.addf %230, %229 : vector<8x128xf32>
    %232 = arith.divf %230, %231 : vector<8x128xf32>
    %233 = vector.extract_strided_slice %212 {offsets = [0, 256], sizes = [8, 128], strides = [1, 1]} : vector<8x384xf32> to vector<8x128xf32>
    %234 = vector.extract_strided_slice %216 {offsets = [0, 256], sizes = [8, 128], strides = [1, 1]} : vector<8x384xf32> to vector<8x128xf32>
    %235 = arith.mulf %224, %234 : vector<8x128xf32>
    %236 = arith.addf %233, %235 : vector<8x128xf32>
    %237 = math.tanh %236 : vector<8x128xf32>
    %cst_64 = arith.constant 1.000000e+00 : f32
    %238 = vector.broadcast %cst_64 : f32 to vector<8x128xf32>
    %239 = arith.subf %238, %232 : vector<8x128xf32>
    %240 = arith.mulf %239, %237 : vector<8x128xf32>
    %241 = arith.mulf %232, %204 : vector<8x128xf32>
    %242 = arith.addf %240, %241 : vector<8x128xf32>
    %243 = arith.truncf %242 : vector<8x128xf32> to vector<8x128xbf16>
    %244 = arith.index_cast %c5_i32 : i32 to index
    %c0_65 = arith.constant 0 : index
    %c0_66 = arith.constant 0 : index
    %245 = vector.load %arg9[%244, %c0_65, %c0_66] : memref<8x8x128xbf16, #tpu.memory_space<vmem>>, vector<1x8x128xbf16>
    %246 = vector.shape_cast %245 : vector<1x8x128xbf16> to vector<8x128xbf16>
    %247 = vector.shape_cast %243 : vector<8x128xbf16> to vector<1x8x128xbf16>
    tpu.vector_store %arg9[%244, %c0_65, %c0_66], %247 {strides = array<i32>} : memref<8x8x128xbf16, #tpu.memory_space<vmem>>, vector<1x8x128xbf16>,
    %c6_i32 = arith.constant 6 : i32
    %248 = arith.index_cast %c6_i32 : i32 to index
    %c0_67 = arith.constant 0 : index
    %c0_68 = arith.constant 0 : index
    %249 = vector.load %arg12[%248, %c0_67, %c0_68] : memref<8x8x384xf32, #tpu.memory_space<vmem>>, vector<1x8x384xf32>
    %250 = vector.shape_cast %249 : vector<1x8x384xf32> to vector<8x384xf32>
    %251 = arith.truncf %242 : vector<8x128xf32> to vector<8x128xbf16>
    %cst_69 = arith.constant dense<0.000000e+00> : vector<8x384xf32>
    %252 = tpu.matmul %251, %17, %cst_69 {dimension_numbers = #tpu.dot_dimension_numbers<[1], [0], [0], [1], [0, 0, 1, 1], [], []>} : vector<8x128xbf16>, vector<128x384xbf16>, vector<8x384xf32> -> vector<8x384xf32>
    %253 = vector.broadcast %18 : vector<1x384xf32> to vector<8x384xf32>
    %254 = arith.addf %252, %253 : vector<8x384xf32>
    %255 = vector.extract_strided_slice %250 {offsets = [0, 0], sizes = [8, 128], strides = [1, 1]} : vector<8x384xf32> to vector<8x128xf32>
    %256 = vector.extract_strided_slice %254 {offsets = [0, 0], sizes = [8, 128], strides = [1, 1]} : vector<8x384xf32> to vector<8x128xf32>
    %257 = arith.addf %255, %256 : vector<8x128xf32>
    %258 = arith.negf %257 : vector<8x128xf32>
    %259 = math.exp %258 : vector<8x128xf32>
    %cst_70 = arith.constant 1.000000e+00 : f32
    %260 = vector.broadcast %cst_70 : f32 to vector<8x128xf32>
    %261 = arith.addf %260, %259 : vector<8x128xf32>
    %262 = arith.divf %260, %261 : vector<8x128xf32>
    %263 = vector.extract_strided_slice %250 {offsets = [0, 128], sizes = [8, 128], strides = [1, 1]} : vector<8x384xf32> to vector<8x128xf32>
    %264 = vector.extract_strided_slice %254 {offsets = [0, 128], sizes = [8, 128], strides = [1, 1]} : vector<8x384xf32> to vector<8x128xf32>
    %265 = arith.addf %263, %264 : vector<8x128xf32>
    %266 = arith.negf %265 : vector<8x128xf32>
    %267 = math.exp %266 : vector<8x128xf32>
    %cst_71 = arith.constant 1.000000e+00 : f32
    %268 = vector.broadcast %cst_71 : f32 to vector<8x128xf32>
    %269 = arith.addf %268, %267 : vector<8x128xf32>
    %270 = arith.divf %268, %269 : vector<8x128xf32>
    %271 = vector.extract_strided_slice %250 {offsets = [0, 256], sizes = [8, 128], strides = [1, 1]} : vector<8x384xf32> to vector<8x128xf32>
    %272 = vector.extract_strided_slice %254 {offsets = [0, 256], sizes = [8, 128], strides = [1, 1]} : vector<8x384xf32> to vector<8x128xf32>
    %273 = arith.mulf %262, %272 : vector<8x128xf32>
    %274 = arith.addf %271, %273 : vector<8x128xf32>
    %275 = math.tanh %274 : vector<8x128xf32>
    %cst_72 = arith.constant 1.000000e+00 : f32
    %276 = vector.broadcast %cst_72 : f32 to vector<8x128xf32>
    %277 = arith.subf %276, %270 : vector<8x128xf32>
    %278 = arith.mulf %277, %275 : vector<8x128xf32>
    %279 = arith.mulf %270, %242 : vector<8x128xf32>
    %280 = arith.addf %278, %279 : vector<8x128xf32>
    %281 = arith.truncf %280 : vector<8x128xf32> to vector<8x128xbf16>
    %282 = arith.index_cast %c6_i32 : i32 to index
    %c0_73 = arith.constant 0 : index
    %c0_74 = arith.constant 0 : index
    %283 = vector.load %arg9[%282, %c0_73, %c0_74] : memref<8x8x128xbf16, #tpu.memory_space<vmem>>, vector<1x8x128xbf16>
    %284 = vector.shape_cast %283 : vector<1x8x128xbf16> to vector<8x128xbf16>
    %285 = vector.shape_cast %281 : vector<8x128xbf16> to vector<1x8x128xbf16>
    tpu.vector_store %arg9[%282, %c0_73, %c0_74], %285 {strides = array<i32>} : memref<8x8x128xbf16, #tpu.memory_space<vmem>>, vector<1x8x128xbf16>,
    %c7_i32 = arith.constant 7 : i32
    %286 = arith.index_cast %c7_i32 : i32 to index
    %c0_75 = arith.constant 0 : index
    %c0_76 = arith.constant 0 : index
    %287 = vector.load %arg12[%286, %c0_75, %c0_76] : memref<8x8x384xf32, #tpu.memory_space<vmem>>, vector<1x8x384xf32>
    %288 = vector.shape_cast %287 : vector<1x8x384xf32> to vector<8x384xf32>
    %289 = arith.truncf %280 : vector<8x128xf32> to vector<8x128xbf16>
    %cst_77 = arith.constant dense<0.000000e+00> : vector<8x384xf32>
    %290 = tpu.matmul %289, %17, %cst_77 {dimension_numbers = #tpu.dot_dimension_numbers<[1], [0], [0], [1], [0, 0, 1, 1], [], []>} : vector<8x128xbf16>, vector<128x384xbf16>, vector<8x384xf32> -> vector<8x384xf32>
    %291 = vector.broadcast %18 : vector<1x384xf32> to vector<8x384xf32>
    %292 = arith.addf %290, %291 : vector<8x384xf32>
    %293 = vector.extract_strided_slice %288 {offsets = [0, 0], sizes = [8, 128], strides = [1, 1]} : vector<8x384xf32> to vector<8x128xf32>
    %294 = vector.extract_strided_slice %292 {offsets = [0, 0], sizes = [8, 128], strides = [1, 1]} : vector<8x384xf32> to vector<8x128xf32>
    %295 = arith.addf %293, %294 : vector<8x128xf32>
    %296 = arith.negf %295 : vector<8x128xf32>
    %297 = math.exp %296 : vector<8x128xf32>
    %cst_78 = arith.constant 1.000000e+00 : f32
    %298 = vector.broadcast %cst_78 : f32 to vector<8x128xf32>
    %299 = arith.addf %298, %297 : vector<8x128xf32>
    %300 = arith.divf %298, %299 : vector<8x128xf32>
    %301 = vector.extract_strided_slice %288 {offsets = [0, 128], sizes = [8, 128], strides = [1, 1]} : vector<8x384xf32> to vector<8x128xf32>
    %302 = vector.extract_strided_slice %292 {offsets = [0, 128], sizes = [8, 128], strides = [1, 1]} : vector<8x384xf32> to vector<8x128xf32>
    %303 = arith.addf %301, %302 : vector<8x128xf32>
    %304 = arith.negf %303 : vector<8x128xf32>
    %305 = math.exp %304 : vector<8x128xf32>
    %cst_79 = arith.constant 1.000000e+00 : f32
    %306 = vector.broadcast %cst_79 : f32 to vector<8x128xf32>
    %307 = arith.addf %306, %305 : vector<8x128xf32>
    %308 = arith.divf %306, %307 : vector<8x128xf32>
    %309 = vector.extract_strided_slice %288 {offsets = [0, 256], sizes = [8, 128], strides = [1, 1]} : vector<8x384xf32> to vector<8x128xf32>
    %310 = vector.extract_strided_slice %292 {offsets = [0, 256], sizes = [8, 128], strides = [1, 1]} : vector<8x384xf32> to vector<8x128xf32>
    %311 = arith.mulf %300, %310 : vector<8x128xf32>
    %312 = arith.addf %309, %311 : vector<8x128xf32>
    %313 = math.tanh %312 : vector<8x128xf32>
    %cst_80 = arith.constant 1.000000e+00 : f32
    %314 = vector.broadcast %cst_80 : f32 to vector<8x128xf32>
    %315 = arith.subf %314, %308 : vector<8x128xf32>
    %316 = arith.mulf %315, %313 : vector<8x128xf32>
    %317 = arith.mulf %308, %280 : vector<8x128xf32>
    %318 = arith.addf %316, %317 : vector<8x128xf32>
    %319 = arith.truncf %318 : vector<8x128xf32> to vector<8x128xbf16>
    %320 = arith.index_cast %c7_i32 : i32 to index
    %c0_81 = arith.constant 0 : index
    %c0_82 = arith.constant 0 : index
    %321 = vector.load %arg9[%320, %c0_81, %c0_82] : memref<8x8x128xbf16, #tpu.memory_space<vmem>>, vector<1x8x128xbf16>
    %322 = vector.shape_cast %321 : vector<1x8x128xbf16> to vector<8x128xbf16>
    %323 = vector.shape_cast %319 : vector<8x128xbf16> to vector<1x8x128xbf16>
    tpu.vector_store %arg9[%320, %c0_81, %c0_82], %323 {strides = array<i32>} : memref<8x8x128xbf16, #tpu.memory_space<vmem>>, vector<1x8x128xbf16>,
    %c8_i32 = arith.constant 8 : i32
    %c0_83 = arith.constant 0 : index
    %c0_84 = arith.constant 0 : index
    %324 = vector.load %arg10[%c0_83, %c0_84] : memref<8x128xf32, #tpu.memory_space<vmem>>, vector<8x128xf32>
    tpu.vector_store %arg10[%c0_83, %c0_84], %318 {strides = array<i32>} : memref<8x128xf32, #tpu.memory_space<vmem>>, vector<8x128xf32>,
    return
  }
  func.func @transform_0(%arg0: i32, %arg1: i32) -> (i32, i32, i32) {
    %c0_i32 = arith.constant 0 : i32
    %c0_i32_0 = arith.constant 0 : i32
    return %arg1, %arg0, %c0_i32 : i32, i32, i32
  }
  func.func @transform_1(%arg0: i32, %arg1: i32) -> (i32, i32) {
    %c0_i32 = arith.constant 0 : i32
    %c0_i32_0 = arith.constant 0 : i32
    return %arg0, %c0_i32 : i32, i32
  }
  func.func @transform_2(%arg0: i32, %arg1: i32) -> (i32, i32) {
    %c0_i32 = arith.constant 0 : i32
    %c0_i32_0 = arith.constant 0 : i32
    %c0_i32_1 = arith.constant 0 : i32
    return %c0_i32, %c0_i32_0 : i32, i32
  }
  func.func @transform_3(%arg0: i32, %arg1: i32) -> (i32, i32) {
    %c0_i32 = arith.constant 0 : i32
    %c0_i32_0 = arith.constant 0 : i32
    %c0_i32_1 = arith.constant 0 : i32
    return %c0_i32, %c0_i32_0 : i32, i32
  }
  func.func @transform_4(%arg0: i32, %arg1: i32) -> (i32, i32) {
    %c0_i32 = arith.constant 0 : i32
    %c0_i32_0 = arith.constant 0 : i32
    %c0_i32_1 = arith.constant 0 : i32
    return %c0_i32, %c0_i32_0 : i32, i32
  }
  func.func @transform_5(%arg0: i32, %arg1: i32) -> (i32, i32) {
    %c0_i32 = arith.constant 0 : i32
    %c0_i32_0 = arith.constant 0 : i32
    %c0_i32_1 = arith.constant 0 : i32
    return %c0_i32, %c0_i32_0 : i32, i32
  }
  func.func @transform_6(%arg0: i32, %arg1: i32) -> (i32, i32) {
    %c0_i32 = arith.constant 0 : i32
    %c0_i32_0 = arith.constant 0 : i32
    %c0_i32_1 = arith.constant 0 : i32
    return %c0_i32, %c0_i32_0 : i32, i32
  }
  func.func @transform_7(%arg0: i32, %arg1: i32) -> (i32, i32, i32) {
    %c0_i32 = arith.constant 0 : i32
    %c0_i32_0 = arith.constant 0 : i32
    return %arg1, %arg0, %c0_i32 : i32, i32, i32
  }
}

</mosaic_0001>

<llo_original>
// kernel: encoder_decoder_forward.5
$region0: #{encoder_decoder_forward.5}
  #allocation0 [shape = 'u32[]', space=smem, size = 0x4, offset = 0x4, fixed_abs, tag = 'smem constant byte address 0x4 - core index']
  #allocation1 [shape = 'u32[144,128]{1,0:T(1,128)}', space=vmem, size = 0x12000, scoped, tag = 'internal scratch']
  %s0 = inlined_call_operand.vmem [shape: bf16[64,128], index: 0, kind: input, shape index: {}]
  %s1 = inlined_call_operand.vmem [shape: bf16[128,256], index: 1, kind: input, shape index: {}]
  %s2 = inlined_call_operand.vmem [shape: f32[1,256], index: 2, kind: input, shape index: {}]
  %s3 = inlined_call_operand.hbm [shape: f32[64,256], index: 3, kind: output, shape index: {}]
  %s4 = sld [smem:[#allocation0]]
  $region22: #{encoder_decoder_forward.5} parent=0
    _
  %s6 = ssub.s32 1, %s4
  %s7 = scalar_select 0, %s6, %s4
  $region1: #{encoder_decoder_forward.5} parent=0
    #allocation2 [shape = 'u8[65536]{0}', space=vmem, size = 0x10000, scoped, tag = 'output window, operand 0, single buffered']
    #allocation3 [shape = 's32[1]{0}', space=sflag, size = 0x4, scoped, tag = 'scoped memory for encoder_decoder_forward.5']
    %8 = vsyncpa [#allocation3], 0
    // Predicated region
    $region2: #{encoder_decoder_forward.5} parent=1 // pred_check
      _
    $region3: #{encoder_decoder_forward.5} parent=1 // pred_check_branch
      %10 = sbr.rel (0) target = $region5
    $region4: #{encoder_decoder_forward.5} parent=1 // pred_region
      _
    $region5: #{encoder_decoder_forward.5} parent=1 // pred_fallthru
      _
    // Predicated region
    $region6: #{encoder_decoder_forward.5} parent=1 // pred_check
      _
    $region7: #{encoder_decoder_forward.5} parent=1 // pred_check_branch
      %12 = sbr.rel (0) target = $region9
    $region8: #{encoder_decoder_forward.5} parent=1 // pred_region
      _
    $region9: #{encoder_decoder_forward.5} parent=1 // pred_fallthru
      _
    // Predicated region
    $region10: #{encoder_decoder_forward.5} parent=1 // pred_check
      _
    $region11: #{encoder_decoder_forward.5} parent=1 // pred_check_branch
      %14 = sbr.rel (0) target = $region13
    $region12: #{encoder_decoder_forward.5} parent=1 // pred_region
      _
    $region13: #{encoder_decoder_forward.5} parent=1 // pred_fallthru
      _
    %v16 = vld [vmem:[%s0] sm:$0xf]
    %v17 = vld [vmem:[%s0 + $0x4] sm:$0xf]
    %v18 = vld [vmem:[%s0 + $0x8] sm:$0xf]
    %v19 = vld [vmem:[%s0 + $0xc] sm:$0xf]
    %v20 = vld [vmem:[%s0 + $0x10] sm:$0xf]
    %v21 = vld [vmem:[%s0 + $0x14] sm:$0xf]
    %v22 = vld [vmem:[%s0 + $0x18] sm:$0xf]
    %v23 = vld [vmem:[%s0 + $0x1c] sm:$0xf]
    %v24 = vld [vmem:[%s1] sm:$0xff]
    %v25 = vld [vmem:[%s1 + $0x8] sm:$0xff]
    %v26 = vld [vmem:[%s1 + $0x10] sm:$0xff]
    %v27 = vld [vmem:[%s1 + $0x18] sm:$0xff]
    %v28 = vld [vmem:[%s1 + $0x20] sm:$0xff]
    %v29 = vld [vmem:[%s1 + $0x28] sm:$0xff]
    %v30 = vld [vmem:[%s1 + $0x30] sm:$0xff]
    %v31 = vld [vmem:[%s1 + $0x38] sm:$0xff]
    %v32 = vld [vmem:[%s1 + $0x40] sm:$0xff]
    %v33 = vld [vmem:[%s1 + $0x48] sm:$0xff]
    %v34 = vld [vmem:[%s1 + $0x50] sm:$0xff]
    %v35 = vld [vmem:[%s1 + $0x58] sm:$0xff]
    %v36 = vld [vmem:[%s1 + $0x60] sm:$0xff]
    %v37 = vld [vmem:[%s1 + $0x68] sm:$0xff]
    %v38 = vld [vmem:[%s1 + $0x70] sm:$0xff]
    %v39 = vld [vmem:[%s1 + $0x78] sm:$0xff]
    %v40 = vld [vmem:[%s2] sm:$0x3]
    %v42 = vlaneseq
    %v43 = vshrl.u32 %v42, 7
    %v44 = vsub.s32 0, %v43
    %v45 = vrot.slane %v40, %v44
    %v46 = vlaneseq
    %v47 = vshrl.u32 %v46, 7
    %v48 = vsub.s32 1, %v47
    %v49 = vrot.slane %v40, %v48
    %v60 = vunpack.c.l.b16 %v16
    %v61 = vunpack.c.l.b16 %v17
    %v62 = vunpack.c.l.b16 %v18
    %v63 = vunpack.c.l.b16 %v19
    %v64 = vunpack.c.l.b16 %v20
    %v65 = vunpack.c.l.b16 %v21
    %v66 = vunpack.c.l.b16 %v22
    %v67 = vunpack.c.l.b16 %v23
    %v68 = vpack.c.b16 %v61, %v60
    %v69 = vpack.c.b16 %v63, %v62
    %v70 = vpack.c.b16 %v65, %v64
    %v71 = vpack.c.b16 %v67, %v66
    %v92 = vunpack.c.l.b16 %v24
    %v93 = vunpack.c.h.b16 %v24
    %v94 = vunpack.c.l.b16 %v25
    %v95 = vunpack.c.h.b16 %v25
    %v96 = vunpack.c.l.b16 %v26
    %v97 = vunpack.c.h.b16 %v26
    %v98 = vunpack.c.l.b16 %v27
    %v99 = vunpack.c.h.b16 %v27
    %v100 = vunpack.c.l.b16 %v28
    %v101 = vunpack.c.h.b16 %v28
    %v102 = vunpack.c.l.b16 %v29
    %v103 = vunpack.c.h.b16 %v29
    %v104 = vunpack.c.l.b16 %v30
    %v105 = vunpack.c.h.b16 %v30
    %v106 = vunpack.c.l.b16 %v31
    %v107 = vunpack.c.h.b16 %v31
    %v108 = vunpack.c.l.b16 %v32
    %v109 = vunpack.c.h.b16 %v32
    %v110 = vunpack.c.l.b16 %v33
    %v111 = vunpack.c.h.b16 %v33
    %v112 = vunpack.c.l.b16 %v34
    %v113 = vunpack.c.h.b16 %v34
    %v114 = vunpack.c.l.b16 %v35
    %v115 = vunpack.c.h.b16 %v35
    %v116 = vunpack.c.l.b16 %v36
    %v117 = vunpack.c.h.b16 %v36
    %v118 = vunpack.c.l.b16 %v37
    %v119 = vunpack.c.h.b16 %v37
    %v120 = vunpack.c.l.b16 %v38
    %v121 = vunpack.c.h.b16 %v38
    %v122 = vunpack.c.l.b16 %v39
    %v123 = vunpack.c.h.b16 %v39
    %v124 = vpack.c.b16 %v94, %v92
    %v125 = vpack.c.b16 %v95, %v93
    %v126 = vpack.c.b16 %v98, %v96
    %v127 = vpack.c.b16 %v99, %v97
    %v128 = vpack.c.b16 %v102, %v100
    %v129 = vpack.c.b16 %v103, %v101
    %v130 = vpack.c.b16 %v106, %v104
    %v131 = vpack.c.b16 %v107, %v105
    %v132 = vpack.c.b16 %v110, %v108
    %v133 = vpack.c.b16 %v111, %v109
    %v134 = vpack.c.b16 %v114, %v112
    %v135 = vpack.c.b16 %v115, %v113
    %v136 = vpack.c.b16 %v118, %v116
    %v137 = vpack.c.b16 %v119, %v117
    %v138 = vpack.c.b16 %v122, %v120
    %v139 = vpack.c.b16 %v123, %v121
    %156 = vmatprep.subr.bf16.mxu0 %v139
    %157 = vmatpush1.bf16.msra.mxu0 %v138
    %158 = vmatprep.subr.bf16.mxu0 %v137
    %159 = vmatpush1.bf16.msra.mxu0 %v136
    %160 = vmatprep.subr.bf16.mxu0 %v135
    %161 = vmatpush1.bf16.msra.mxu0 %v134
    %162 = vmatprep.subr.bf16.mxu0 %v133
    %163 = vmatpush1.bf16.msra.mxu0 %v132
    %164 = vmatprep.subr.bf16.mxu0 %v131
    %165 = vmatpush1.bf16.msra.mxu0 %v130
    %166 = vmatprep.subr.bf16.mxu0 %v129
    %167 = vmatpush1.bf16.msra.mxu0 %v128
    %168 = vmatprep.subr.bf16.mxu0 %v127
    %169 = vmatpush1.bf16.msra.mxu0 %v126
    %170 = vmatprep.subr.bf16.mxu0 %v125
    %171 = vmatpush1.bf16.msra.mxu0 %v124
    %172 = vmatprep.subr.bf16.mxu0 0
    %173 = vmatpush2.bf16.msra.mxu0 0
    %174 = vmatprep.subr.bf16.mxu0 0
    %175 = vmatpush2.bf16.msra.mxu0 0
    %176 = vmatprep.subr.bf16.mxu0 0
    %177 = vmatpush2.bf16.msra.mxu0 0
    %178 = vmatprep.subr.bf16.mxu0 0
    %179 = vmatpush2.bf16.msra.mxu0 0
    %180 = vmatprep.subr.bf16.mxu0 0
    %181 = vmatpush2.bf16.msra.mxu0 0
    %182 = vmatprep.subr.bf16.mxu0 0
    %183 = vmatpush2.bf16.msra.mxu0 0
    %184 = vmatprep.subr.bf16.mxu0 0
    %185 = vmatpush2.bf16.msra.mxu0 0
    %186 = vmatprep.subr.bf16.mxu0 0
    %187 = vmatpush2.bf16.msra.mxu0 0
    %188 = vmatprep.mubr.bf16.mxu0 0
    %189 = vmatmul.mubr.bf16.gmra.mxu0 %v68
    %v190 = vpop.f32.mrf.mxu0
    %v191 = vadd.f32 %v45, %v190
    %v192 = vpop.f32.mrf.mxu0
    %v193 = vadd.f32 %v49, %v192
    %v194 = vpop.f32.mrf.mxu0
    %v195 = vadd.f32 %v45, %v194
    %v196 = vpop.f32.mrf.mxu0
    %v197 = vadd.f32 %v49, %v196
    %198 = vmatprep.mubr.bf16.mxu0 0
    %199 = vmatmul.mubr.bf16.gmra.mxu0 %v69
    %v200 = vpop.f32.mrf.mxu0
    %v201 = vadd.f32 %v45, %v200
    %v202 = vpop.f32.mrf.mxu0
    %v203 = vadd.f32 %v49, %v202
    %v204 = vpop.f32.mrf.mxu0
    %v205 = vadd.f32 %v45, %v204
    %v206 = vpop.f32.mrf.mxu0
    %v207 = vadd.f32 %v49, %v206
    %208 = vmatprep.mubr.bf16.mxu0 0
    %209 = vmatmul.mubr.bf16.gmra.mxu0 %v70
    %v210 = vpop.f32.mrf.mxu0
    %v211 = vadd.f32 %v45, %v210
    %v212 = vpop.f32.mrf.mxu0
    %v213 = vadd.f32 %v49, %v212
    %v214 = vpop.f32.mrf.mxu0
    %v215 = vadd.f32 %v45, %v214
    %v216 = vpop.f32.mrf.mxu0
    %v217 = vadd.f32 %v49, %v216
    %218 = vmatprep.mubr.bf16.mxu0 0
    %219 = vmatmul.mubr.bf16.gmra.mxu0 %v71
    %v220 = vpop.f32.mrf.mxu0
    %v221 = vadd.f32 %v45, %v220
    %v222 = vpop.f32.mrf.mxu0
    %v223 = vadd.f32 %v49, %v222
    %v224 = vpop.f32.mrf.mxu0
    %v225 = vadd.f32 %v45, %v224
    %v226 = vpop.f32.mrf.mxu0
    %v227 = vadd.f32 %v49, %v226
    %228 = vdwg.mxu0
    %229 = vst [vmem:[#allocation2] sm:$0xff] %v191
    %230 = vst [vmem:[#allocation2 + $0x8] sm:$0xff] %v193
    %231 = vst [vmem:[#allocation2 + $0x10] sm:$0xff] %v195
    %232 = vst [vmem:[#allocation2 + $0x18] sm:$0xff] %v197
    %233 = vst [vmem:[#allocation2 + $0x20] sm:$0xff] %v201
    %234 = vst [vmem:[#allocation2 + $0x28] sm:$0xff] %v203
    %235 = vst [vmem:[#allocation2 + $0x30] sm:$0xff] %v205
    %236 = vst [vmem:[#allocation2 + $0x38] sm:$0xff] %v207
    %237 = vst [vmem:[#allocation2 + $0x40] sm:$0xff] %v211
    %238 = vst [vmem:[#allocation2 + $0x48] sm:$0xff] %v213
    %239 = vst [vmem:[#allocation2 + $0x50] sm:$0xff] %v215
    %240 = vst [vmem:[#allocation2 + $0x58] sm:$0xff] %v217
    %241 = vst [vmem:[#allocation2 + $0x60] sm:$0xff] %v221
    %242 = vst [vmem:[#allocation2 + $0x68] sm:$0xff] %v223
    %243 = vst [vmem:[#allocation2 + $0x70] sm:$0xff] %v225
    %244 = vst [vmem:[#allocation2 + $0x78] sm:$0xff] %v227
    // Predicated region
    $region14: #{encoder_decoder_forward.5} parent=1 // pred_check
      _
    $region15: #{encoder_decoder_forward.5} parent=1 // pred_check_branch
      %246 = sbr.rel (0) target = $region17
    $region16: #{encoder_decoder_forward.5} parent=1 // pred_region
      %s248 = ssub.s32 2048, 2048
      %249 = vsyncadd [#allocation3], %s248
      %s250 = sshll.u32 [#allocation2], 4
      %s251 = int_to_ptr.vmem [resolvable:$true] %s250
      %256 = dma.vmem_to_hbm [thread:$0]  %s251, 2048, %s3, [#allocation3], 256, 256, 16
    $region17: #{encoder_decoder_forward.5} parent=1 // pred_fallthru
      _
    // Predicated region
    $region18: #{encoder_decoder_forward.5} parent=1 // pred_check
      _
    $region19: #{encoder_decoder_forward.5} parent=1 // pred_check_branch
      %258 = sbr.rel (0) target = $region21
    $region20: #{encoder_decoder_forward.5} parent=1 // pred_region
      %259 = dma.done [#allocation3], 2048
    $region21: #{encoder_decoder_forward.5} parent=1 // pred_fallthru
      _
    %260 = vsyncpa [#allocation3], 1

// kernel: encoder_decoder_forward.3
$region0: #{encoder_decoder_forward.3}
  #allocation0 [shape = 'u32[]', space=smem, size = 0x4, offset = 0x4, fixed_abs, tag = 'smem constant byte address 0x4 - core index']
  #allocation1 [shape = 'u32[144,128]{1,0:T(1,128)}', space=vmem, size = 0x12000, scoped, tag = 'internal scratch']
  #allocation2 [shape = 'f32[8,8,384]{2,1,0:T(8,128)}', space=vmem, size = 0x18000, scoped, tag = 'scratch operand']
  %s0 = inlined_call_operand.vmem [shape: bf16[8,8,32], index: 0, kind: input, shape index: {}]
  %s1 = inlined_call_operand.vmem [shape: bf16[32,384], index: 1, kind: input, shape index: {}]
  %s2 = inlined_call_operand.vmem [shape: bf16[128,384], index: 2, kind: input, shape index: {}]
  %s3 = inlined_call_operand.vmem [shape: f32[1,384], index: 3, kind: input, shape index: {}]
  %s4 = inlined_call_operand.vmem [shape: f32[1,384], index: 4, kind: input, shape index: {}]
  %s5 = inlined_call_operand.vmem [shape: f32[8,128], index: 5, kind: output, shape index: {}]
  %s6 = sld [smem:[#allocation0]]
  $region34: #{encoder_decoder_forward.3} parent=0
    _
  %s8 = ssub.s32 1, %s6
  %s9 = scalar_select 0, %s8, %s6
  // Predicated region
  $region2: #{encoder_decoder_forward.3} parent=0 // pred_check
    _
  $region3: #{encoder_decoder_forward.3} parent=0 // pred_check_branch
    %11 = sbr.rel (0) target = $region5
  $region4: #{encoder_decoder_forward.3} parent=0 // pred_region
    _
  $region5: #{encoder_decoder_forward.3} parent=0 // pred_fallthru
    _
  // Predicated region
  $region6: #{encoder_decoder_forward.3} parent=0 // pred_check
    _
  $region7: #{encoder_decoder_forward.3} parent=0 // pred_check_branch
    %13 = sbr.rel (0) target = $region9
  $region8: #{encoder_decoder_forward.3} parent=0 // pred_region
    _
  $region9: #{encoder_decoder_forward.3} parent=0 // pred_fallthru
    _
  // Predicated region
  $region10: #{encoder_decoder_forward.3} parent=0 // pred_check
    _
  $region11: #{encoder_decoder_forward.3} parent=0 // pred_check_branch
    %15 = sbr.rel (0) target = $region13
  $region12: #{encoder_decoder_forward.3} parent=0 // pred_region
    _
  $region13: #{encoder_decoder_forward.3} parent=0 // pred_fallthru
    _
  // Predicated region
  $region14: #{encoder_decoder_forward.3} parent=0 // pred_check
    _
  $region15: #{encoder_decoder_forward.3} parent=0 // pred_check_branch
    %17 = sbr.rel (0) target = $region17
  $region16: #{encoder_decoder_forward.3} parent=0 // pred_region
    _
  $region17: #{encoder_decoder_forward.3} parent=0 // pred_fallthru
    _
  // Predicated region
  $region18: #{encoder_decoder_forward.3} parent=0 // pred_check
    _
  $region19: #{encoder_decoder_forward.3} parent=0 // pred_check_branch
    %19 = sbr.rel (0) target = $region21
  $region20: #{encoder_decoder_forward.3} parent=0 // pred_region
    _
  $region21: #{encoder_decoder_forward.3} parent=0 // pred_fallthru
    _
  %p21 = scmp.eq.s32.totalorder 0, 0
  // Predicated region
  $region22: #{encoder_decoder_forward.3} parent=0 // pred_check
    %p22 = pneg %p21
  $region23: #{encoder_decoder_forward.3} parent=0 // pred_check_branch
    %24 = sbr.rel (%p22) target = $region25
  $region24: #{encoder_decoder_forward.3} parent=0 // pred_region
    %25 = vst [vmem:[%s5] sm:$0xff] 0.0
  $region25: #{encoder_decoder_forward.3} parent=0 // pred_fallthru
    _
  %v26 = vld [vmem:[%s0] sm:$0xf]
  %v27 = vld [vmem:[%s0 + $0x4] sm:$0xf]
  %v28 = vld [vmem:[%s0 + $0x8] sm:$0xf]
  %v29 = vld [vmem:[%s0 + $0xc] sm:$0xf]
  %v30 = vld [vmem:[%s0 + $0x10] sm:$0xf]
  %v31 = vld [vmem:[%s0 + $0x14] sm:$0xf]
  %v32 = vld [vmem:[%s0 + $0x18] sm:$0xf]
  %v33 = vld [vmem:[%s0 + $0x1c] sm:$0xf]
  %v34 = vld [vmem:[%s1] sm:$0xff]
  %v35 = vld [vmem:[%s1 + $0x8] sm:$0xf]
  %v36 = vld [vmem:[%s1 + $0xc] sm:$0xff]
  %v37 = vld [vmem:[%s1 + $0x14] sm:$0xf]
  %v38 = vld [vmem:[%s1 + $0x18] sm:$0xff]
  %v39 = vld [vmem:[%s1 + $0x20] sm:$0xf]
  %v40 = vld [vmem:[%s1 + $0x24] sm:$0xff]
  %v41 = vld [vmem:[%s1 + $0x2c] sm:$0xf]
  %v50 = vunpack.c.l.b16 %v26
  %v51 = vunpack.c.l.b16 %v27
  %v52 = vunpack.c.l.b16 %v28
  %v53 = vunpack.c.l.b16 %v29
  %v54 = vunpack.c.l.b16 %v30
  %v55 = vunpack.c.l.b16 %v31
  %v56 = vunpack.c.l.b16 %v32
  %v57 = vunpack.c.l.b16 %v33
  %v58 = vpack.c.b16 %v51, %v50
  %v59 = vpack.c.b16 %v53, %v52
  %v60 = vpack.c.b16 %v55, %v54
  %v61 = vpack.c.b16 %v57, %v56
  %v70 = vunpack.c.l.b16 %v34
  %v71 = vunpack.c.h.b16 %v34
  %v72 = vunpack.c.l.b16 %v35
  %v73 = vunpack.c.l.b16 %v36
  %v74 = vunpack.c.h.b16 %v36
  %v75 = vunpack.c.l.b16 %v37
  %v76 = vunpack.c.l.b16 %v38
  %v77 = vunpack.c.h.b16 %v38
  %v78 = vunpack.c.l.b16 %v39
  %v79 = vunpack.c.l.b16 %v40
  %v80 = vunpack.c.h.b16 %v40
  %v81 = vunpack.c.l.b16 %v41
  %v82 = vpack.c.b16 %v73, %v70
  %v83 = vpack.c.b16 %v74, %v71
  %v84 = vpack.c.b16 %v75, %v72
  %v85 = vpack.c.b16 %v79, %v76
  %v86 = vpack.c.b16 %v80, %v77
  %v87 = vpack.c.b16 %v81, %v78
  %vm94 = vcmask 261120
  %v96 = vsel %vm94, %v58, 0
  %v99 = vsel %vm94, %v59, 0
  %v102 = vsel %vm94, %v60, 0
  %v105 = vsel %vm94, %v61, 0
  %107 = vmatprep.subr.bf16.mxu0 0
  %108 = vmatpush1.bf16.msra.mxu0 0
  %109 = vmatprep.subr.bf16.mxu0 0
  %110 = vmatpush1.bf16.msra.mxu0 0
  %111 = vmatprep.subr.bf16.mxu0 0
  %112 = vmatpush1.bf16.msra.mxu0 0
  %113 = vmatprep.subr.bf16.mxu0 0
  %114 = vmatpush1.bf16.msra.mxu0 0
  %115 = vmatprep.subr.bf16.mxu0 0
  %116 = vmatpush1.bf16.msra.mxu0 0
  %117 = vmatprep.subr.bf16.mxu0 0
  %118 = vmatpush1.bf16.msra.mxu0 0
  %119 = vmatprep.subr.bf16.mxu0 %v86
  %120 = vmatpush1.bf16.msra.mxu0 %v85
  %121 = vmatprep.subr.bf16.mxu0 %v83
  %122 = vmatpush1.bf16.msra.mxu0 %v82
  %123 = vmatprep.subr.bf16.mxu0 0
  %124 = vmatpush2.bf16.msra.mxu0 0
  %125 = vmatprep.subr.bf16.mxu0 0
  %126 = vmatpush2.bf16.msra.mxu0 0
  %127 = vmatprep.subr.bf16.mxu0 0
  %128 = vmatpush2.bf16.msra.mxu0 0
  %129 = vmatprep.subr.bf16.mxu0 0
  %130 = vmatpush2.bf16.msra.mxu0 0
  %131 = vmatprep.subr.bf16.mxu0 0
  %132 = vmatpush2.bf16.msra.mxu0 0
  %133 = vmatprep.subr.bf16.mxu0 0
  %134 = vmatpush2.bf16.msra.mxu0 0
  %135 = vmatprep.subr.bf16.mxu0 0
  %136 = vmatpush2.bf16.msra.mxu0 0
  %137 = vmatprep.subr.bf16.mxu0 0
  %138 = vmatpush2.bf16.msra.mxu0 0
  %139 = vmatprep.mubr.bf16.mxu0 0
  %140 = vmatmul.mubr.bf16.gmra.mxu0 %v96
  %v141 = vpop.f32.mrf.mxu0
  %v142 = vadd.f32 0.0, %v141
  %v143 = vpop.f32.mrf.mxu0
  %v144 = vadd.f32 0.0, %v143
  %v145 = vpop.f32.mrf.mxu0
  %v146 = vadd.f32 0.0, %v145
  %v147 = vpop.f32.mrf.mxu0
  %v148 = vadd.f32 0.0, %v147
  %149 = vmatprep.mubr.bf16.mxu0 0
  %150 = vmatmul.mubr.bf16.gmra.mxu0 %v99
  %v151 = vpop.f32.mrf.mxu0
  %v152 = vadd.f32 0.0, %v151
  %v153 = vpop.f32.mrf.mxu0
  %v154 = vadd.f32 0.0, %v153
  %v155 = vpop.f32.mrf.mxu0
  %v156 = vadd.f32 0.0, %v155
  %v157 = vpop.f32.mrf.mxu0
  %v158 = vadd.f32 0.0, %v157
  %159 = vmatprep.mubr.bf16.mxu0 0
  %160 = vmatmul.mubr.bf16.gmra.mxu0 %v102
  %v161 = vpop.f32.mrf.mxu0
  %v162 = vadd.f32 0.0, %v161
  %v163 = vpop.f32.mrf.mxu0
  %v164 = vadd.f32 0.0, %v163
  %v165 = vpop.f32.mrf.mxu0
  %v166 = vadd.f32 0.0, %v165
  %v167 = vpop.f32.mrf.mxu0
  %v168 = vadd.f32 0.0, %v167
  %169 = vmatprep.mubr.bf16.mxu0 0
  %170 = vmatmul.mubr.bf16.gmra.mxu0 %v105
  %v171 = vpop.f32.mrf.mxu0
  %v172 = vadd.f32 0.0, %v171
  %v173 = vpop.f32.mrf.mxu0
  %v174 = vadd.f32 0.0, %v173
  %v175 = vpop.f32.mrf.mxu0
  %v176 = vadd.f32 0.0, %v175
  %v177 = vpop.f32.mrf.mxu0
  %v178 = vadd.f32 0.0, %v177
  %179 = vdwg.mxu0
  %180 = vmatprep.subr.bf16.mxu0 0
  %181 = vmatpush1.bf16.msra.mxu0 0
  %182 = vmatprep.subr.bf16.mxu0 0
  %183 = vmatpush1.bf16.msra.mxu0 0
  %184 = vmatprep.subr.bf16.mxu0 0
  %185 = vmatpush1.bf16.msra.mxu0 0
  %186 = vmatprep.subr.bf16.mxu0 0
  %187 = vmatpush1.bf16.msra.mxu0 0
  %188 = vmatprep.subr.bf16.mxu0 0
  %189 = vmatpush1.bf16.msra.mxu0 0
  %190 = vmatprep.subr.bf16.mxu0 0
  %191 = vmatpush1.bf16.msra.mxu0 0
  %192 = vmatprep.subr.bf16.mxu0 0
  %193 = vmatpush1.bf16.msra.mxu0 %v87
  %194 = vmatprep.subr.bf16.mxu0 0
  %195 = vmatpush1.bf16.msra.mxu0 %v84
  %196 = vmatprep.subr.bf16.mxu0 0
  %197 = vmatpush2.bf16.msra.mxu0 0
  %198 = vmatprep.subr.bf16.mxu0 0
  %199 = vmatpush2.bf16.msra.mxu0 0
  %200 = vmatprep.subr.bf16.mxu0 0
  %201 = vmatpush2.bf16.msra.mxu0 0
  %202 = vmatprep.subr.bf16.mxu0 0
  %203 = vmatpush2.bf16.msra.mxu0 0
  %204 = vmatprep.subr.bf16.mxu0 0
  %205 = vmatpush2.bf16.msra.mxu0 0
  %206 = vmatprep.subr.bf16.mxu0 0
  %207 = vmatpush2.bf16.msra.mxu0 0
  %208 = vmatprep.subr.bf16.mxu0 0
  %209 = vmatpush2.bf16.msra.mxu0 0
  %210 = vmatprep.subr.bf16.mxu0 0
  %211 = vmatpush2.bf16.msra.mxu0 0
  %212 = vmatprep.mubr.bf16.mxu0 0
  %213 = vmatmul.mubr.bf16.gmra.mxu0 %v96
  %v214 = vpop.f32.mrf.mxu0
  %v215 = vadd.f32 0.0, %v214
  %v216 = vpop.f32.mrf.mxu0
  %v217 = vpop.f32.mrf.mxu0
  %v218 = vadd.f32 0.0, %v217
  %v219 = vpop.f32.mrf.mxu0
  %220 = vmatprep.mubr.bf16.mxu0 0
  %221 = vmatmul.mubr.bf16.gmra.mxu0 %v99
  %v222 = vpop.f32.mrf.mxu0
  %v223 = vadd.f32 0.0, %v222
  %v224 = vpop.f32.mrf.mxu0
  %v225 = vpop.f32.mrf.mxu0
  %v226 = vadd.f32 0.0, %v225
  %v227 = vpop.f32.mrf.mxu0
  %228 = vmatprep.mubr.bf16.mxu0 0
  %229 = vmatmul.mubr.bf16.gmra.mxu0 %v102
  %v230 = vpop.f32.mrf.mxu0
  %v231 = vadd.f32 0.0, %v230
  %v232 = vpop.f32.mrf.mxu0
  %v233 = vpop.f32.mrf.mxu0
  %v234 = vadd.f32 0.0, %v233
  %v235 = vpop.f32.mrf.mxu0
  %236 = vmatprep.mubr.bf16.mxu0 0
  %237 = vmatmul.mubr.bf16.gmra.mxu0 %v105
  %v238 = vpop.f32.mrf.mxu0
  %v239 = vadd.f32 0.0, %v238
  %v240 = vpop.f32.mrf.mxu0
  %v241 = vpop.f32.mrf.mxu0
  %v242 = vadd.f32 0.0, %v241
  %v243 = vpop.f32.mrf.mxu0
  %244 = vdwg.mxu0
  %v245 = vld [vmem:[%s3] sm:$0x7]
  %v247 = vlaneseq
  %v248 = vshrl.u32 %v247, 7
  %v249 = vsub.s32 0, %v248
  %v250 = vrot.slane %v245, %v249
  %v251 = vlaneseq
  %v252 = vshrl.u32 %v251, 7
  %v253 = vsub.s32 1, %v252
  %v254 = vrot.slane %v245, %v253
  %v255 = vlaneseq
  %v256 = vshrl.u32 %v255, 7
  %v257 = vsub.s32 2, %v256
  %v258 = vrot.slane %v245, %v257
  %v262 = vadd.f32 %v142, %v250
  %v263 = vadd.f32 %v144, %v254
  %v264 = vadd.f32 %v215, %v258
  %v265 = vadd.f32 %v146, %v250
  %v266 = vadd.f32 %v148, %v254
  %v267 = vadd.f32 %v218, %v258
  %v268 = vadd.f32 %v152, %v250
  %v269 = vadd.f32 %v154, %v254
  %v270 = vadd.f32 %v223, %v258
  %v271 = vadd.f32 %v156, %v250
  %v272 = vadd.f32 %v158, %v254
  %v273 = vadd.f32 %v226, %v258
  %v274 = vadd.f32 %v162, %v250
  %v275 = vadd.f32 %v164, %v254
  %v276 = vadd.f32 %v231, %v258
  %v277 = vadd.f32 %v166, %v250
  %v278 = vadd.f32 %v168, %v254
  %v279 = vadd.f32 %v234, %v258
  %v280 = vadd.f32 %v172, %v250
  %v281 = vadd.f32 %v174, %v254
  %v282 = vadd.f32 %v239, %v258
  %v283 = vadd.f32 %v176, %v250
  %v284 = vadd.f32 %v178, %v254
  %v285 = vadd.f32 %v242, %v258
  %286 = vst [vmem:[#allocation2] sm:$0xff] %v262
  %287 = vst [vmem:[#allocation2 + $0x8] sm:$0xff] %v263
  %288 = vst [vmem:[#allocation2 + $0x10] sm:$0xff] %v264
  %289 = vst [vmem:[#allocation2 + $0x18] sm:$0xff] %v265
  %290 = vst [vmem:[#allocation2 + $0x20] sm:$0xff] %v266
  %291 = vst [vmem:[#allocation2 + $0x28] sm:$0xff] %v267
  %292 = vst [vmem:[#allocation2 + $0x30] sm:$0xff] %v268
  %293 = vst [vmem:[#allocation2 + $0x38] sm:$0xff] %v269
  %294 = vst [vmem:[#allocation2 + $0x40] sm:$0xff] %v270
  %295 = vst [vmem:[#allocation2 + $0x48] sm:$0xff] %v271
  %296 = vst [vmem:[#allocation2 + $0x50] sm:$0xff] %v272
  %297 = vst [vmem:[#allocation2 + $0x58] sm:$0xff] %v273
  %298 = vst [vmem:[#allocation2 + $0x60] sm:$0xff] %v274
  %299 = vst [vmem:[#allocation2 + $0x68] sm:$0xff] %v275
  %300 = vst [vmem:[#allocation2 + $0x70] sm:$0xff] %v276
  %301 = vst [vmem:[#allocation2 + $0x78] sm:$0xff] %v277
  %302 = vst [vmem:[#allocation2 + $0x80] sm:$0xff] %v278
  %303 = vst [vmem:[#allocation2 + $0x88] sm:$0xff] %v279
  %304 = vst [vmem:[#allocation2 + $0x90] sm:$0xff] %v280
  %305 = vst [vmem:[#allocation2 + $0x98] sm:$0xff] %v281
  %306 = vst [vmem:[#allocation2 + $0xa0] sm:$0xff] %v282
  %307 = vst [vmem:[#allocation2 + $0xa8] sm:$0xff] %v283
  %308 = vst [vmem:[#allocation2 + $0xb0] sm:$0xff] %v284
  %309 = vst [vmem:[#allocation2 + $0xb8] sm:$0xff] %v285
  %v310 = vld [vmem:[%s2] sm:$0xff]
  %v311 = vld [vmem:[%s2 + $0x8] sm:$0xf]
  %v312 = vld [vmem:[%s2 + $0xc] sm:$0xff]
  %v313 = vld [vmem:[%s2 + $0x14] sm:$0xf]
  %v314 = vld [vmem:[%s2 + $0x18] sm:$0xff]
  %v315 = vld [vmem:[%s2 + $0x20] sm:$0xf]
  %v316 = vld [vmem:[%s2 + $0x24] sm:$0xff]
  %v317 = vld [vmem:[%s2 + $0x2c] sm:$0xf]
  %v318 = vld [vmem:[%s2 + $0x30] sm:$0xff]
  %v319 = vld [vmem:[%s2 + $0x38] sm:$0xf]
  %v320 = vld [vmem:[%s2 + $0x3c] sm:$0xff]
  %v321 = vld [vmem:[%s2 + $0x44] sm:$0xf]
  %v322 = vld [vmem:[%s2 + $0x48] sm:$0xff]
  %v323 = vld [vmem:[%s2 + $0x50] sm:$0xf]
  %v324 = vld [vmem:[%s2 + $0x54] sm:$0xff]
  %v325 = vld [vmem:[%s2 + $0x5c] sm:$0xf]
  %v326 = vld [vmem:[%s2 + $0x60] sm:$0xff]
  %v327 = vld [vmem:[%s2 + $0x68] sm:$0xf]
  %v328 = vld [vmem:[%s2 + $0x6c] sm:$0xff]
  %v329 = vld [vmem:[%s2 + $0x74] sm:$0xf]
  %v330 = vld [vmem:[%s2 + $0x78] sm:$0xff]
  %v331 = vld [vmem:[%s2 + $0x80] sm:$0xf]
  %v332 = vld [vmem:[%s2 + $0x84] sm:$0xff]
  %v333 = vld [vmem:[%s2 + $0x8c] sm:$0xf]
  %v334 = vld [vmem:[%s2 + $0x90] sm:$0xff]
  %v335 = vld [vmem:[%s2 + $0x98] sm:$0xf]
  %v336 = vld [vmem:[%s2 + $0x9c] sm:$0xff]
  %v337 = vld [vmem:[%s2 + $0xa4] sm:$0xf]
  %v338 = vld [vmem:[%s2 + $0xa8] sm:$0xff]
  %v339 = vld [vmem:[%s2 + $0xb0] sm:$0xf]
  %v340 = vld [vmem:[%s2 + $0xb4] sm:$0xff]
  %v341 = vld [vmem:[%s2 + $0xbc] sm:$0xf]
  %v342 = vld [vmem:[%s4] sm:$0x7]
  %v343 = vld [vmem:[%s5] sm:$0xff]
  %v344 = vld [vmem:[#allocation2] sm:$0xff]
  %v345 = vld [vmem:[#allocation2 + $0x8] sm:$0xff]
  %v346 = vld [vmem:[#allocation2 + $0x10] sm:$0xff]
  %v347 = vpack.c.bf16 %v343, %v343
  %v349 = vlaneseq
  %v350 = vshrl.u32 %v349, 7
  %v351 = vsub.s32 0, %v350
  %v352 = vrot.slane %v342, %v351
  %v353 = vlaneseq
  %v354 = vshrl.u32 %v353, 7
  %v355 = vsub.s32 1, %v354
  %v356 = vrot.slane %v342, %v355
  %v357 = vlaneseq
  %v358 = vshrl.u32 %v357, 7
  %v359 = vsub.s32 2, %v358
  %v360 = vrot.slane %v342, %v359
  %v396 = vunpack.c.l.b16 %v310
  %v397 = vunpack.c.h.b16 %v310
  %v398 = vunpack.c.l.b16 %v311
  %v399 = vunpack.c.l.b16 %v312
  %v400 = vunpack.c.h.b16 %v312
  %v401 = vunpack.c.l.b16 %v313
  %v402 = vunpack.c.l.b16 %v314
  %v403 = vunpack.c.h.b16 %v314
  %v404 = vunpack.c.l.b16 %v315
  %v405 = vunpack.c.l.b16 %v316
  %v406 = vunpack.c.h.b16 %v316
  %v407 = vunpack.c.l.b16 %v317
  %v408 = vunpack.c.l.b16 %v318
  %v409 = vunpack.c.h.b16 %v318
  %v410 = vunpack.c.l.b16 %v319
  %v411 = vunpack.c.l.b16 %v320
  %v412 = vunpack.c.h.b16 %v320
  %v413 = vunpack.c.l.b16 %v321
  %v414 = vunpack.c.l.b16 %v322
  %v415 = vunpack.c.h.b16 %v322
  %v416 = vunpack.c.l.b16 %v323
  %v417 = vunpack.c.l.b16 %v324
  %v418 = vunpack.c.h.b16 %v324
  %v419 = vunpack.c.l.b16 %v325
  %v420 = vunpack.c.l.b16 %v326
  %v421 = vunpack.c.h.b16 %v326
  %v422 = vunpack.c.l.b16 %v327
  %v423 = vunpack.c.l.b16 %v328
  %v424 = vunpack.c.h.b16 %v328
  %v425 = vunpack.c.l.b16 %v329
  %v426 = vunpack.c.l.b16 %v330
  %v427 = vunpack.c.h.b16 %v330
  %v428 = vunpack.c.l.b16 %v331
  %v429 = vunpack.c.l.b16 %v332
  %v430 = vunpack.c.h.b16 %v332
  %v431 = vunpack.c.l.b16 %v333
  %v432 = vunpack.c.l.b16 %v334
  %v433 = vunpack.c.h.b16 %v334
  %v434 = vunpack.c.l.b16 %v335
  %v435 = vunpack.c.l.b16 %v336
  %v436 = vunpack.c.h.b16 %v336
  %v437 = vunpack.c.l.b16 %v337
  %v438 = vunpack.c.l.b16 %v338
  %v439 = vunpack.c.h.b16 %v338
  %v440 = vunpack.c.l.b16 %v339
  %v441 = vunpack.c.l.b16 %v340
  %v442 = vunpack.c.h.b16 %v340
  %v443 = vunpack.c.l.b16 %v341
  %v444 = vpack.c.b16 %v399, %v396
  %v445 = vpack.c.b16 %v400, %v397
  %v446 = vpack.c.b16 %v401, %v398
  %v447 = vpack.c.b16 %v405, %v402
  %v448 = vpack.c.b16 %v406, %v403
  %v449 = vpack.c.b16 %v407, %v404
  %v450 = vpack.c.b16 %v411, %v408
  %v451 = vpack.c.b16 %v412, %v409
  %v452 = vpack.c.b16 %v413, %v410
  %v453 = vpack.c.b16 %v417, %v414
  %v454 = vpack.c.b16 %v418, %v415
  %v455 = vpack.c.b16 %v419, %v416
  %v456 = vpack.c.b16 %v423, %v420
  %v457 = vpack.c.b16 %v424, %v421
  %v458 = vpack.c.b16 %v425, %v422
  %v459 = vpack.c.b16 %v429, %v426
  %v460 = vpack.c.b16 %v430, %v427
  %v461 = vpack.c.b16 %v431, %v428
  %v462 = vpack.c.b16 %v435, %v432
  %v463 = vpack.c.b16 %v436, %v433
  %v464 = vpack.c.b16 %v437, %v434
  %v465 = vpack.c.b16 %v441, %v438
  %v466 = vpack.c.b16 %v442, %v439
  %v467 = vpack.c.b16 %v443, %v440
  %492 = vmatprep.subr.bf16.mxu0 %v466
  %493 = vmatpush1.bf16.msra.mxu0 %v465
  %494 = vmatprep.subr.bf16.mxu0 %v463
  %495 = vmatpush1.bf16.msra.mxu0 %v462
  %496 = vmatprep.subr.bf16.mxu0 %v460
  %497 = vmatpush1.bf16.msra.mxu0 %v459
  %498 = vmatprep.subr.bf16.mxu0 %v457
  %499 = vmatpush1.bf16.msra.mxu0 %v456
  %500 = vmatprep.subr.bf16.mxu0 %v454
  %501 = vmatpush1.bf16.msra.mxu0 %v453
  %502 = vmatprep.subr.bf16.mxu0 %v451
  %503 = vmatpush1.bf16.msra.mxu0 %v450
  %504 = vmatprep.subr.bf16.mxu0 %v448
  %505 = vmatpush1.bf16.msra.mxu0 %v447
  %506 = vmatprep.subr.bf16.mxu0 %v445
  %507 = vmatpush1.bf16.msra.mxu0 %v444
  %508 = vmatprep.subr.bf16.mxu0 0
  %509 = vmatpush2.bf16.msra.mxu0 0
  %510 = vmatprep.subr.bf16.mxu0 0
  %511 = vmatpush2.bf16.msra.mxu0 0
  %512 = vmatprep.subr.bf16.mxu0 0
  %513 = vmatpush2.bf16.msra.mxu0 0
  %514 = vmatprep.subr.bf16.mxu0 0
  %515 = vmatpush2.bf16.msra.mxu0 0
  %516 = vmatprep.subr.bf16.mxu0 0
  %517 = vmatpush2.bf16.msra.mxu0 0
  %518 = vmatprep.subr.bf16.mxu0 0
  %519 = vmatpush2.bf16.msra.mxu0 0
  %520 = vmatprep.subr.bf16.mxu0 0
  %521 = vmatpush2.bf16.msra.mxu0 0
  %522 = vmatprep.subr.bf16.mxu0 0
  %523 = vmatpush2.bf16.msra.mxu0 0
  %524 = vmatprep.mubr.bf16.mxu0 0
  %525 = vmatmul.mubr.bf16.gmra.mxu0 %v347
  %v526 = vpop.f32.mrf.mxu0
  %v527 = vadd.f32 %v352, %v526
  %v528 = vpop.f32.mrf.mxu0
  %v529 = vadd.f32 %v356, %v528
  %v530 = vpop.f32.mrf.mxu0
  %v531 = vpop.f32.mrf.mxu0
  %532 = vdwg.mxu0
  %533 = vmatprep.subr.bf16.mxu0 0
  %534 = vmatpush1.bf16.msra.mxu0 %v467
  %535 = vmatprep.subr.bf16.mxu0 0
  %536 = vmatpush1.bf16.msra.mxu0 %v464
  %537 = vmatprep.subr.bf16.mxu0 0
  %538 = vmatpush1.bf16.msra.mxu0 %v461
  %539 = vmatprep.subr.bf16.mxu0 0
  %540 = vmatpush1.bf16.msra.mxu0 %v458
  %541 = vmatprep.subr.bf16.mxu0 0
  %542 = vmatpush1.bf16.msra.mxu0 %v455
  %543 = vmatprep.subr.bf16.mxu0 0
  %544 = vmatpush1.bf16.msra.mxu0 %v452
  %545 = vmatprep.subr.bf16.mxu0 0
  %546 = vmatpush1.bf16.msra.mxu0 %v449
  %547 = vmatprep.subr.bf16.mxu0 0
  %548 = vmatpush1.bf16.msra.mxu0 %v446
  %549 = vmatprep.subr.bf16.mxu0 0
  %550 = vmatpush2.bf16.msra.mxu0 0
  %551 = vmatprep.subr.bf16.mxu0 0
  %552 = vmatpush2.bf16.msra.mxu0 0
  %553 = vmatprep.subr.bf16.mxu0 0
  %554 = vmatpush2.bf16.msra.mxu0 0
  %555 = vmatprep.subr.bf16.mxu0 0
  %556 = vmatpush2.bf16.msra.mxu0 0
  %557 = vmatprep.subr.bf16.mxu0 0
  %558 = vmatpush2.bf16.msra.mxu0 0
  %559 = vmatprep.subr.bf16.mxu0 0
  %560 = vmatpush2.bf16.msra.mxu0 0
  %561 = vmatprep.subr.bf16.mxu0 0
  %562 = vmatpush2.bf16.msra.mxu0 0
  %563 = vmatprep.subr.bf16.mxu0 0
  %564 = vmatpush2.bf16.msra.mxu0 0
  %565 = vmatprep.mubr.bf16.mxu0 0
  %566 = vmatmul.mubr.bf16.gmra.mxu0 %v347
  %v567 = vpop.f32.mrf.mxu0
  %v568 = vadd.f32 %v360, %v567
  %v569 = vpop.f32.mrf.mxu0
  %v570 = vpop.f32.mrf.mxu0
  %v571 = vpop.f32.mrf.mxu0
  %572 = vdwg.mxu0
  %v573 = vadd.f32 %v344, %v527
  %v574 = vxor.u32 %v573, 2147483648
  %v575 = vmul.f32 %v574, 1.442695
  %v576 = vpow.pop %v575
  %v577 = vadd.f32 %v576, 1.0
  %v578 = vrcp.pop %v577
  %v579 = vmul.f32 1.0, %v578
  %v580 = vadd.f32 %v345, %v529
  %v581 = vxor.u32 %v580, 2147483648
  %v582 = vmul.f32 %v581, 1.442695
  %v583 = vpow.pop %v582
  %v584 = vadd.f32 %v583, 1.0
  %v585 = vrcp.pop %v584
  %v586 = vmul.f32 1.0, %v585
  %v587 = vmul.f32 %v579, %v568
  %v588 = vadd.f32 %v346, %v587
  %v589 = vtanh.pop %v588
  %v590 = vsub.f32 1.0, %v586
  %v591 = vmul.f32 %v590, %v589
  %v592 = vmul.f32 %v586, %v343
  %v593 = vadd.f32 %v591, %v592
  %s594 = scalar_lea.vmem [#allocation2], 24
  %v595 = vld [vmem:[%s594] sm:$0xff]
  %v596 = vld [vmem:[%s594 + $0x8] sm:$0xff]
  %v597 = vld [vmem:[%s594 + $0x10] sm:$0xff]
  %v598 = vpack.c.bf16 %v593, %v593
  %599 = vmatprep.subr.bf16.mxu0 %v466
  %600 = vmatpush1.bf16.msra.mxu0 %v465
  %601 = vmatprep.subr.bf16.mxu0 %v463
  %602 = vmatpush1.bf16.msra.mxu0 %v462
  %603 = vmatprep.subr.bf16.mxu0 %v460
  %604 = vmatpush1.bf16.msra.mxu0 %v459
  %605 = vmatprep.subr.bf16.mxu0 %v457
  %606 = vmatpush1.bf16.msra.mxu0 %v456
  %607 = vmatprep.subr.bf16.mxu0 %v454
  %608 = vmatpush1.bf16.msra.mxu0 %v453
  %609 = vmatprep.subr.bf16.mxu0 %v451
  %610 = vmatpush1.bf16.msra.mxu0 %v450
  %611 = vmatprep.subr.bf16.mxu0 %v448
  %612 = vmatpush1.bf16.msra.mxu0 %v447
  %613 = vmatprep.subr.bf16.mxu0 %v445
  %614 = vmatpush1.bf16.msra.mxu0 %v444
  %615 = vmatprep.subr.bf16.mxu0 0
  %616 = vmatpush2.bf16.msra.mxu0 0
  %617 = vmatprep.subr.bf16.mxu0 0
  %618 = vmatpush2.bf16.msra.mxu0 0
  %619 = vmatprep.subr.bf16.mxu0 0
  %620 = vmatpush2.bf16.msra.mxu0 0
  %621 = vmatprep.subr.bf16.mxu0 0
  %622 = vmatpush2.bf16.msra.mxu0 0
  %623 = vmatprep.subr.bf16.mxu0 0
  %624 = vmatpush2.bf16.msra.mxu0 0
  %625 = vmatprep.subr.bf16.mxu0 0
  %626 = vmatpush2.bf16.msra.mxu0 0
  %627 = vmatprep.subr.bf16.mxu0 0
  %628 = vmatpush2.bf16.msra.mxu0 0
  %629 = vmatprep.subr.bf16.mxu0 0
  %630 = vmatpush2.bf16.msra.mxu0 0
  %631 = vmatprep.mubr.bf16.mxu0 0
  %632 = vmatmul.mubr.bf16.gmra.mxu0 %v598
  %v633 = vpop.f32.mrf.mxu0
  %v634 = vadd.f32 %v352, %v633
  %v635 = vpop.f32.mrf.mxu0
  %v636 = vadd.f32 %v356, %v635
  %v637 = vpop.f32.mrf.mxu0
  %v638 = vpop.f32.mrf.mxu0
  %639 = vdwg.mxu0
  %640 = vmatprep.subr.bf16.mxu0 0
  %641 = vmatpush1.bf16.msra.mxu0 %v467
  %642 = vmatprep.subr.bf16.mxu0 0
  %643 = vmatpush1.bf16.msra.mxu0 %v464
  %644 = vmatprep.subr.bf16.mxu0 0
  %645 = vmatpush1.bf16.msra.mxu0 %v461
  %646 = vmatprep.subr.bf16.mxu0 0
  %647 = vmatpush1.bf16.msra.mxu0 %v458
  %648 = vmatprep.subr.bf16.mxu0 0
  %649 = vmatpush1.bf16.msra.mxu0 %v455
  %650 = vmatprep.subr.bf16.mxu0 0
  %651 = vmatpush1.bf16.msra.mxu0 %v452
  %652 = vmatprep.subr.bf16.mxu0 0
  %653 = vmatpush1.bf16.msra.mxu0 %v449
  %654 = vmatprep.subr.bf16.mxu0 0
  %655 = vmatpush1.bf16.msra.mxu0 %v446
  %656 = vmatprep.subr.bf16.mxu0 0
  %657 = vmatpush2.bf16.msra.mxu0 0
  %658 = vmatprep.subr.bf16.mxu0 0
  %659 = vmatpush2.bf16.msra.mxu0 0
  %660 = vmatprep.subr.bf16.mxu0 0
  %661 = vmatpush2.bf16.msra.mxu0 0
  %662 = vmatprep.subr.bf16.mxu0 0
  %663 = vmatpush2.bf16.msra.mxu0 0
  %664 = vmatprep.subr.bf16.mxu0 0
  %665 = vmatpush2.bf16.msra.mxu0 0
  %666 = vmatprep.subr.bf16.mxu0 0
  %667 = vmatpush2.bf16.msra.mxu0 0
  %668 = vmatprep.subr.bf16.mxu0 0
  %669 = vmatpush2.bf16.msra.mxu0 0
  %670 = vmatprep.subr.bf16.mxu0 0
  %671 = vmatpush2.bf16.msra.mxu0 0
  %672 = vmatprep.mubr.bf16.mxu0 0
  %673 = vmatmul.mubr.bf16.gmra.mxu0 %v598
  %v674 = vpop.f32.mrf.mxu0
  %v675 = vadd.f32 %v360, %v674
  %v676 = vpop.f32.mrf.mxu0
  %v677 = vpop.f32.mrf.mxu0
  %v678 = vpop.f32.mrf.mxu0
  %679 = vdwg.mxu0
  %v680 = vadd.f32 %v595, %v634
  %v681 = vxor.u32 %v680, 2147483648
  %v682 = vmul.f32 %v681, 1.442695
  %v683 = vpow.pop %v682
  %v684 = vadd.f32 %v683, 1.0
  %v685 = vrcp.pop %v684
  %v686 = vmul.f32 1.0, %v685
  %v687 = vadd.f32 %v596, %v636
  %v688 = vxor.u32 %v687, 2147483648
  %v689 = vmul.f32 %v688, 1.442695
  %v690 = vpow.pop %v689
  %v691 = vadd.f32 %v690, 1.0
  %v692 = vrcp.pop %v691
  %v693 = vmul.f32 1.0, %v692
  %v694 = vmul.f32 %v686, %v675
  %v695 = vadd.f32 %v597, %v694
  %v696 = vtanh.pop %v695
  %v697 = vsub.f32 1.0, %v693
  %v698 = vmul.f32 %v697, %v696
  %v699 = vmul.f32 %v693, %v593
  %v700 = vadd.f32 %v698, %v699
  %s701 = scalar_lea.vmem [#allocation2], 48
  %v702 = vld [vmem:[%s701] sm:$0xff]
  %v703 = vld [vmem:[%s701 + $0x8] sm:$0xff]
  %v704 = vld [vmem:[%s701 + $0x10] sm:$0xff]
  %v705 = vpack.c.bf16 %v700, %v700
  %706 = vmatprep.subr.bf16.mxu0 %v466
  %707 = vmatpush1.bf16.msra.mxu0 %v465
  %708 = vmatprep.subr.bf16.mxu0 %v463
  %709 = vmatpush1.bf16.msra.mxu0 %v462
  %710 = vmatprep.subr.bf16.mxu0 %v460
  %711 = vmatpush1.bf16.msra.mxu0 %v459
  %712 = vmatprep.subr.bf16.mxu0 %v457
  %713 = vmatpush1.bf16.msra.mxu0 %v456
  %714 = vmatprep.subr.bf16.mxu0 %v454
  %715 = vmatpush1.bf16.msra.mxu0 %v453
  %716 = vmatprep.subr.bf16.mxu0 %v451
  %717 = vmatpush1.bf16.msra.mxu0 %v450
  %718 = vmatprep.subr.bf16.mxu0 %v448
  %719 = vmatpush1.bf16.msra.mxu0 %v447
  %720 = vmatprep.subr.bf16.mxu0 %v445
  %721 = vmatpush1.bf16.msra.mxu0 %v444
  %722 = vmatprep.subr.bf16.mxu0 0
  %723 = vmatpush2.bf16.msra.mxu0 0
  %724 = vmatprep.subr.bf16.mxu0 0
  %725 = vmatpush2.bf16.msra.mxu0 0
  %726 = vmatprep.subr.bf16.mxu0 0
  %727 = vmatpush2.bf16.msra.mxu0 0
  %728 = vmatprep.subr.bf16.mxu0 0
  %729 = vmatpush2.bf16.msra.mxu0 0
  %730 = vmatprep.subr.bf16.mxu0 0
  %731 = vmatpush2.bf16.msra.mxu0 0
  %732 = vmatprep.subr.bf16.mxu0 0
  %733 = vmatpush2.bf16.msra.mxu0 0
  %734 = vmatprep.subr.bf16.mxu0 0
  %735 = vmatpush2.bf16.msra.mxu0 0
  %736 = vmatprep.subr.bf16.mxu0 0
  %737 = vmatpush2.bf16.msra.mxu0 0
  %738 = vmatprep.mubr.bf16.mxu0 0
  %739 = vmatmul.mubr.bf16.gmra.mxu0 %v705
  %v740 = vpop.f32.mrf.mxu0
  %v741 = vadd.f32 %v352, %v740
  %v742 = vpop.f32.mrf.mxu0
  %v743 = vadd.f32 %v356, %v742
  %v744 = vpop.f32.mrf.mxu0
  %v745 = vpop.f32.mrf.mxu0
  %746 = vdwg.mxu0
  %747 = vmatprep.subr.bf16.mxu0 0
  %748 = vmatpush1.bf16.msra.mxu0 %v467
  %749 = vmatprep.subr.bf16.mxu0 0
  %750 = vmatpush1.bf16.msra.mxu0 %v464
  %751 = vmatprep.subr.bf16.mxu0 0
  %752 = vmatpush1.bf16.msra.mxu0 %v461
  %753 = vmatprep.subr.bf16.mxu0 0
  %754 = vmatpush1.bf16.msra.mxu0 %v458
  %755 = vmatprep.subr.bf16.mxu0 0
  %756 = vmatpush1.bf16.msra.mxu0 %v455
  %757 = vmatprep.subr.bf16.mxu0 0
  %758 = vmatpush1.bf16.msra.mxu0 %v452
  %759 = vmatprep.subr.bf16.mxu0 0
  %760 = vmatpush1.bf16.msra.mxu0 %v449
  %761 = vmatprep.subr.bf16.mxu0 0
  %762 = vmatpush1.bf16.msra.mxu0 %v446
  %763 = vmatprep.subr.bf16.mxu0 0
  %764 = vmatpush2.bf16.msra.mxu0 0
  %765 = vmatprep.subr.bf16.mxu0 0
  %766 = vmatpush2.bf16.msra.mxu0 0
  %767 = vmatprep.subr.bf16.mxu0 0
  %768 = vmatpush2.bf16.msra.mxu0 0
  %769 = vmatprep.subr.bf16.mxu0 0
  %770 = vmatpush2.bf16.msra.mxu0 0
  %771 = vmatprep.subr.bf16.mxu0 0
  %772 = vmatpush2.bf16.msra.mxu0 0
  %773 = vmatprep.subr.bf16.mxu0 0
  %774 = vmatpush2.bf16.msra.mxu0 0
  %775 = vmatprep.subr.bf16.mxu0 0
  %776 = vmatpush2.bf16.msra.mxu0 0
  %777 = vmatprep.subr.bf16.mxu0 0
  %778 = vmatpush2.bf16.msra.mxu0 0
  %779 = vmatprep.mubr.bf16.mxu0 0
  %780 = vmatmul.mubr.bf16.gmra.mxu0 %v705
  %v781 = vpop.f32.mrf.mxu0
  %v782 = vadd.f32 %v360, %v781
  %v783 = vpop.f32.mrf.mxu0
  %v784 = vpop.f32.mrf.mxu0
  %v785 = vpop.f32.mrf.mxu0
  %786 = vdwg.mxu0
  %v787 = vadd.f32 %v702, %v741
  %v788 = vxor.u32 %v787, 2147483648
  %v789 = vmul.f32 %v788, 1.442695
  %v790 = vpow.pop %v789
  %v791 = vadd.f32 %v790, 1.0
  %v792 = vrcp.pop %v791
  %v793 = vmul.f32 1.0, %v792
  %v794 = vadd.f32 %v703, %v743
  %v795 = vxor.u32 %v794, 2147483648
  %v796 = vmul.f32 %v795, 1.442695
  %v797 = vpow.pop %v796
  %v798 = vadd.f32 %v797, 1.0
  %v799 = vrcp.pop %v798
  %v800 = vmul.f32 1.0, %v799
  %v801 = vmul.f32 %v793, %v782
  %v802 = vadd.f32 %v704, %v801
  %v803 = vtanh.pop %v802
  %v804 = vsub.f32 1.0, %v800
  %v805 = vmul.f32 %v804, %v803
  %v806 = vmul.f32 %v800, %v700
  %v807 = vadd.f32 %v805, %v806
  %s808 = scalar_lea.vmem [#allocation2], 72
  %v809 = vld [vmem:[%s808] sm:$0xff]
  %v810 = vld [vmem:[%s808 + $0x8] sm:$0xff]
  %v811 = vld [vmem:[%s808 + $0x10] sm:$0xff]
  %v812 = vpack.c.bf16 %v807, %v807
  %813 = vmatprep.subr.bf16.mxu0 %v466
  %814 = vmatpush1.bf16.msra.mxu0 %v465
  %815 = vmatprep.subr.bf16.mxu0 %v463
  %816 = vmatpush1.bf16.msra.mxu0 %v462
  %817 = vmatprep.subr.bf16.mxu0 %v460
  %818 = vmatpush1.bf16.msra.mxu0 %v459
  %819 = vmatprep.subr.bf16.mxu0 %v457
  %820 = vmatpush1.bf16.msra.mxu0 %v456
  %821 = vmatprep.subr.bf16.mxu0 %v454
  %822 = vmatpush1.bf16.msra.mxu0 %v453
  %823 = vmatprep.subr.bf16.mxu0 %v451
  %824 = vmatpush1.bf16.msra.mxu0 %v450
  %825 = vmatprep.subr.bf16.mxu0 %v448
  %826 = vmatpush1.bf16.msra.mxu0 %v447
  %827 = vmatprep.subr.bf16.mxu0 %v445
  %828 = vmatpush1.bf16.msra.mxu0 %v444
  %829 = vmatprep.subr.bf16.mxu0 0
  %830 = vmatpush2.bf16.msra.mxu0 0
  %831 = vmatprep.subr.bf16.mxu0 0
  %832 = vmatpush2.bf16.msra.mxu0 0
  %833 = vmatprep.subr.bf16.mxu0 0
  %834 = vmatpush2.bf16.msra.mxu0 0
  %835 = vmatprep.subr.bf16.mxu0 0
  %836 = vmatpush2.bf16.msra.mxu0 0
  %837 = vmatprep.subr.bf16.mxu0 0
  %838 = vmatpush2.bf16.msra.mxu0 0
  %839 = vmatprep.subr.bf16.mxu0 0
  %840 = vmatpush2.bf16.msra.mxu0 0
  %841 = vmatprep.subr.bf16.mxu0 0
  %842 = vmatpush2.bf16.msra.mxu0 0
  %843 = vmatprep.subr.bf16.mxu0 0
  %844 = vmatpush2.bf16.msra.mxu0 0
  %845 = vmatprep.mubr.bf16.mxu0 0
  %846 = vmatmul.mubr.bf16.gmra.mxu0 %v812
  %v847 = vpop.f32.mrf.mxu0
  %v848 = vadd.f32 %v352, %v847
  %v849 = vpop.f32.mrf.mxu0
  %v850 = vadd.f32 %v356, %v849
  %v851 = vpop.f32.mrf.mxu0
  %v852 = vpop.f32.mrf.mxu0
  %853 = vdwg.mxu0
  %854 = vmatprep.subr.bf16.mxu0 0
  %855 = vmatpush1.bf16.msra.mxu0 %v467
  %856 = vmatprep.subr.bf16.mxu0 0
  %857 = vmatpush1.bf16.msra.mxu0 %v464
  %858 = vmatprep.subr.bf16.mxu0 0
  %859 = vmatpush1.bf16.msra.mxu0 %v461
  %860 = vmatprep.subr.bf16.mxu0 0
  %861 = vmatpush1.bf16.msra.mxu0 %v458
  %862 = vmatprep.subr.bf16.mxu0 0
  %863 = vmatpush1.bf16.msra.mxu0 %v455
  %864 = vmatprep.subr.bf16.mxu0 0
  %865 = vmatpush1.bf16.msra.mxu0 %v452
  %866 = vmatprep.subr.bf16.mxu0 0
  %867 = vmatpush1.bf16.msra.mxu0 %v449
  %868 = vmatprep.subr.bf16.mxu0 0
  %869 = vmatpush1.bf16.msra.mxu0 %v446
  %870 = vmatprep.subr.bf16.mxu0 0
  %871 = vmatpush2.bf16.msra.mxu0 0
  %872 = vmatprep.subr.bf16.mxu0 0
  %873 = vmatpush2.bf16.msra.mxu0 0
  %874 = vmatprep.subr.bf16.mxu0 0
  %875 = vmatpush2.bf16.msra.mxu0 0
  %876 = vmatprep.subr.bf16.mxu0 0
  %877 = vmatpush2.bf16.msra.mxu0 0
  %878 = vmatprep.subr.bf16.mxu0 0
  %879 = vmatpush2.bf16.msra.mxu0 0
  %880 = vmatprep.subr.bf16.mxu0 0
  %881 = vmatpush2.bf16.msra.mxu0 0
  %882 = vmatprep.subr.bf16.mxu0 0
  %883 = vmatpush2.bf16.msra.mxu0 0
  %884 = vmatprep.subr.bf16.mxu0 0
  %885 = vmatpush2.bf16.msra.mxu0 0
  %886 = vmatprep.mubr.bf16.mxu0 0
  %887 = vmatmul.mubr.bf16.gmra.mxu0 %v812
  %v888 = vpop.f32.mrf.mxu0
  %v889 = vadd.f32 %v360, %v888
  %v890 = vpop.f32.mrf.mxu0
  %v891 = vpop.f32.mrf.mxu0
  %v892 = vpop.f32.mrf.mxu0
  %893 = vdwg.mxu0
  %v894 = vadd.f32 %v809, %v848
  %v895 = vxor.u32 %v894, 2147483648
  %v896 = vmul.f32 %v895, 1.442695
  %v897 = vpow.pop %v896
  %v898 = vadd.f32 %v897, 1.0
  %v899 = vrcp.pop %v898
  %v900 = vmul.f32 1.0, %v899
  %v901 = vadd.f32 %v810, %v850
  %v902 = vxor.u32 %v901, 2147483648
  %v903 = vmul.f32 %v902, 1.442695
  %v904 = vpow.pop %v903
  %v905 = vadd.f32 %v904, 1.0
  %v906 = vrcp.pop %v905
  %v907 = vmul.f32 1.0, %v906
  %v908 = vmul.f32 %v900, %v889
  %v909 = vadd.f32 %v811, %v908
  %v910 = vtanh.pop %v909
  %v911 = vsub.f32 1.0, %v907
  %v912 = vmul.f32 %v911, %v910
  %v913 = vmul.f32 %v907, %v807
  %v914 = vadd.f32 %v912, %v913
  %s915 = scalar_lea.vmem [#allocation2], 96
  %v916 = vld [vmem:[%s915] sm:$0xff]
  %v917 = vld [vmem:[%s915 + $0x8] sm:$0xff]
  %v918 = vld [vmem:[%s915 + $0x10] sm:$0xff]
  %v919 = vpack.c.bf16 %v914, %v914
  %920 = vmatprep.subr.bf16.mxu0 %v466
  %921 = vmatpush1.bf16.msra.mxu0 %v465
  %922 = vmatprep.subr.bf16.mxu0 %v463
  %923 = vmatpush1.bf16.msra.mxu0 %v462
  %924 = vmatprep.subr.bf16.mxu0 %v460
  %925 = vmatpush1.bf16.msra.mxu0 %v459
  %926 = vmatprep.subr.bf16.mxu0 %v457
  %927 = vmatpush1.bf16.msra.mxu0 %v456
  %928 = vmatprep.subr.bf16.mxu0 %v454
  %929 = vmatpush1.bf16.msra.mxu0 %v453
  %930 = vmatprep.subr.bf16.mxu0 %v451
  %931 = vmatpush1.bf16.msra.mxu0 %v450
  %932 = vmatprep.subr.bf16.mxu0 %v448
  %933 = vmatpush1.bf16.msra.mxu0 %v447
  %934 = vmatprep.subr.bf16.mxu0 %v445
  %935 = vmatpush1.bf16.msra.mxu0 %v444
  %936 = vmatprep.subr.bf16.mxu0 0
  %937 = vmatpush2.bf16.msra.mxu0 0
  %938 = vmatprep.subr.bf16.mxu0 0
  %939 = vmatpush2.bf16.msra.mxu0 0
  %940 = vmatprep.subr.bf16.mxu0 0
  %941 = vmatpush2.bf16.msra.mxu0 0
  %942 = vmatprep.subr.bf16.mxu0 0
  %943 = vmatpush2.bf16.msra.mxu0 0
  %944 = vmatprep.subr.bf16.mxu0 0
  %945 = vmatpush2.bf16.msra.mxu0 0
  %946 = vmatprep.subr.bf16.mxu0 0
  %947 = vmatpush2.bf16.msra.mxu0 0
  %948 = vmatprep.subr.bf16.mxu0 0
  %949 = vmatpush2.bf16.msra.mxu0 0
  %950 = vmatprep.subr.bf16.mxu0 0
  %951 = vmatpush2.bf16.msra.mxu0 0
  %952 = vmatprep.mubr.bf16.mxu0 0
  %953 = vmatmul.mubr.bf16.gmra.mxu0 %v919
  %v954 = vpop.f32.mrf.mxu0
  %v955 = vadd.f32 %v352, %v954
  %v956 = vpop.f32.mrf.mxu0
  %v957 = vadd.f32 %v356, %v956
  %v958 = vpop.f32.mrf.mxu0
  %v959 = vpop.f32.mrf.mxu0
  %960 = vdwg.mxu0
  %961 = vmatprep.subr.bf16.mxu0 0
  %962 = vmatpush1.bf16.msra.mxu0 %v467
  %963 = vmatprep.subr.bf16.mxu0 0
  %964 = vmatpush1.bf16.msra.mxu0 %v464
  %965 = vmatprep.subr.bf16.mxu0 0
  %966 = vmatpush1.bf16.msra.mxu0 %v461
  %967 = vmatprep.subr.bf16.mxu0 0
  %968 = vmatpush1.bf16.msra.mxu0 %v458
  %969 = vmatprep.subr.bf16.mxu0 0
  %970 = vmatpush1.bf16.msra.mxu0 %v455
  %971 = vmatprep.subr.bf16.mxu0 0
  %972 = vmatpush1.bf16.msra.mxu0 %v452
  %973 = vmatprep.subr.bf16.mxu0 0
  %974 = vmatpush1.bf16.msra.mxu0 %v449
  %975 = vmatprep.subr.bf16.mxu0 0
  %976 = vmatpush1.bf16.msra.mxu0 %v446
  %977 = vmatprep.subr.bf16.mxu0 0
  %978 = vmatpush2.bf16.msra.mxu0 0
  %979 = vmatprep.subr.bf16.mxu0 0
  %980 = vmatpush2.bf16.msra.mxu0 0
  %981 = vmatprep.subr.bf16.mxu0 0
  %982 = vmatpush2.bf16.msra.mxu0 0
  %983 = vmatprep.subr.bf16.mxu0 0
  %984 = vmatpush2.bf16.msra.mxu0 0
  %985 = vmatprep.subr.bf16.mxu0 0
  %986 = vmatpush2.bf16.msra.mxu0 0
  %987 = vmatprep.subr.bf16.mxu0 0
  %988 = vmatpush2.bf16.msra.mxu0 0
  %989 = vmatprep.subr.bf16.mxu0 0
  %990 = vmatpush2.bf16.msra.mxu0 0
  %991 = vmatprep.subr.bf16.mxu0 0
  %992 = vmatpush2.bf16.msra.mxu0 0
  %993 = vmatprep.mubr.bf16.mxu0 0
  %994 = vmatmul.mubr.bf16.gmra.mxu0 %v919
  %v995 = vpop.f32.mrf.mxu0
  %v996 = vadd.f32 %v360, %v995
  %v997 = vpop.f32.mrf.mxu0
  %v998 = vpop.f32.mrf.mxu0
  %v999 = vpop.f32.mrf.mxu0
  %1000 = vdwg.mxu0
  %v1001 = vadd.f32 %v916, %v955
  %v1002 = vxor.u32 %v1001, 2147483648
  %v1003 = vmul.f32 %v1002, 1.442695
  %v1004 = vpow.pop %v1003
  %v1005 = vadd.f32 %v1004, 1.0
  %v1006 = vrcp.pop %v1005
  %v1007 = vmul.f32 1.0, %v1006
  %v1008 = vadd.f32 %v917, %v957
  %v1009 = vxor.u32 %v1008, 2147483648
  %v1010 = vmul.f32 %v1009, 1.442695
  %v1011 = vpow.pop %v1010
  %v1012 = vadd.f32 %v1011, 1.0
  %v1013 = vrcp.pop %v1012
  %v1014 = vmul.f32 1.0, %v1013
  %v1015 = vmul.f32 %v1007, %v996
  %v1016 = vadd.f32 %v918, %v1015
  %v1017 = vtanh.pop %v1016
  %v1018 = vsub.f32 1.0, %v1014
  %v1019 = vmul.f32 %v1018, %v1017
  %v1020 = vmul.f32 %v1014, %v914
  %v1021 = vadd.f32 %v1019, %v1020
  %s1022 = scalar_lea.vmem [#allocation2], 120
  %v1023 = vld [vmem:[%s1022] sm:$0xff]
  %v1024 = vld [vmem:[%s1022 + $0x8] sm:$0xff]
  %v1025 = vld [vmem:[%s1022 + $0x10] sm:$0xff]
  %v1026 = vpack.c.bf16 %v1021, %v1021
  %1027 = vmatprep.subr.bf16.mxu0 %v466
  %1028 = vmatpush1.bf16.msra.mxu0 %v465
  %1029 = vmatprep.subr.bf16.mxu0 %v463
  %1030 = vmatpush1.bf16.msra.mxu0 %v462
  %1031 = vmatprep.subr.bf16.mxu0 %v460
  %1032 = vmatpush1.bf16.msra.mxu0 %v459
  %1033 = vmatprep.subr.bf16.mxu0 %v457
  %1034 = vmatpush1.bf16.msra.mxu0 %v456
  %1035 = vmatprep.subr.bf16.mxu0 %v454
  %1036 = vmatpush1.bf16.msra.mxu0 %v453
  %1037 = vmatprep.subr.bf16.mxu0 %v451
  %1038 = vmatpush1.bf16.msra.mxu0 %v450
  %1039 = vmatprep.subr.bf16.mxu0 %v448
  %1040 = vmatpush1.bf16.msra.mxu0 %v447
  %1041 = vmatprep.subr.bf16.mxu0 %v445
  %1042 = vmatpush1.bf16.msra.mxu0 %v444
  %1043 = vmatprep.subr.bf16.mxu0 0
  %1044 = vmatpush2.bf16.msra.mxu0 0
  %1045 = vmatprep.subr.bf16.mxu0 0
  %1046 = vmatpush2.bf16.msra.mxu0 0
  %1047 = vmatprep.subr.bf16.mxu0 0
  %1048 = vmatpush2.bf16.msra.mxu0 0
  %1049 = vmatprep.subr.bf16.mxu0 0
  %1050 = vmatpush2.bf16.msra.mxu0 0
  %1051 = vmatprep.subr.bf16.mxu0 0
  %1052 = vmatpush2.bf16.msra.mxu0 0
  %1053 = vmatprep.subr.bf16.mxu0 0
  %1054 = vmatpush2.bf16.msra.mxu0 0
  %1055 = vmatprep.subr.bf16.mxu0 0
  %1056 = vmatpush2.bf16.msra.mxu0 0
  %1057 = vmatprep.subr.bf16.mxu0 0
  %1058 = vmatpush2.bf16.msra.mxu0 0
  %1059 = vmatprep.mubr.bf16.mxu0 0
  %1060 = vmatmul.mubr.bf16.gmra.mxu0 %v1026
  %v1061 = vpop.f32.mrf.mxu0
  %v1062 = vadd.f32 %v352, %v1061
  %v1063 = vpop.f32.mrf.mxu0
  %v1064 = vadd.f32 %v356, %v1063
  %v1065 = vpop.f32.mrf.mxu0
  %v1066 = vpop.f32.mrf.mxu0
  %1067 = vdwg.mxu0
  %1068 = vmatprep.subr.bf16.mxu0 0
  %1069 = vmatpush1.bf16.msra.mxu0 %v467
  %1070 = vmatprep.subr.bf16.mxu0 0
  %1071 = vmatpush1.bf16.msra.mxu0 %v464
  %1072 = vmatprep.subr.bf16.mxu0 0
  %1073 = vmatpush1.bf16.msra.mxu0 %v461
  %1074 = vmatprep.subr.bf16.mxu0 0
  %1075 = vmatpush1.bf16.msra.mxu0 %v458
  %1076 = vmatprep.subr.bf16.mxu0 0
  %1077 = vmatpush1.bf16.msra.mxu0 %v455
  %1078 = vmatprep.subr.bf16.mxu0 0
  %1079 = vmatpush1.bf16.msra.mxu0 %v452
  %1080 = vmatprep.subr.bf16.mxu0 0
  %1081 = vmatpush1.bf16.msra.mxu0 %v449
  %1082 = vmatprep.subr.bf16.mxu0 0
  %1083 = vmatpush1.bf16.msra.mxu0 %v446
  %1084 = vmatprep.subr.bf16.mxu0 0
  %1085 = vmatpush2.bf16.msra.mxu0 0
  %1086 = vmatprep.subr.bf16.mxu0 0
  %1087 = vmatpush2.bf16.msra.mxu0 0
  %1088 = vmatprep.subr.bf16.mxu0 0
  %1089 = vmatpush2.bf16.msra.mxu0 0
  %1090 = vmatprep.subr.bf16.mxu0 0
  %1091 = vmatpush2.bf16.msra.mxu0 0
  %1092 = vmatprep.subr.bf16.mxu0 0
  %1093 = vmatpush2.bf16.msra.mxu0 0
  %1094 = vmatprep.subr.bf16.mxu0 0
  %1095 = vmatpush2.bf16.msra.mxu0 0
  %1096 = vmatprep.subr.bf16.mxu0 0
  %1097 = vmatpush2.bf16.msra.mxu0 0
  %1098 = vmatprep.subr.bf16.mxu0 0
  %1099 = vmatpush2.bf16.msra.mxu0 0
  %1100 = vmatprep.mubr.bf16.mxu0 0
  %1101 = vmatmul.mubr.bf16.gmra.mxu0 %v1026
  %v1102 = vpop.f32.mrf.mxu0
  %v1103 = vadd.f32 %v360, %v1102
  %v1104 = vpop.f32.mrf.mxu0
  %v1105 = vpop.f32.mrf.mxu0
  %v1106 = vpop.f32.mrf.mxu0
  %1107 = vdwg.mxu0
  %v1108 = vadd.f32 %v1023, %v1062
  %v1109 = vxor.u32 %v1108, 2147483648
  %v1110 = vmul.f32 %v1109, 1.442695
  %v1111 = vpow.pop %v1110
  %v1112 = vadd.f32 %v1111, 1.0
  %v1113 = vrcp.pop %v1112
  %v1114 = vmul.f32 1.0, %v1113
  %v1115 = vadd.f32 %v1024, %v1064
  %v1116 = vxor.u32 %v1115, 2147483648
  %v1117 = vmul.f32 %v1116, 1.442695
  %v1118 = vpow.pop %v1117
  %v1119 = vadd.f32 %v1118, 1.0
  %v1120 = vrcp.pop %v1119
  %v1121 = vmul.f32 1.0, %v1120
  %v1122 = vmul.f32 %v1114, %v1103
  %v1123 = vadd.f32 %v1025, %v1122
  %v1124 = vtanh.pop %v1123
  %v1125 = vsub.f32 1.0, %v1121
  %v1126 = vmul.f32 %v1125, %v1124
  %v1127 = vmul.f32 %v1121, %v1021
  %v1128 = vadd.f32 %v1126, %v1127
  %s1129 = scalar_lea.vmem [#allocation2], 144
  %v1130 = vld [vmem:[%s1129] sm:$0xff]
  %v1131 = vld [vmem:[%s1129 + $0x8] sm:$0xff]
  %v1132 = vld [vmem:[%s1129 + $0x10] sm:$0xff]
  %v1133 = vpack.c.bf16 %v1128, %v1128
  %1134 = vmatprep.subr.bf16.mxu0 %v466
  %1135 = vmatpush1.bf16.msra.mxu0 %v465
  %1136 = vmatprep.subr.bf16.mxu0 %v463
  %1137 = vmatpush1.bf16.msra.mxu0 %v462
  %1138 = vmatprep.subr.bf16.mxu0 %v460
  %1139 = vmatpush1.bf16.msra.mxu0 %v459
  %1140 = vmatprep.subr.bf16.mxu0 %v457
  %1141 = vmatpush1.bf16.msra.mxu0 %v456
  %1142 = vmatprep.subr.bf16.mxu0 %v454
  %1143 = vmatpush1.bf16.msra.mxu0 %v453
  %1144 = vmatprep.subr.bf16.mxu0 %v451
  %1145 = vmatpush1.bf16.msra.mxu0 %v450
  %1146 = vmatprep.subr.bf16.mxu0 %v448
  %1147 = vmatpush1.bf16.msra.mxu0 %v447
  %1148 = vmatprep.subr.bf16.mxu0 %v445
  %1149 = vmatpush1.bf16.msra.mxu0 %v444
  %1150 = vmatprep.subr.bf16.mxu0 0
  %1151 = vmatpush2.bf16.msra.mxu0 0
  %1152 = vmatprep.subr.bf16.mxu0 0
  %1153 = vmatpush2.bf16.msra.mxu0 0
  %1154 = vmatprep.subr.bf16.mxu0 0
  %1155 = vmatpush2.bf16.msra.mxu0 0
  %1156 = vmatprep.subr.bf16.mxu0 0
  %1157 = vmatpush2.bf16.msra.mxu0 0
  %1158 = vmatprep.subr.bf16.mxu0 0
  %1159 = vmatpush2.bf16.msra.mxu0 0
  %1160 = vmatprep.subr.bf16.mxu0 0
  %1161 = vmatpush2.bf16.msra.mxu0 0
  %1162 = vmatprep.subr.bf16.mxu0 0
  %1163 = vmatpush2.bf16.msra.mxu0 0
  %1164 = vmatprep.subr.bf16.mxu0 0
  %1165 = vmatpush2.bf16.msra.mxu0 0
  %1166 = vmatprep.mubr.bf16.mxu0 0
  %1167 = vmatmul.mubr.bf16.gmra.mxu0 %v1133
  %v1168 = vpop.f32.mrf.mxu0
  %v1169 = vadd.f32 %v352, %v1168
  %v1170 = vpop.f32.mrf.mxu0
  %v1171 = vadd.f32 %v356, %v1170
  %v1172 = vpop.f32.mrf.mxu0
  %v1173 = vpop.f32.mrf.mxu0
  %1174 = vdwg.mxu0
  %1175 = vmatprep.subr.bf16.mxu0 0
  %1176 = vmatpush1.bf16.msra.mxu0 %v467
  %1177 = vmatprep.subr.bf16.mxu0 0
  %1178 = vmatpush1.bf16.msra.mxu0 %v464
  %1179 = vmatprep.subr.bf16.mxu0 0
  %1180 = vmatpush1.bf16.msra.mxu0 %v461
  %1181 = vmatprep.subr.bf16.mxu0 0
  %1182 = vmatpush1.bf16.msra.mxu0 %v458
  %1183 = vmatprep.subr.bf16.mxu0 0
  %1184 = vmatpush1.bf16.msra.mxu0 %v455
  %1185 = vmatprep.subr.bf16.mxu0 0
  %1186 = vmatpush1.bf16.msra.mxu0 %v452
  %1187 = vmatprep.subr.bf16.mxu0 0
  %1188 = vmatpush1.bf16.msra.mxu0 %v449
  %1189 = vmatprep.subr.bf16.mxu0 0
  %1190 = vmatpush1.bf16.msra.mxu0 %v446
  %1191 = vmatprep.subr.bf16.mxu0 0
  %1192 = vmatpush2.bf16.msra.mxu0 0
  %1193 = vmatprep.subr.bf16.mxu0 0
  %1194 = vmatpush2.bf16.msra.mxu0 0
  %1195 = vmatprep.subr.bf16.mxu0 0
  %1196 = vmatpush2.bf16.msra.mxu0 0
  %1197 = vmatprep.subr.bf16.mxu0 0
  %1198 = vmatpush2.bf16.msra.mxu0 0
  %1199 = vmatprep.subr.bf16.mxu0 0
  %1200 = vmatpush2.bf16.msra.mxu0 0
  %1201 = vmatprep.subr.bf16.mxu0 0
  %1202 = vmatpush2.bf16.msra.mxu0 0
  %1203 = vmatprep.subr.bf16.mxu0 0
  %1204 = vmatpush2.bf16.msra.mxu0 0
  %1205 = vmatprep.subr.bf16.mxu0 0
  %1206 = vmatpush2.bf16.msra.mxu0 0
  %1207 = vmatprep.mubr.bf16.mxu0 0
  %1208 = vmatmul.mubr.bf16.gmra.mxu0 %v1133
  %v1209 = vpop.f32.mrf.mxu0
  %v1210 = vadd.f32 %v360, %v1209
  %v1211 = vpop.f32.mrf.mxu0
  %v1212 = vpop.f32.mrf.mxu0
  %v1213 = vpop.f32.mrf.mxu0
  %1214 = vdwg.mxu0
  %v1215 = vadd.f32 %v1130, %v1169
  %v1216 = vxor.u32 %v1215, 2147483648
  %v1217 = vmul.f32 %v1216, 1.442695
  %v1218 = vpow.pop %v1217
  %v1219 = vadd.f32 %v1218, 1.0
  %v1220 = vrcp.pop %v1219
  %v1221 = vmul.f32 1.0, %v1220
  %v1222 = vadd.f32 %v1131, %v1171
  %v1223 = vxor.u32 %v1222, 2147483648
  %v1224 = vmul.f32 %v1223, 1.442695
  %v1225 = vpow.pop %v1224
  %v1226 = vadd.f32 %v1225, 1.0
  %v1227 = vrcp.pop %v1226
  %v1228 = vmul.f32 1.0, %v1227
  %v1229 = vmul.f32 %v1221, %v1210
  %v1230 = vadd.f32 %v1132, %v1229
  %v1231 = vtanh.pop %v1230
  %v1232 = vsub.f32 1.0, %v1228
  %v1233 = vmul.f32 %v1232, %v1231
  %v1234 = vmul.f32 %v1228, %v1128
  %v1235 = vadd.f32 %v1233, %v1234
  %s1236 = scalar_lea.vmem [#allocation2], 168
  %v1237 = vld [vmem:[%s1236] sm:$0xff]
  %v1238 = vld [vmem:[%s1236 + $0x8] sm:$0xff]
  %v1239 = vld [vmem:[%s1236 + $0x10] sm:$0xff]
  %v1240 = vpack.c.bf16 %v1235, %v1235
  %1241 = vmatprep.subr.bf16.mxu0 %v466
  %1242 = vmatpush1.bf16.msra.mxu0 %v465
  %1243 = vmatprep.subr.bf16.mxu0 %v463
  %1244 = vmatpush1.bf16.msra.mxu0 %v462
  %1245 = vmatprep.subr.bf16.mxu0 %v460
  %1246 = vmatpush1.bf16.msra.mxu0 %v459
  %1247 = vmatprep.subr.bf16.mxu0 %v457
  %1248 = vmatpush1.bf16.msra.mxu0 %v456
  %1249 = vmatprep.subr.bf16.mxu0 %v454
  %1250 = vmatpush1.bf16.msra.mxu0 %v453
  %1251 = vmatprep.subr.bf16.mxu0 %v451
  %1252 = vmatpush1.bf16.msra.mxu0 %v450
  %1253 = vmatprep.subr.bf16.mxu0 %v448
  %1254 = vmatpush1.bf16.msra.mxu0 %v447
  %1255 = vmatprep.subr.bf16.mxu0 %v445
  %1256 = vmatpush1.bf16.msra.mxu0 %v444
  %1257 = vmatprep.subr.bf16.mxu0 0
  %1258 = vmatpush2.bf16.msra.mxu0 0
  %1259 = vmatprep.subr.bf16.mxu0 0
  %1260 = vmatpush2.bf16.msra.mxu0 0
  %1261 = vmatprep.subr.bf16.mxu0 0
  %1262 = vmatpush2.bf16.msra.mxu0 0
  %1263 = vmatprep.subr.bf16.mxu0 0
  %1264 = vmatpush2.bf16.msra.mxu0 0
  %1265 = vmatprep.subr.bf16.mxu0 0
  %1266 = vmatpush2.bf16.msra.mxu0 0
  %1267 = vmatprep.subr.bf16.mxu0 0
  %1268 = vmatpush2.bf16.msra.mxu0 0
  %1269 = vmatprep.subr.bf16.mxu0 0
  %1270 = vmatpush2.bf16.msra.mxu0 0
  %1271 = vmatprep.subr.bf16.mxu0 0
  %1272 = vmatpush2.bf16.msra.mxu0 0
  %1273 = vmatprep.mubr.bf16.mxu0 0
  %1274 = vmatmul.mubr.bf16.gmra.mxu0 %v1240
  %v1275 = vpop.f32.mrf.mxu0
  %v1276 = vadd.f32 %v352, %v1275
  %v1277 = vpop.f32.mrf.mxu0
  %v1278 = vadd.f32 %v356, %v1277
  %v1279 = vpop.f32.mrf.mxu0
  %v1280 = vpop.f32.mrf.mxu0
  %1281 = vdwg.mxu0
  %1282 = vmatprep.subr.bf16.mxu0 0
  %1283 = vmatpush1.bf16.msra.mxu0 %v467
  %1284 = vmatprep.subr.bf16.mxu0 0
  %1285 = vmatpush1.bf16.msra.mxu0 %v464
  %1286 = vmatprep.subr.bf16.mxu0 0
  %1287 = vmatpush1.bf16.msra.mxu0 %v461
  %1288 = vmatprep.subr.bf16.mxu0 0
  %1289 = vmatpush1.bf16.msra.mxu0 %v458
  %1290 = vmatprep.subr.bf16.mxu0 0
  %1291 = vmatpush1.bf16.msra.mxu0 %v455
  %1292 = vmatprep.subr.bf16.mxu0 0
  %1293 = vmatpush1.bf16.msra.mxu0 %v452
  %1294 = vmatprep.subr.bf16.mxu0 0
  %1295 = vmatpush1.bf16.msra.mxu0 %v449
  %1296 = vmatprep.subr.bf16.mxu0 0
  %1297 = vmatpush1.bf16.msra.mxu0 %v446
  %1298 = vmatprep.subr.bf16.mxu0 0
  %1299 = vmatpush2.bf16.msra.mxu0 0
  %1300 = vmatprep.subr.bf16.mxu0 0
  %1301 = vmatpush2.bf16.msra.mxu0 0
  %1302 = vmatprep.subr.bf16.mxu0 0
  %1303 = vmatpush2.bf16.msra.mxu0 0
  %1304 = vmatprep.subr.bf16.mxu0 0
  %1305 = vmatpush2.bf16.msra.mxu0 0
  %1306 = vmatprep.subr.bf16.mxu0 0
  %1307 = vmatpush2.bf16.msra.mxu0 0
  %1308 = vmatprep.subr.bf16.mxu0 0
  %1309 = vmatpush2.bf16.msra.mxu0 0
  %1310 = vmatprep.subr.bf16.mxu0 0
  %1311 = vmatpush2.bf16.msra.mxu0 0
  %1312 = vmatprep.subr.bf16.mxu0 0
  %1313 = vmatpush2.bf16.msra.mxu0 0
  %1314 = vmatprep.mubr.bf16.mxu0 0
  %1315 = vmatmul.mubr.bf16.gmra.mxu0 %v1240
  %v1316 = vpop.f32.mrf.mxu0
  %v1317 = vadd.f32 %v360, %v1316
  %v1318 = vpop.f32.mrf.mxu0
  %v1319 = vpop.f32.mrf.mxu0
  %v1320 = vpop.f32.mrf.mxu0
  %1321 = vdwg.mxu0
  %v1322 = vadd.f32 %v1237, %v1276
  %v1323 = vxor.u32 %v1322, 2147483648
  %v1324 = vmul.f32 %v1323, 1.442695
  %v1325 = vpow.pop %v1324
  %v1326 = vadd.f32 %v1325, 1.0
  %v1327 = vrcp.pop %v1326
  %v1328 = vmul.f32 1.0, %v1327
  %v1329 = vadd.f32 %v1238, %v1278
  %v1330 = vxor.u32 %v1329, 2147483648
  %v1331 = vmul.f32 %v1330, 1.442695
  %v1332 = vpow.pop %v1331
  %v1333 = vadd.f32 %v1332, 1.0
  %v1334 = vrcp.pop %v1333
  %v1335 = vmul.f32 1.0, %v1334
  %v1336 = vmul.f32 %v1328, %v1317
  %v1337 = vadd.f32 %v1239, %v1336
  %v1338 = vtanh.pop %v1337
  %v1339 = vsub.f32 1.0, %v1335
  %v1340 = vmul.f32 %v1339, %v1338
  %v1341 = vmul.f32 %v1335, %v1235
  %v1342 = vadd.f32 %v1340, %v1341
  %1343 = vst [vmem:[%s5] sm:$0xff] %v1342
  // Predicated region
  $region26: #{encoder_decoder_forward.3} parent=0 // pred_check
    _
  $region27: #{encoder_decoder_forward.3} parent=0 // pred_check_branch
    %1345 = sbr.rel (0) target = $region29
  $region28: #{encoder_decoder_forward.3} parent=0 // pred_region
    _
  $region29: #{encoder_decoder_forward.3} parent=0 // pred_fallthru
    _
  // Predicated region
  $region30: #{encoder_decoder_forward.3} parent=0 // pred_check
    _
  $region31: #{encoder_decoder_forward.3} parent=0 // pred_check_branch
    %1347 = sbr.rel (0) target = $region33
  $region32: #{encoder_decoder_forward.3} parent=0 // pred_region
    _
  $region33: #{encoder_decoder_forward.3} parent=0 // pred_fallthru
    _

// kernel: encoder_decoder_forward.4
$region0: #{encoder_decoder_forward.4}
  #allocation0 [shape = 'u32[]', space=smem, size = 0x4, offset = 0x4, fixed_abs, tag = 'smem constant byte address 0x4 - core index']
  #allocation1 [shape = 'u32[144,128]{1,0:T(1,128)}', space=vmem, size = 0x12000, scoped, tag = 'internal scratch']
  #allocation2 [shape = 'f32[8,128]{1,0:T(8,128)}', space=vmem, size = 0x1000, scoped, tag = 'scratch operand']
  #allocation3 [shape = 'f32[8,384]{1,0:T(8,128)}', space=vmem, size = 0x3000, scoped, tag = 'scratch operand']
  #allocation4 [shape = 'f32[8,8,384]{2,1,0:T(8,128)}', space=vmem, size = 0x18000, scoped, tag = 'scratch operand']
  %s0 = inlined_call_operand.vmem [shape: bf16[8,8,32], index: 0, kind: input, shape index: {}]
  %s1 = inlined_call_operand.vmem [shape: f32[8,128], index: 1, kind: input, shape index: {}]
  %s2 = inlined_call_operand.vmem [shape: bf16[32,384], index: 2, kind: input, shape index: {}]
  %s3 = inlined_call_operand.vmem [shape: bf16[128,384], index: 3, kind: input, shape index: {}]
  %s4 = inlined_call_operand.vmem [shape: bf16[128,384], index: 4, kind: input, shape index: {}]
  %s5 = inlined_call_operand.vmem [shape: f32[1,384], index: 5, kind: input, shape index: {}]
  %s6 = inlined_call_operand.vmem [shape: f32[1,384], index: 6, kind: input, shape index: {}]
  %s7 = inlined_call_operand.vmem [shape: bf16[8,8,128], index: 7, kind: output, shape index: {}]
  %s8 = sld [smem:[#allocation0]]
  $region42: #{encoder_decoder_forward.4} parent=0
    _
  %s10 = ssub.s32 1, %s8
  %s11 = scalar_select 0, %s10, %s8
  // Predicated region
  $region2: #{encoder_decoder_forward.4} parent=0 // pred_check
    _
  $region3: #{encoder_decoder_forward.4} parent=0 // pred_check_branch
    %13 = sbr.rel (0) target = $region5
  $region4: #{encoder_decoder_forward.4} parent=0 // pred_region
    _
  $region5: #{encoder_decoder_forward.4} parent=0 // pred_fallthru
    _
  // Predicated region
  $region6: #{encoder_decoder_forward.4} parent=0 // pred_check
    _
  $region7: #{encoder_decoder_forward.4} parent=0 // pred_check_branch
    %15 = sbr.rel (0) target = $region9
  $region8: #{encoder_decoder_forward.4} parent=0 // pred_region
    _
  $region9: #{encoder_decoder_forward.4} parent=0 // pred_fallthru
    _
  // Predicated region
  $region10: #{encoder_decoder_forward.4} parent=0 // pred_check
    _
  $region11: #{encoder_decoder_forward.4} parent=0 // pred_check_branch
    %17 = sbr.rel (0) target = $region13
  $region12: #{encoder_decoder_forward.4} parent=0 // pred_region
    _
  $region13: #{encoder_decoder_forward.4} parent=0 // pred_fallthru
    _
  // Predicated region
  $region14: #{encoder_decoder_forward.4} parent=0 // pred_check
    _
  $region15: #{encoder_decoder_forward.4} parent=0 // pred_check_branch
    %19 = sbr.rel (0) target = $region17
  $region16: #{encoder_decoder_forward.4} parent=0 // pred_region
    _
  $region17: #{encoder_decoder_forward.4} parent=0 // pred_fallthru
    _
  // Predicated region
  $region18: #{encoder_decoder_forward.4} parent=0 // pred_check
    _
  $region19: #{encoder_decoder_forward.4} parent=0 // pred_check_branch
    %21 = sbr.rel (0) target = $region21
  $region20: #{encoder_decoder_forward.4} parent=0 // pred_region
    _
  $region21: #{encoder_decoder_forward.4} parent=0 // pred_fallthru
    _
  // Predicated region
  $region22: #{encoder_decoder_forward.4} parent=0 // pred_check
    _
  $region23: #{encoder_decoder_forward.4} parent=0 // pred_check_branch
    %23 = sbr.rel (0) target = $region25
  $region24: #{encoder_decoder_forward.4} parent=0 // pred_region
    _
  $region25: #{encoder_decoder_forward.4} parent=0 // pred_fallthru
    _
  // Predicated region
  $region26: #{encoder_decoder_forward.4} parent=0 // pred_check
    _
  $region27: #{encoder_decoder_forward.4} parent=0 // pred_check_branch
    %25 = sbr.rel (0) target = $region29
  $region28: #{encoder_decoder_forward.4} parent=0 // pred_region
    _
  $region29: #{encoder_decoder_forward.4} parent=0 // pred_fallthru
    _
  %p27 = scmp.eq.s32.totalorder 0, 0
  // Predicated region
  $region30: #{encoder_decoder_forward.4} parent=0 // pred_check
    %p28 = pneg %p27
  $region31: #{encoder_decoder_forward.4} parent=0 // pred_check_branch
    %30 = sbr.rel (%p28) target = $region33
  $region32: #{encoder_decoder_forward.4} parent=0 // pred_region
    %v31 = vld [vmem:[%s1] sm:$0xff]
    %32 = vst [vmem:[#allocation2] sm:$0xff] %v31
    %v33 = vpack.c.bf16 %v31, %v31
    %v34 = vld [vmem:[%s4] sm:$0xff]
    %v35 = vld [vmem:[%s4 + $0x8] sm:$0xf]
    %v36 = vld [vmem:[%s4 + $0xc] sm:$0xff]
    %v37 = vld [vmem:[%s4 + $0x14] sm:$0xf]
    %v38 = vld [vmem:[%s4 + $0x18] sm:$0xff]
    %v39 = vld [vmem:[%s4 + $0x20] sm:$0xf]
    %v40 = vld [vmem:[%s4 + $0x24] sm:$0xff]
    %v41 = vld [vmem:[%s4 + $0x2c] sm:$0xf]
    %v42 = vld [vmem:[%s4 + $0x30] sm:$0xff]
    %v43 = vld [vmem:[%s4 + $0x38] sm:$0xf]
    %v44 = vld [vmem:[%s4 + $0x3c] sm:$0xff]
    %v45 = vld [vmem:[%s4 + $0x44] sm:$0xf]
    %v46 = vld [vmem:[%s4 + $0x48] sm:$0xff]
    %v47 = vld [vmem:[%s4 + $0x50] sm:$0xf]
    %v48 = vld [vmem:[%s4 + $0x54] sm:$0xff]
    %v49 = vld [vmem:[%s4 + $0x5c] sm:$0xf]
    %v50 = vld [vmem:[%s4 + $0x60] sm:$0xff]
    %v51 = vld [vmem:[%s4 + $0x68] sm:$0xf]
    %v52 = vld [vmem:[%s4 + $0x6c] sm:$0xff]
    %v53 = vld [vmem:[%s4 + $0x74] sm:$0xf]
    %v54 = vld [vmem:[%s4 + $0x78] sm:$0xff]
    %v55 = vld [vmem:[%s4 + $0x80] sm:$0xf]
    %v56 = vld [vmem:[%s4 + $0x84] sm:$0xff]
    %v57 = vld [vmem:[%s4 + $0x8c] sm:$0xf]
    %v58 = vld [vmem:[%s4 + $0x90] sm:$0xff]
    %v59 = vld [vmem:[%s4 + $0x98] sm:$0xf]
    %v60 = vld [vmem:[%s4 + $0x9c] sm:$0xff]
    %v61 = vld [vmem:[%s4 + $0xa4] sm:$0xf]
    %v62 = vld [vmem:[%s4 + $0xa8] sm:$0xff]
    %v63 = vld [vmem:[%s4 + $0xb0] sm:$0xf]
    %v64 = vld [vmem:[%s4 + $0xb4] sm:$0xff]
    %v65 = vld [vmem:[%s4 + $0xbc] sm:$0xf]
    %v98 = vunpack.c.l.b16 %v34
    %v99 = vunpack.c.h.b16 %v34
    %v100 = vunpack.c.l.b16 %v35
    %v101 = vunpack.c.l.b16 %v36
    %v102 = vunpack.c.h.b16 %v36
    %v103 = vunpack.c.l.b16 %v37
    %v104 = vunpack.c.l.b16 %v38
    %v105 = vunpack.c.h.b16 %v38
    %v106 = vunpack.c.l.b16 %v39
    %v107 = vunpack.c.l.b16 %v40
    %v108 = vunpack.c.h.b16 %v40
    %v109 = vunpack.c.l.b16 %v41
    %v110 = vunpack.c.l.b16 %v42
    %v111 = vunpack.c.h.b16 %v42
    %v112 = vunpack.c.l.b16 %v43
    %v113 = vunpack.c.l.b16 %v44
    %v114 = vunpack.c.h.b16 %v44
    %v115 = vunpack.c.l.b16 %v45
    %v116 = vunpack.c.l.b16 %v46
    %v117 = vunpack.c.h.b16 %v46
    %v118 = vunpack.c.l.b16 %v47
    %v119 = vunpack.c.l.b16 %v48
    %v120 = vunpack.c.h.b16 %v48
    %v121 = vunpack.c.l.b16 %v49
    %v122 = vunpack.c.l.b16 %v50
    %v123 = vunpack.c.h.b16 %v50
    %v124 = vunpack.c.l.b16 %v51
    %v125 = vunpack.c.l.b16 %v52
    %v126 = vunpack.c.h.b16 %v52
    %v127 = vunpack.c.l.b16 %v53
    %v128 = vunpack.c.l.b16 %v54
    %v129 = vunpack.c.h.b16 %v54
    %v130 = vunpack.c.l.b16 %v55
    %v131 = vunpack.c.l.b16 %v56
    %v132 = vunpack.c.h.b16 %v56
    %v133 = vunpack.c.l.b16 %v57
    %v134 = vunpack.c.l.b16 %v58
    %v135 = vunpack.c.h.b16 %v58
    %v136 = vunpack.c.l.b16 %v59
    %v137 = vunpack.c.l.b16 %v60
    %v138 = vunpack.c.h.b16 %v60
    %v139 = vunpack.c.l.b16 %v61
    %v140 = vunpack.c.l.b16 %v62
    %v141 = vunpack.c.h.b16 %v62
    %v142 = vunpack.c.l.b16 %v63
    %v143 = vunpack.c.l.b16 %v64
    %v144 = vunpack.c.h.b16 %v64
    %v145 = vunpack.c.l.b16 %v65
    %v146 = vpack.c.b16 %v101, %v98
    %v147 = vpack.c.b16 %v102, %v99
    %v148 = vpack.c.b16 %v103, %v100
    %v149 = vpack.c.b16 %v107, %v104
    %v150 = vpack.c.b16 %v108, %v105
    %v151 = vpack.c.b16 %v109, %v106
    %v152 = vpack.c.b16 %v113, %v110
    %v153 = vpack.c.b16 %v114, %v111
    %v154 = vpack.c.b16 %v115, %v112
    %v155 = vpack.c.b16 %v119, %v116
    %v156 = vpack.c.b16 %v120, %v117
    %v157 = vpack.c.b16 %v121, %v118
    %v158 = vpack.c.b16 %v125, %v122
    %v159 = vpack.c.b16 %v126, %v123
    %v160 = vpack.c.b16 %v127, %v124
    %v161 = vpack.c.b16 %v131, %v128
    %v162 = vpack.c.b16 %v132, %v129
    %v163 = vpack.c.b16 %v133, %v130
    %v164 = vpack.c.b16 %v137, %v134
    %v165 = vpack.c.b16 %v138, %v135
    %v166 = vpack.c.b16 %v139, %v136
    %v167 = vpack.c.b16 %v143, %v140
    %v168 = vpack.c.b16 %v144, %v141
    %v169 = vpack.c.b16 %v145, %v142
    %194 = vmatprep.subr.bf16.mxu0 %v168
    %195 = vmatpush1.bf16.msra.mxu0 %v167
    %196 = vmatprep.subr.bf16.mxu0 %v165
    %197 = vmatpush1.bf16.msra.mxu0 %v164
    %198 = vmatprep.subr.bf16.mxu0 %v162
    %199 = vmatpush1.bf16.msra.mxu0 %v161
    %200 = vmatprep.subr.bf16.mxu0 %v159
    %201 = vmatpush1.bf16.msra.mxu0 %v158
    %202 = vmatprep.subr.bf16.mxu0 %v156
    %203 = vmatpush1.bf16.msra.mxu0 %v155
    %204 = vmatprep.subr.bf16.mxu0 %v153
    %205 = vmatpush1.bf16.msra.mxu0 %v152
    %206 = vmatprep.subr.bf16.mxu0 %v150
    %207 = vmatpush1.bf16.msra.mxu0 %v149
    %208 = vmatprep.subr.bf16.mxu0 %v147
    %209 = vmatpush1.bf16.msra.mxu0 %v146
    %210 = vmatprep.subr.bf16.mxu0 0
    %211 = vmatpush2.bf16.msra.mxu0 0
    %212 = vmatprep.subr.bf16.mxu0 0
    %213 = vmatpush2.bf16.msra.mxu0 0
    %214 = vmatprep.subr.bf16.mxu0 0
    %215 = vmatpush2.bf16.msra.mxu0 0
    %216 = vmatprep.subr.bf16.mxu0 0
    %217 = vmatpush2.bf16.msra.mxu0 0
    %218 = vmatprep.subr.bf16.mxu0 0
    %219 = vmatpush2.bf16.msra.mxu0 0
    %220 = vmatprep.subr.bf16.mxu0 0
    %221 = vmatpush2.bf16.msra.mxu0 0
    %222 = vmatprep.subr.bf16.mxu0 0
    %223 = vmatpush2.bf16.msra.mxu0 0
    %224 = vmatprep.subr.bf16.mxu0 0
    %225 = vmatpush2.bf16.msra.mxu0 0
    %226 = vmatprep.mubr.bf16.mxu0 0
    %227 = vmatmul.mubr.bf16.gmra.mxu0 %v33
    %v228 = vpop.f32.mrf.mxu0
    %v229 = vadd.f32 0.0, %v228
    %v230 = vpop.f32.mrf.mxu0
    %v231 = vadd.f32 0.0, %v230
    %v232 = vpop.f32.mrf.mxu0
    %v233 = vpop.f32.mrf.mxu0
    %234 = vdwg.mxu0
    %235 = vmatprep.subr.bf16.mxu0 0
    %236 = vmatpush1.bf16.msra.mxu0 %v169
    %237 = vmatprep.subr.bf16.mxu0 0
    %238 = vmatpush1.bf16.msra.mxu0 %v166
    %239 = vmatprep.subr.bf16.mxu0 0
    %240 = vmatpush1.bf16.msra.mxu0 %v163
    %241 = vmatprep.subr.bf16.mxu0 0
    %242 = vmatpush1.bf16.msra.mxu0 %v160
    %243 = vmatprep.subr.bf16.mxu0 0
    %244 = vmatpush1.bf16.msra.mxu0 %v157
    %245 = vmatprep.subr.bf16.mxu0 0
    %246 = vmatpush1.bf16.msra.mxu0 %v154
    %247 = vmatprep.subr.bf16.mxu0 0
    %248 = vmatpush1.bf16.msra.mxu0 %v151
    %249 = vmatprep.subr.bf16.mxu0 0
    %250 = vmatpush1.bf16.msra.mxu0 %v148
    %251 = vmatprep.subr.bf16.mxu0 0
    %252 = vmatpush2.bf16.msra.mxu0 0
    %253 = vmatprep.subr.bf16.mxu0 0
    %254 = vmatpush2.bf16.msra.mxu0 0
    %255 = vmatprep.subr.bf16.mxu0 0
    %256 = vmatpush2.bf16.msra.mxu0 0
    %257 = vmatprep.subr.bf16.mxu0 0
    %258 = vmatpush2.bf16.msra.mxu0 0
    %259 = vmatprep.subr.bf16.mxu0 0
    %260 = vmatpush2.bf16.msra.mxu0 0
    %261 = vmatprep.subr.bf16.mxu0 0
    %262 = vmatpush2.bf16.msra.mxu0 0
    %263 = vmatprep.subr.bf16.mxu0 0
    %264 = vmatpush2.bf16.msra.mxu0 0
    %265 = vmatprep.subr.bf16.mxu0 0
    %266 = vmatpush2.bf16.msra.mxu0 0
    %267 = vmatprep.mubr.bf16.mxu0 0
    %268 = vmatmul.mubr.bf16.gmra.mxu0 %v33
    %v269 = vpop.f32.mrf.mxu0
    %v270 = vadd.f32 0.0, %v269
    %v271 = vpop.f32.mrf.mxu0
    %v272 = vpop.f32.mrf.mxu0
    %v273 = vpop.f32.mrf.mxu0
    %274 = vdwg.mxu0
    %275 = vst [vmem:[#allocation3] sm:$0xff] %v229
    %276 = vst [vmem:[#allocation3 + $0x8] sm:$0xff] %v231
    %277 = vst [vmem:[#allocation3 + $0x10] sm:$0xff] %v270
  $region33: #{encoder_decoder_forward.4} parent=0 // pred_fallthru
    _
  %v278 = vld [vmem:[%s0] sm:$0xf]
  %v279 = vld [vmem:[%s0 + $0x4] sm:$0xf]
  %v280 = vld [vmem:[%s0 + $0x8] sm:$0xf]
  %v281 = vld [vmem:[%s0 + $0xc] sm:$0xf]
  %v282 = vld [vmem:[%s0 + $0x10] sm:$0xf]
  %v283 = vld [vmem:[%s0 + $0x14] sm:$0xf]
  %v284 = vld [vmem:[%s0 + $0x18] sm:$0xf]
  %v285 = vld [vmem:[%s0 + $0x1c] sm:$0xf]
  %v286 = vld [vmem:[%s2] sm:$0xff]
  %v287 = vld [vmem:[%s2 + $0x8] sm:$0xf]
  %v288 = vld [vmem:[%s2 + $0xc] sm:$0xff]
  %v289 = vld [vmem:[%s2 + $0x14] sm:$0xf]
  %v290 = vld [vmem:[%s2 + $0x18] sm:$0xff]
  %v291 = vld [vmem:[%s2 + $0x20] sm:$0xf]
  %v292 = vld [vmem:[%s2 + $0x24] sm:$0xff]
  %v293 = vld [vmem:[%s2 + $0x2c] sm:$0xf]
  %v302 = vunpack.c.l.b16 %v278
  %v303 = vunpack.c.l.b16 %v279
  %v304 = vunpack.c.l.b16 %v280
  %v305 = vunpack.c.l.b16 %v281
  %v306 = vunpack.c.l.b16 %v282
  %v307 = vunpack.c.l.b16 %v283
  %v308 = vunpack.c.l.b16 %v284
  %v309 = vunpack.c.l.b16 %v285
  %v310 = vpack.c.b16 %v303, %v302
  %v311 = vpack.c.b16 %v305, %v304
  %v312 = vpack.c.b16 %v307, %v306
  %v313 = vpack.c.b16 %v309, %v308
  %v322 = vunpack.c.l.b16 %v286
  %v323 = vunpack.c.h.b16 %v286
  %v324 = vunpack.c.l.b16 %v287
  %v325 = vunpack.c.l.b16 %v288
  %v326 = vunpack.c.h.b16 %v288
  %v327 = vunpack.c.l.b16 %v289
  %v328 = vunpack.c.l.b16 %v290
  %v329 = vunpack.c.h.b16 %v290
  %v330 = vunpack.c.l.b16 %v291
  %v331 = vunpack.c.l.b16 %v292
  %v332 = vunpack.c.h.b16 %v292
  %v333 = vunpack.c.l.b16 %v293
  %v334 = vpack.c.b16 %v325, %v322
  %v335 = vpack.c.b16 %v326, %v323
  %v336 = vpack.c.b16 %v327, %v324
  %v337 = vpack.c.b16 %v331, %v328
  %v338 = vpack.c.b16 %v332, %v329
  %v339 = vpack.c.b16 %v333, %v330
  %vm346 = vcmask 261120
  %v348 = vsel %vm346, %v310, 0
  %v351 = vsel %vm346, %v311, 0
  %v354 = vsel %vm346, %v312, 0
  %v357 = vsel %vm346, %v313, 0
  %359 = vmatprep.subr.bf16.mxu0 0
  %360 = vmatpush1.bf16.msra.mxu0 0
  %361 = vmatprep.subr.bf16.mxu0 0
  %362 = vmatpush1.bf16.msra.mxu0 0
  %363 = vmatprep.subr.bf16.mxu0 0
  %364 = vmatpush1.bf16.msra.mxu0 0
  %365 = vmatprep.subr.bf16.mxu0 0
  %366 = vmatpush1.bf16.msra.mxu0 0
  %367 = vmatprep.subr.bf16.mxu0 0
  %368 = vmatpush1.bf16.msra.mxu0 0
  %369 = vmatprep.subr.bf16.mxu0 0
  %370 = vmatpush1.bf16.msra.mxu0 0
  %371 = vmatprep.subr.bf16.mxu0 %v338
  %372 = vmatpush1.bf16.msra.mxu0 %v337
  %373 = vmatprep.subr.bf16.mxu0 %v335
  %374 = vmatpush1.bf16.msra.mxu0 %v334
  %375 = vmatprep.subr.bf16.mxu0 0
  %376 = vmatpush2.bf16.msra.mxu0 0
  %377 = vmatprep.subr.bf16.mxu0 0
  %378 = vmatpush2.bf16.msra.mxu0 0
  %379 = vmatprep.subr.bf16.mxu0 0
  %380 = vmatpush2.bf16.msra.mxu0 0
  %381 = vmatprep.subr.bf16.mxu0 0
  %382 = vmatpush2.bf16.msra.mxu0 0
  %383 = vmatprep.subr.bf16.mxu0 0
  %384 = vmatpush2.bf16.msra.mxu0 0
  %385 = vmatprep.subr.bf16.mxu0 0
  %386 = vmatpush2.bf16.msra.mxu0 0
  %387 = vmatprep.subr.bf16.mxu0 0
  %388 = vmatpush2.bf16.msra.mxu0 0
  %389 = vmatprep.subr.bf16.mxu0 0
  %390 = vmatpush2.bf16.msra.mxu0 0
  %391 = vmatprep.mubr.bf16.mxu0 0
  %392 = vmatmul.mubr.bf16.gmra.mxu0 %v348
  %v393 = vpop.f32.mrf.mxu0
  %v394 = vadd.f32 0.0, %v393
  %v395 = vpop.f32.mrf.mxu0
  %v396 = vadd.f32 0.0, %v395
  %v397 = vpop.f32.mrf.mxu0
  %v398 = vadd.f32 0.0, %v397
  %v399 = vpop.f32.mrf.mxu0
  %v400 = vadd.f32 0.0, %v399
  %401 = vmatprep.mubr.bf16.mxu0 0
  %402 = vmatmul.mubr.bf16.gmra.mxu0 %v351
  %v403 = vpop.f32.mrf.mxu0
  %v404 = vadd.f32 0.0, %v403
  %v405 = vpop.f32.mrf.mxu0
  %v406 = vadd.f32 0.0, %v405
  %v407 = vpop.f32.mrf.mxu0
  %v408 = vadd.f32 0.0, %v407
  %v409 = vpop.f32.mrf.mxu0
  %v410 = vadd.f32 0.0, %v409
  %411 = vmatprep.mubr.bf16.mxu0 0
  %412 = vmatmul.mubr.bf16.gmra.mxu0 %v354
  %v413 = vpop.f32.mrf.mxu0
  %v414 = vadd.f32 0.0, %v413
  %v415 = vpop.f32.mrf.mxu0
  %v416 = vadd.f32 0.0, %v415
  %v417 = vpop.f32.mrf.mxu0
  %v418 = vadd.f32 0.0, %v417
  %v419 = vpop.f32.mrf.mxu0
  %v420 = vadd.f32 0.0, %v419
  %421 = vmatprep.mubr.bf16.mxu0 0
  %422 = vmatmul.mubr.bf16.gmra.mxu0 %v357
  %v423 = vpop.f32.mrf.mxu0
  %v424 = vadd.f32 0.0, %v423
  %v425 = vpop.f32.mrf.mxu0
  %v426 = vadd.f32 0.0, %v425
  %v427 = vpop.f32.mrf.mxu0
  %v428 = vadd.f32 0.0, %v427
  %v429 = vpop.f32.mrf.mxu0
  %v430 = vadd.f32 0.0, %v429
  %431 = vdwg.mxu0
  %432 = vmatprep.subr.bf16.mxu0 0
  %433 = vmatpush1.bf16.msra.mxu0 0
  %434 = vmatprep.subr.bf16.mxu0 0
  %435 = vmatpush1.bf16.msra.mxu0 0
  %436 = vmatprep.subr.bf16.mxu0 0
  %437 = vmatpush1.bf16.msra.mxu0 0
  %438 = vmatprep.subr.bf16.mxu0 0
  %439 = vmatpush1.bf16.msra.mxu0 0
  %440 = vmatprep.subr.bf16.mxu0 0
  %441 = vmatpush1.bf16.msra.mxu0 0
  %442 = vmatprep.subr.bf16.mxu0 0
  %443 = vmatpush1.bf16.msra.mxu0 0
  %444 = vmatprep.subr.bf16.mxu0 0
  %445 = vmatpush1.bf16.msra.mxu0 %v339
  %446 = vmatprep.subr.bf16.mxu0 0
  %447 = vmatpush1.bf16.msra.mxu0 %v336
  %448 = vmatprep.subr.bf16.mxu0 0
  %449 = vmatpush2.bf16.msra.mxu0 0
  %450 = vmatprep.subr.bf16.mxu0 0
  %451 = vmatpush2.bf16.msra.mxu0 0
  %452 = vmatprep.subr.bf16.mxu0 0
  %453 = vmatpush2.bf16.msra.mxu0 0
  %454 = vmatprep.subr.bf16.mxu0 0
  %455 = vmatpush2.bf16.msra.mxu0 0
  %456 = vmatprep.subr.bf16.mxu0 0
  %457 = vmatpush2.bf16.msra.mxu0 0
  %458 = vmatprep.subr.bf16.mxu0 0
  %459 = vmatpush2.bf16.msra.mxu0 0
  %460 = vmatprep.subr.bf16.mxu0 0
  %461 = vmatpush2.bf16.msra.mxu0 0
  %462 = vmatprep.subr.bf16.mxu0 0
  %463 = vmatpush2.bf16.msra.mxu0 0
  %464 = vmatprep.mubr.bf16.mxu0 0
  %465 = vmatmul.mubr.bf16.gmra.mxu0 %v348
  %v466 = vpop.f32.mrf.mxu0
  %v467 = vadd.f32 0.0, %v466
  %v468 = vpop.f32.mrf.mxu0
  %v469 = vpop.f32.mrf.mxu0
  %v470 = vadd.f32 0.0, %v469
  %v471 = vpop.f32.mrf.mxu0
  %472 = vmatprep.mubr.bf16.mxu0 0
  %473 = vmatmul.mubr.bf16.gmra.mxu0 %v351
  %v474 = vpop.f32.mrf.mxu0
  %v475 = vadd.f32 0.0, %v474
  %v476 = vpop.f32.mrf.mxu0
  %v477 = vpop.f32.mrf.mxu0
  %v478 = vadd.f32 0.0, %v477
  %v479 = vpop.f32.mrf.mxu0
  %480 = vmatprep.mubr.bf16.mxu0 0
  %481 = vmatmul.mubr.bf16.gmra.mxu0 %v354
  %v482 = vpop.f32.mrf.mxu0
  %v483 = vadd.f32 0.0, %v482
  %v484 = vpop.f32.mrf.mxu0
  %v485 = vpop.f32.mrf.mxu0
  %v486 = vadd.f32 0.0, %v485
  %v487 = vpop.f32.mrf.mxu0
  %488 = vmatprep.mubr.bf16.mxu0 0
  %489 = vmatmul.mubr.bf16.gmra.mxu0 %v357
  %v490 = vpop.f32.mrf.mxu0
  %v491 = vadd.f32 0.0, %v490
  %v492 = vpop.f32.mrf.mxu0
  %v493 = vpop.f32.mrf.mxu0
  %v494 = vadd.f32 0.0, %v493
  %v495 = vpop.f32.mrf.mxu0
  %496 = vdwg.mxu0
  %v497 = vld [vmem:[%s5] sm:$0x7]
  %v499 = vlaneseq
  %v500 = vshrl.u32 %v499, 7
  %v501 = vsub.s32 0, %v500
  %v502 = vrot.slane %v497, %v501
  %v503 = vlaneseq
  %v504 = vshrl.u32 %v503, 7
  %v505 = vsub.s32 1, %v504
  %v506 = vrot.slane %v497, %v505
  %v507 = vlaneseq
  %v508 = vshrl.u32 %v507, 7
  %v509 = vsub.s32 2, %v508
  %v510 = vrot.slane %v497, %v509
  %v514 = vadd.f32 %v394, %v502
  %v515 = vadd.f32 %v396, %v506
  %v516 = vadd.f32 %v467, %v510
  %v517 = vadd.f32 %v398, %v502
  %v518 = vadd.f32 %v400, %v506
  %v519 = vadd.f32 %v470, %v510
  %v520 = vadd.f32 %v404, %v502
  %v521 = vadd.f32 %v406, %v506
  %v522 = vadd.f32 %v475, %v510
  %v523 = vadd.f32 %v408, %v502
  %v524 = vadd.f32 %v410, %v506
  %v525 = vadd.f32 %v478, %v510
  %v526 = vadd.f32 %v414, %v502
  %v527 = vadd.f32 %v416, %v506
  %v528 = vadd.f32 %v483, %v510
  %v529 = vadd.f32 %v418, %v502
  %v530 = vadd.f32 %v420, %v506
  %v531 = vadd.f32 %v486, %v510
  %v532 = vadd.f32 %v424, %v502
  %v533 = vadd.f32 %v426, %v506
  %v534 = vadd.f32 %v491, %v510
  %v535 = vadd.f32 %v428, %v502
  %v536 = vadd.f32 %v430, %v506
  %v537 = vadd.f32 %v494, %v510
  %v538 = vld [vmem:[#allocation3] sm:$0xff]
  %v539 = vld [vmem:[#allocation3 + $0x8] sm:$0xff]
  %v540 = vld [vmem:[#allocation3 + $0x10] sm:$0xff]
  %v541 = vadd.f32 %v514, %v538
  %v542 = vadd.f32 %v515, %v539
  %v543 = vadd.f32 %v516, %v540
  %v544 = vadd.f32 %v517, %v538
  %v545 = vadd.f32 %v518, %v539
  %v546 = vadd.f32 %v519, %v540
  %v547 = vadd.f32 %v520, %v538
  %v548 = vadd.f32 %v521, %v539
  %v549 = vadd.f32 %v522, %v540
  %v550 = vadd.f32 %v523, %v538
  %v551 = vadd.f32 %v524, %v539
  %v552 = vadd.f32 %v525, %v540
  %v553 = vadd.f32 %v526, %v538
  %v554 = vadd.f32 %v527, %v539
  %v555 = vadd.f32 %v528, %v540
  %v556 = vadd.f32 %v529, %v538
  %v557 = vadd.f32 %v530, %v539
  %v558 = vadd.f32 %v531, %v540
  %v559 = vadd.f32 %v532, %v538
  %v560 = vadd.f32 %v533, %v539
  %v561 = vadd.f32 %v534, %v540
  %v562 = vadd.f32 %v535, %v538
  %v563 = vadd.f32 %v536, %v539
  %v564 = vadd.f32 %v537, %v540
  %565 = vst [vmem:[#allocation4] sm:$0xff] %v541
  %566 = vst [vmem:[#allocation4 + $0x8] sm:$0xff] %v542
  %567 = vst [vmem:[#allocation4 + $0x10] sm:$0xff] %v543
  %568 = vst [vmem:[#allocation4 + $0x18] sm:$0xff] %v544
  %569 = vst [vmem:[#allocation4 + $0x20] sm:$0xff] %v545
  %570 = vst [vmem:[#allocation4 + $0x28] sm:$0xff] %v546
  %571 = vst [vmem:[#allocation4 + $0x30] sm:$0xff] %v547
  %572 = vst [vmem:[#allocation4 + $0x38] sm:$0xff] %v548
  %573 = vst [vmem:[#allocation4 + $0x40] sm:$0xff] %v549
  %574 = vst [vmem:[#allocation4 + $0x48] sm:$0xff] %v550
  %575 = vst [vmem:[#allocation4 + $0x50] sm:$0xff] %v551
  %576 = vst [vmem:[#allocation4 + $0x58] sm:$0xff] %v552
  %577 = vst [vmem:[#allocation4 + $0x60] sm:$0xff] %v553
  %578 = vst [vmem:[#allocation4 + $0x68] sm:$0xff] %v554
  %579 = vst [vmem:[#allocation4 + $0x70] sm:$0xff] %v555
  %580 = vst [vmem:[#allocation4 + $0x78] sm:$0xff] %v556
  %581 = vst [vmem:[#allocation4 + $0x80] sm:$0xff] %v557
  %582 = vst [vmem:[#allocation4 + $0x88] sm:$0xff] %v558
  %583 = vst [vmem:[#allocation4 + $0x90] sm:$0xff] %v559
  %584 = vst [vmem:[#allocation4 + $0x98] sm:$0xff] %v560
  %585 = vst [vmem:[#allocation4 + $0xa0] sm:$0xff] %v561
  %586 = vst [vmem:[#allocation4 + $0xa8] sm:$0xff] %v562
  %587 = vst [vmem:[#allocation4 + $0xb0] sm:$0xff] %v563
  %588 = vst [vmem:[#allocation4 + $0xb8] sm:$0xff] %v564
  %v589 = vld [vmem:[%s3] sm:$0xff]
  %v590 = vld [vmem:[%s3 + $0x8] sm:$0xf]
  %v591 = vld [vmem:[%s3 + $0xc] sm:$0xff]
  %v592 = vld [vmem:[%s3 + $0x14] sm:$0xf]
  %v593 = vld [vmem:[%s3 + $0x18] sm:$0xff]
  %v594 = vld [vmem:[%s3 + $0x20] sm:$0xf]
  %v595 = vld [vmem:[%s3 + $0x24] sm:$0xff]
  %v596 = vld [vmem:[%s3 + $0x2c] sm:$0xf]
  %v597 = vld [vmem:[%s3 + $0x30] sm:$0xff]
  %v598 = vld [vmem:[%s3 + $0x38] sm:$0xf]
  %v599 = vld [vmem:[%s3 + $0x3c] sm:$0xff]
  %v600 = vld [vmem:[%s3 + $0x44] sm:$0xf]
  %v601 = vld [vmem:[%s3 + $0x48] sm:$0xff]
  %v602 = vld [vmem:[%s3 + $0x50] sm:$0xf]
  %v603 = vld [vmem:[%s3 + $0x54] sm:$0xff]
  %v604 = vld [vmem:[%s3 + $0x5c] sm:$0xf]
  %v605 = vld [vmem:[%s3 + $0x60] sm:$0xff]
  %v606 = vld [vmem:[%s3 + $0x68] sm:$0xf]
  %v607 = vld [vmem:[%s3 + $0x6c] sm:$0xff]
  %v608 = vld [vmem:[%s3 + $0x74] sm:$0xf]
  %v609 = vld [vmem:[%s3 + $0x78] sm:$0xff]
  %v610 = vld [vmem:[%s3 + $0x80] sm:$0xf]
  %v611 = vld [vmem:[%s3 + $0x84] sm:$0xff]
  %v612 = vld [vmem:[%s3 + $0x8c] sm:$0xf]
  %v613 = vld [vmem:[%s3 + $0x90] sm:$0xff]
  %v614 = vld [vmem:[%s3 + $0x98] sm:$0xf]
  %v615 = vld [vmem:[%s3 + $0x9c] sm:$0xff]
  %v616 = vld [vmem:[%s3 + $0xa4] sm:$0xf]
  %v617 = vld [vmem:[%s3 + $0xa8] sm:$0xff]
  %v618 = vld [vmem:[%s3 + $0xb0] sm:$0xf]
  %v619 = vld [vmem:[%s3 + $0xb4] sm:$0xff]
  %v620 = vld [vmem:[%s3 + $0xbc] sm:$0xf]
  %v621 = vld [vmem:[%s6] sm:$0x7]
  %v622 = vld [vmem:[#allocation2] sm:$0xff]
  %v623 = vld [vmem:[#allocation4] sm:$0xff]
  %v624 = vld [vmem:[#allocation4 + $0x8] sm:$0xff]
  %v625 = vld [vmem:[#allocation4 + $0x10] sm:$0xff]
  %v626 = vpack.c.bf16 %v622, %v622
  %v628 = vlaneseq
  %v629 = vshrl.u32 %v628, 7
  %v630 = vsub.s32 0, %v629
  %v631 = vrot.slane %v621, %v630
  %v632 = vlaneseq
  %v633 = vshrl.u32 %v632, 7
  %v634 = vsub.s32 1, %v633
  %v635 = vrot.slane %v621, %v634
  %v636 = vlaneseq
  %v637 = vshrl.u32 %v636, 7
  %v638 = vsub.s32 2, %v637
  %v639 = vrot.slane %v621, %v638
  %v675 = vunpack.c.l.b16 %v589
  %v676 = vunpack.c.h.b16 %v589
  %v677 = vunpack.c.l.b16 %v590
  %v678 = vunpack.c.l.b16 %v591
  %v679 = vunpack.c.h.b16 %v591
  %v680 = vunpack.c.l.b16 %v592
  %v681 = vunpack.c.l.b16 %v593
  %v682 = vunpack.c.h.b16 %v593
  %v683 = vunpack.c.l.b16 %v594
  %v684 = vunpack.c.l.b16 %v595
  %v685 = vunpack.c.h.b16 %v595
  %v686 = vunpack.c.l.b16 %v596
  %v687 = vunpack.c.l.b16 %v597
  %v688 = vunpack.c.h.b16 %v597
  %v689 = vunpack.c.l.b16 %v598
  %v690 = vunpack.c.l.b16 %v599
  %v691 = vunpack.c.h.b16 %v599
  %v692 = vunpack.c.l.b16 %v600
  %v693 = vunpack.c.l.b16 %v601
  %v694 = vunpack.c.h.b16 %v601
  %v695 = vunpack.c.l.b16 %v602
  %v696 = vunpack.c.l.b16 %v603
  %v697 = vunpack.c.h.b16 %v603
  %v698 = vunpack.c.l.b16 %v604
  %v699 = vunpack.c.l.b16 %v605
  %v700 = vunpack.c.h.b16 %v605
  %v701 = vunpack.c.l.b16 %v606
  %v702 = vunpack.c.l.b16 %v607
  %v703 = vunpack.c.h.b16 %v607
  %v704 = vunpack.c.l.b16 %v608
  %v705 = vunpack.c.l.b16 %v609
  %v706 = vunpack.c.h.b16 %v609
  %v707 = vunpack.c.l.b16 %v610
  %v708 = vunpack.c.l.b16 %v611
  %v709 = vunpack.c.h.b16 %v611
  %v710 = vunpack.c.l.b16 %v612
  %v711 = vunpack.c.l.b16 %v613
  %v712 = vunpack.c.h.b16 %v613
  %v713 = vunpack.c.l.b16 %v614
  %v714 = vunpack.c.l.b16 %v615
  %v715 = vunpack.c.h.b16 %v615
  %v716 = vunpack.c.l.b16 %v616
  %v717 = vunpack.c.l.b16 %v617
  %v718 = vunpack.c.h.b16 %v617
  %v719 = vunpack.c.l.b16 %v618
  %v720 = vunpack.c.l.b16 %v619
  %v721 = vunpack.c.h.b16 %v619
  %v722 = vunpack.c.l.b16 %v620
  %v723 = vpack.c.b16 %v678, %v675
  %v724 = vpack.c.b16 %v679, %v676
  %v725 = vpack.c.b16 %v680, %v677
  %v726 = vpack.c.b16 %v684, %v681
  %v727 = vpack.c.b16 %v685, %v682
  %v728 = vpack.c.b16 %v686, %v683
  %v729 = vpack.c.b16 %v690, %v687
  %v730 = vpack.c.b16 %v691, %v688
  %v731 = vpack.c.b16 %v692, %v689
  %v732 = vpack.c.b16 %v696, %v693
  %v733 = vpack.c.b16 %v697, %v694
  %v734 = vpack.c.b16 %v698, %v695
  %v735 = vpack.c.b16 %v702, %v699
  %v736 = vpack.c.b16 %v703, %v700
  %v737 = vpack.c.b16 %v704, %v701
  %v738 = vpack.c.b16 %v708, %v705
  %v739 = vpack.c.b16 %v709, %v706
  %v740 = vpack.c.b16 %v710, %v707
  %v741 = vpack.c.b16 %v714, %v711
  %v742 = vpack.c.b16 %v715, %v712
  %v743 = vpack.c.b16 %v716, %v713
  %v744 = vpack.c.b16 %v720, %v717
  %v745 = vpack.c.b16 %v721, %v718
  %v746 = vpack.c.b16 %v722, %v719
  %771 = vmatprep.subr.bf16.mxu0 %v745
  %772 = vmatpush1.bf16.msra.mxu0 %v744
  %773 = vmatprep.subr.bf16.mxu0 %v742
  %774 = vmatpush1.bf16.msra.mxu0 %v741
  %775 = vmatprep.subr.bf16.mxu0 %v739
  %776 = vmatpush1.bf16.msra.mxu0 %v738
  %777 = vmatprep.subr.bf16.mxu0 %v736
  %778 = vmatpush1.bf16.msra.mxu0 %v735
  %779 = vmatprep.subr.bf16.mxu0 %v733
  %780 = vmatpush1.bf16.msra.mxu0 %v732
  %781 = vmatprep.subr.bf16.mxu0 %v730
  %782 = vmatpush1.bf16.msra.mxu0 %v729
  %783 = vmatprep.subr.bf16.mxu0 %v727
  %784 = vmatpush1.bf16.msra.mxu0 %v726
  %785 = vmatprep.subr.bf16.mxu0 %v724
  %786 = vmatpush1.bf16.msra.mxu0 %v723
  %787 = vmatprep.subr.bf16.mxu0 0
  %788 = vmatpush2.bf16.msra.mxu0 0
  %789 = vmatprep.subr.bf16.mxu0 0
  %790 = vmatpush2.bf16.msra.mxu0 0
  %791 = vmatprep.subr.bf16.mxu0 0
  %792 = vmatpush2.bf16.msra.mxu0 0
  %793 = vmatprep.subr.bf16.mxu0 0
  %794 = vmatpush2.bf16.msra.mxu0 0
  %795 = vmatprep.subr.bf16.mxu0 0
  %796 = vmatpush2.bf16.msra.mxu0 0
  %797 = vmatprep.subr.bf16.mxu0 0
  %798 = vmatpush2.bf16.msra.mxu0 0
  %799 = vmatprep.subr.bf16.mxu0 0
  %800 = vmatpush2.bf16.msra.mxu0 0
  %801 = vmatprep.subr.bf16.mxu0 0
  %802 = vmatpush2.bf16.msra.mxu0 0
  %803 = vmatprep.mubr.bf16.mxu0 0
  %804 = vmatmul.mubr.bf16.gmra.mxu0 %v626
  %v805 = vpop.f32.mrf.mxu0
  %v806 = vadd.f32 %v631, %v805
  %v807 = vpop.f32.mrf.mxu0
  %v808 = vadd.f32 %v635, %v807
  %v809 = vpop.f32.mrf.mxu0
  %v810 = vpop.f32.mrf.mxu0
  %811 = vdwg.mxu0
  %812 = vmatprep.subr.bf16.mxu0 0
  %813 = vmatpush1.bf16.msra.mxu0 %v746
  %814 = vmatprep.subr.bf16.mxu0 0
  %815 = vmatpush1.bf16.msra.mxu0 %v743
  %816 = vmatprep.subr.bf16.mxu0 0
  %817 = vmatpush1.bf16.msra.mxu0 %v740
  %818 = vmatprep.subr.bf16.mxu0 0
  %819 = vmatpush1.bf16.msra.mxu0 %v737
  %820 = vmatprep.subr.bf16.mxu0 0
  %821 = vmatpush1.bf16.msra.mxu0 %v734
  %822 = vmatprep.subr.bf16.mxu0 0
  %823 = vmatpush1.bf16.msra.mxu0 %v731
  %824 = vmatprep.subr.bf16.mxu0 0
  %825 = vmatpush1.bf16.msra.mxu0 %v728
  %826 = vmatprep.subr.bf16.mxu0 0
  %827 = vmatpush1.bf16.msra.mxu0 %v725
  %828 = vmatprep.subr.bf16.mxu0 0
  %829 = vmatpush2.bf16.msra.mxu0 0
  %830 = vmatprep.subr.bf16.mxu0 0
  %831 = vmatpush2.bf16.msra.mxu0 0
  %832 = vmatprep.subr.bf16.mxu0 0
  %833 = vmatpush2.bf16.msra.mxu0 0
  %834 = vmatprep.subr.bf16.mxu0 0
  %835 = vmatpush2.bf16.msra.mxu0 0
  %836 = vmatprep.subr.bf16.mxu0 0
  %837 = vmatpush2.bf16.msra.mxu0 0
  %838 = vmatprep.subr.bf16.mxu0 0
  %839 = vmatpush2.bf16.msra.mxu0 0
  %840 = vmatprep.subr.bf16.mxu0 0
  %841 = vmatpush2.bf16.msra.mxu0 0
  %842 = vmatprep.subr.bf16.mxu0 0
  %843 = vmatpush2.bf16.msra.mxu0 0
  %844 = vmatprep.mubr.bf16.mxu0 0
  %845 = vmatmul.mubr.bf16.gmra.mxu0 %v626
  %v846 = vpop.f32.mrf.mxu0
  %v847 = vadd.f32 %v639, %v846
  %v848 = vpop.f32.mrf.mxu0
  %v849 = vpop.f32.mrf.mxu0
  %v850 = vpop.f32.mrf.mxu0
  %851 = vdwg.mxu0
  %v852 = vadd.f32 %v623, %v806
  %v853 = vxor.u32 %v852, 2147483648
  %v854 = vmul.f32 %v853, 1.442695
  %v855 = vpow.pop %v854
  %v856 = vadd.f32 %v855, 1.0
  %v857 = vrcp.pop %v856
  %v858 = vmul.f32 1.0, %v857
  %v859 = vadd.f32 %v624, %v808
  %v860 = vxor.u32 %v859, 2147483648
  %v861 = vmul.f32 %v860, 1.442695
  %v862 = vpow.pop %v861
  %v863 = vadd.f32 %v862, 1.0
  %v864 = vrcp.pop %v863
  %v865 = vmul.f32 1.0, %v864
  %v866 = vmul.f32 %v858, %v847
  %v867 = vadd.f32 %v625, %v866
  %v868 = vtanh.pop %v867
  %v869 = vsub.f32 1.0, %v865
  %v870 = vmul.f32 %v869, %v868
  %v871 = vmul.f32 %v865, %v622
  %v872 = vadd.f32 %v870, %v871
  %v873 = vpack.c.bf16 %v872, %v872
  %874 = vst [vmem:[%s7] sm:$0xf] %v873
  %s875 = scalar_lea.vmem [#allocation4], 24
  %v876 = vld [vmem:[%s875] sm:$0xff]
  %v877 = vld [vmem:[%s875 + $0x8] sm:$0xff]
  %v878 = vld [vmem:[%s875 + $0x10] sm:$0xff]
  %879 = vmatprep.subr.bf16.mxu0 %v745
  %880 = vmatpush1.bf16.msra.mxu0 %v744
  %881 = vmatprep.subr.bf16.mxu0 %v742
  %882 = vmatpush1.bf16.msra.mxu0 %v741
  %883 = vmatprep.subr.bf16.mxu0 %v739
  %884 = vmatpush1.bf16.msra.mxu0 %v738
  %885 = vmatprep.subr.bf16.mxu0 %v736
  %886 = vmatpush1.bf16.msra.mxu0 %v735
  %887 = vmatprep.subr.bf16.mxu0 %v733
  %888 = vmatpush1.bf16.msra.mxu0 %v732
  %889 = vmatprep.subr.bf16.mxu0 %v730
  %890 = vmatpush1.bf16.msra.mxu0 %v729
  %891 = vmatprep.subr.bf16.mxu0 %v727
  %892 = vmatpush1.bf16.msra.mxu0 %v726
  %893 = vmatprep.subr.bf16.mxu0 %v724
  %894 = vmatpush1.bf16.msra.mxu0 %v723
  %895 = vmatprep.subr.bf16.mxu0 0
  %896 = vmatpush2.bf16.msra.mxu0 0
  %897 = vmatprep.subr.bf16.mxu0 0
  %898 = vmatpush2.bf16.msra.mxu0 0
  %899 = vmatprep.subr.bf16.mxu0 0
  %900 = vmatpush2.bf16.msra.mxu0 0
  %901 = vmatprep.subr.bf16.mxu0 0
  %902 = vmatpush2.bf16.msra.mxu0 0
  %903 = vmatprep.subr.bf16.mxu0 0
  %904 = vmatpush2.bf16.msra.mxu0 0
  %905 = vmatprep.subr.bf16.mxu0 0
  %906 = vmatpush2.bf16.msra.mxu0 0
  %907 = vmatprep.subr.bf16.mxu0 0
  %908 = vmatpush2.bf16.msra.mxu0 0
  %909 = vmatprep.subr.bf16.mxu0 0
  %910 = vmatpush2.bf16.msra.mxu0 0
  %911 = vmatprep.mubr.bf16.mxu0 0
  %912 = vmatmul.mubr.bf16.gmra.mxu0 %v873
  %v913 = vpop.f32.mrf.mxu0
  %v914 = vadd.f32 %v631, %v913
  %v915 = vpop.f32.mrf.mxu0
  %v916 = vadd.f32 %v635, %v915
  %v917 = vpop.f32.mrf.mxu0
  %v918 = vpop.f32.mrf.mxu0
  %919 = vdwg.mxu0
  %920 = vmatprep.subr.bf16.mxu0 0
  %921 = vmatpush1.bf16.msra.mxu0 %v746
  %922 = vmatprep.subr.bf16.mxu0 0
  %923 = vmatpush1.bf16.msra.mxu0 %v743
  %924 = vmatprep.subr.bf16.mxu0 0
  %925 = vmatpush1.bf16.msra.mxu0 %v740
  %926 = vmatprep.subr.bf16.mxu0 0
  %927 = vmatpush1.bf16.msra.mxu0 %v737
  %928 = vmatprep.subr.bf16.mxu0 0
  %929 = vmatpush1.bf16.msra.mxu0 %v734
  %930 = vmatprep.subr.bf16.mxu0 0
  %931 = vmatpush1.bf16.msra.mxu0 %v731
  %932 = vmatprep.subr.bf16.mxu0 0
  %933 = vmatpush1.bf16.msra.mxu0 %v728
  %934 = vmatprep.subr.bf16.mxu0 0
  %935 = vmatpush1.bf16.msra.mxu0 %v725
  %936 = vmatprep.subr.bf16.mxu0 0
  %937 = vmatpush2.bf16.msra.mxu0 0
  %938 = vmatprep.subr.bf16.mxu0 0
  %939 = vmatpush2.bf16.msra.mxu0 0
  %940 = vmatprep.subr.bf16.mxu0 0
  %941 = vmatpush2.bf16.msra.mxu0 0
  %942 = vmatprep.subr.bf16.mxu0 0
  %943 = vmatpush2.bf16.msra.mxu0 0
  %944 = vmatprep.subr.bf16.mxu0 0
  %945 = vmatpush2.bf16.msra.mxu0 0
  %946 = vmatprep.subr.bf16.mxu0 0
  %947 = vmatpush2.bf16.msra.mxu0 0
  %948 = vmatprep.subr.bf16.mxu0 0
  %949 = vmatpush2.bf16.msra.mxu0 0
  %950 = vmatprep.subr.bf16.mxu0 0
  %951 = vmatpush2.bf16.msra.mxu0 0
  %952 = vmatprep.mubr.bf16.mxu0 0
  %953 = vmatmul.mubr.bf16.gmra.mxu0 %v873
  %v954 = vpop.f32.mrf.mxu0
  %v955 = vadd.f32 %v639, %v954
  %v956 = vpop.f32.mrf.mxu0
  %v957 = vpop.f32.mrf.mxu0
  %v958 = vpop.f32.mrf.mxu0
  %959 = vdwg.mxu0
  %v960 = vadd.f32 %v876, %v914
  %v961 = vxor.u32 %v960, 2147483648
  %v962 = vmul.f32 %v961, 1.442695
  %v963 = vpow.pop %v962
  %v964 = vadd.f32 %v963, 1.0
  %v965 = vrcp.pop %v964
  %v966 = vmul.f32 1.0, %v965
  %v967 = vadd.f32 %v877, %v916
  %v968 = vxor.u32 %v967, 2147483648
  %v969 = vmul.f32 %v968, 1.442695
  %v970 = vpow.pop %v969
  %v971 = vadd.f32 %v970, 1.0
  %v972 = vrcp.pop %v971
  %v973 = vmul.f32 1.0, %v972
  %v974 = vmul.f32 %v966, %v955
  %v975 = vadd.f32 %v878, %v974
  %v976 = vtanh.pop %v975
  %v977 = vsub.f32 1.0, %v973
  %v978 = vmul.f32 %v977, %v976
  %v979 = vmul.f32 %v973, %v872
  %v980 = vadd.f32 %v978, %v979
  %v981 = vpack.c.bf16 %v980, %v980
  %s982 = scalar_lea.vmem %s7, 4
  %983 = vst [vmem:[%s982] sm:$0xf] %v981
  %s984 = scalar_lea.vmem [#allocation4], 48
  %v985 = vld [vmem:[%s984] sm:$0xff]
  %v986 = vld [vmem:[%s984 + $0x8] sm:$0xff]
  %v987 = vld [vmem:[%s984 + $0x10] sm:$0xff]
  %988 = vmatprep.subr.bf16.mxu0 %v745
  %989 = vmatpush1.bf16.msra.mxu0 %v744
  %990 = vmatprep.subr.bf16.mxu0 %v742
  %991 = vmatpush1.bf16.msra.mxu0 %v741
  %992 = vmatprep.subr.bf16.mxu0 %v739
  %993 = vmatpush1.bf16.msra.mxu0 %v738
  %994 = vmatprep.subr.bf16.mxu0 %v736
  %995 = vmatpush1.bf16.msra.mxu0 %v735
  %996 = vmatprep.subr.bf16.mxu0 %v733
  %997 = vmatpush1.bf16.msra.mxu0 %v732
  %998 = vmatprep.subr.bf16.mxu0 %v730
  %999 = vmatpush1.bf16.msra.mxu0 %v729
  %1000 = vmatprep.subr.bf16.mxu0 %v727
  %1001 = vmatpush1.bf16.msra.mxu0 %v726
  %1002 = vmatprep.subr.bf16.mxu0 %v724
  %1003 = vmatpush1.bf16.msra.mxu0 %v723
  %1004 = vmatprep.subr.bf16.mxu0 0
  %1005 = vmatpush2.bf16.msra.mxu0 0
  %1006 = vmatprep.subr.bf16.mxu0 0
  %1007 = vmatpush2.bf16.msra.mxu0 0
  %1008 = vmatprep.subr.bf16.mxu0 0
  %1009 = vmatpush2.bf16.msra.mxu0 0
  %1010 = vmatprep.subr.bf16.mxu0 0
  %1011 = vmatpush2.bf16.msra.mxu0 0
  %1012 = vmatprep.subr.bf16.mxu0 0
  %1013 = vmatpush2.bf16.msra.mxu0 0
  %1014 = vmatprep.subr.bf16.mxu0 0
  %1015 = vmatpush2.bf16.msra.mxu0 0
  %1016 = vmatprep.subr.bf16.mxu0 0
  %1017 = vmatpush2.bf16.msra.mxu0 0
  %1018 = vmatprep.subr.bf16.mxu0 0
  %1019 = vmatpush2.bf16.msra.mxu0 0
  %1020 = vmatprep.mubr.bf16.mxu0 0
  %1021 = vmatmul.mubr.bf16.gmra.mxu0 %v981
  %v1022 = vpop.f32.mrf.mxu0
  %v1023 = vadd.f32 %v631, %v1022
  %v1024 = vpop.f32.mrf.mxu0
  %v1025 = vadd.f32 %v635, %v1024
  %v1026 = vpop.f32.mrf.mxu0
  %v1027 = vpop.f32.mrf.mxu0
  %1028 = vdwg.mxu0
  %1029 = vmatprep.subr.bf16.mxu0 0
  %1030 = vmatpush1.bf16.msra.mxu0 %v746
  %1031 = vmatprep.subr.bf16.mxu0 0
  %1032 = vmatpush1.bf16.msra.mxu0 %v743
  %1033 = vmatprep.subr.bf16.mxu0 0
  %1034 = vmatpush1.bf16.msra.mxu0 %v740
  %1035 = vmatprep.subr.bf16.mxu0 0
  %1036 = vmatpush1.bf16.msra.mxu0 %v737
  %1037 = vmatprep.subr.bf16.mxu0 0
  %1038 = vmatpush1.bf16.msra.mxu0 %v734
  %1039 = vmatprep.subr.bf16.mxu0 0
  %1040 = vmatpush1.bf16.msra.mxu0 %v731
  %1041 = vmatprep.subr.bf16.mxu0 0
  %1042 = vmatpush1.bf16.msra.mxu0 %v728
  %1043 = vmatprep.subr.bf16.mxu0 0
  %1044 = vmatpush1.bf16.msra.mxu0 %v725
  %1045 = vmatprep.subr.bf16.mxu0 0
  %1046 = vmatpush2.bf16.msra.mxu0 0
  %1047 = vmatprep.subr.bf16.mxu0 0
  %1048 = vmatpush2.bf16.msra.mxu0 0
  %1049 = vmatprep.subr.bf16.mxu0 0
  %1050 = vmatpush2.bf16.msra.mxu0 0
  %1051 = vmatprep.subr.bf16.mxu0 0
  %1052 = vmatpush2.bf16.msra.mxu0 0
  %1053 = vmatprep.subr.bf16.mxu0 0
  %1054 = vmatpush2.bf16.msra.mxu0 0
  %1055 = vmatprep.subr.bf16.mxu0 0
  %1056 = vmatpush2.bf16.msra.mxu0 0
  %1057 = vmatprep.subr.bf16.mxu0 0
  %1058 = vmatpush2.bf16.msra.mxu0 0
  %1059 = vmatprep.subr.bf16.mxu0 0
  %1060 = vmatpush2.bf16.msra.mxu0 0
  %1061 = vmatprep.mubr.bf16.mxu0 0
  %1062 = vmatmul.mubr.bf16.gmra.mxu0 %v981
  %v1063 = vpop.f32.mrf.mxu0
  %v1064 = vadd.f32 %v639, %v1063
  %v1065 = vpop.f32.mrf.mxu0
  %v1066 = vpop.f32.mrf.mxu0
  %v1067 = vpop.f32.mrf.mxu0
  %1068 = vdwg.mxu0
  %v1069 = vadd.f32 %v985, %v1023
  %v1070 = vxor.u32 %v1069, 2147483648
  %v1071 = vmul.f32 %v1070, 1.442695
  %v1072 = vpow.pop %v1071
  %v1073 = vadd.f32 %v1072, 1.0
  %v1074 = vrcp.pop %v1073
  %v1075 = vmul.f32 1.0, %v1074
  %v1076 = vadd.f32 %v986, %v1025
  %v1077 = vxor.u32 %v1076, 2147483648
  %v1078 = vmul.f32 %v1077, 1.442695
  %v1079 = vpow.pop %v1078
  %v1080 = vadd.f32 %v1079, 1.0
  %v1081 = vrcp.pop %v1080
  %v1082 = vmul.f32 1.0, %v1081
  %v1083 = vmul.f32 %v1075, %v1064
  %v1084 = vadd.f32 %v987, %v1083
  %v1085 = vtanh.pop %v1084
  %v1086 = vsub.f32 1.0, %v1082
  %v1087 = vmul.f32 %v1086, %v1085
  %v1088 = vmul.f32 %v1082, %v980
  %v1089 = vadd.f32 %v1087, %v1088
  %v1090 = vpack.c.bf16 %v1089, %v1089
  %s1091 = scalar_lea.vmem %s7, 8
  %1092 = vst [vmem:[%s1091] sm:$0xf] %v1090
  %s1093 = scalar_lea.vmem [#allocation4], 72
  %v1094 = vld [vmem:[%s1093] sm:$0xff]
  %v1095 = vld [vmem:[%s1093 + $0x8] sm:$0xff]
  %v1096 = vld [vmem:[%s1093 + $0x10] sm:$0xff]
  %1097 = vmatprep.subr.bf16.mxu0 %v745
  %1098 = vmatpush1.bf16.msra.mxu0 %v744
  %1099 = vmatprep.subr.bf16.mxu0 %v742
  %1100 = vmatpush1.bf16.msra.mxu0 %v741
  %1101 = vmatprep.subr.bf16.mxu0 %v739
  %1102 = vmatpush1.bf16.msra.mxu0 %v738
  %1103 = vmatprep.subr.bf16.mxu0 %v736
  %1104 = vmatpush1.bf16.msra.mxu0 %v735
  %1105 = vmatprep.subr.bf16.mxu0 %v733
  %1106 = vmatpush1.bf16.msra.mxu0 %v732
  %1107 = vmatprep.subr.bf16.mxu0 %v730
  %1108 = vmatpush1.bf16.msra.mxu0 %v729
  %1109 = vmatprep.subr.bf16.mxu0 %v727
  %1110 = vmatpush1.bf16.msra.mxu0 %v726
  %1111 = vmatprep.subr.bf16.mxu0 %v724
  %1112 = vmatpush1.bf16.msra.mxu0 %v723
  %1113 = vmatprep.subr.bf16.mxu0 0
  %1114 = vmatpush2.bf16.msra.mxu0 0
  %1115 = vmatprep.subr.bf16.mxu0 0
  %1116 = vmatpush2.bf16.msra.mxu0 0
  %1117 = vmatprep.subr.bf16.mxu0 0
  %1118 = vmatpush2.bf16.msra.mxu0 0
  %1119 = vmatprep.subr.bf16.mxu0 0
  %1120 = vmatpush2.bf16.msra.mxu0 0
  %1121 = vmatprep.subr.bf16.mxu0 0
  %1122 = vmatpush2.bf16.msra.mxu0 0
  %1123 = vmatprep.subr.bf16.mxu0 0
  %1124 = vmatpush2.bf16.msra.mxu0 0
  %1125 = vmatprep.subr.bf16.mxu0 0
  %1126 = vmatpush2.bf16.msra.mxu0 0
  %1127 = vmatprep.subr.bf16.mxu0 0
  %1128 = vmatpush2.bf16.msra.mxu0 0
  %1129 = vmatprep.mubr.bf16.mxu0 0
  %1130 = vmatmul.mubr.bf16.gmra.mxu0 %v1090
  %v1131 = vpop.f32.mrf.mxu0
  %v1132 = vadd.f32 %v631, %v1131
  %v1133 = vpop.f32.mrf.mxu0
  %v1134 = vadd.f32 %v635, %v1133
  %v1135 = vpop.f32.mrf.mxu0
  %v1136 = vpop.f32.mrf.mxu0
  %1137 = vdwg.mxu0
  %1138 = vmatprep.subr.bf16.mxu0 0
  %1139 = vmatpush1.bf16.msra.mxu0 %v746
  %1140 = vmatprep.subr.bf16.mxu0 0
  %1141 = vmatpush1.bf16.msra.mxu0 %v743
  %1142 = vmatprep.subr.bf16.mxu0 0
  %1143 = vmatpush1.bf16.msra.mxu0 %v740
  %1144 = vmatprep.subr.bf16.mxu0 0
  %1145 = vmatpush1.bf16.msra.mxu0 %v737
  %1146 = vmatprep.subr.bf16.mxu0 0
  %1147 = vmatpush1.bf16.msra.mxu0 %v734
  %1148 = vmatprep.subr.bf16.mxu0 0
  %1149 = vmatpush1.bf16.msra.mxu0 %v731
  %1150 = vmatprep.subr.bf16.mxu0 0
  %1151 = vmatpush1.bf16.msra.mxu0 %v728
  %1152 = vmatprep.subr.bf16.mxu0 0
  %1153 = vmatpush1.bf16.msra.mxu0 %v725
  %1154 = vmatprep.subr.bf16.mxu0 0
  %1155 = vmatpush2.bf16.msra.mxu0 0
  %1156 = vmatprep.subr.bf16.mxu0 0
  %1157 = vmatpush2.bf16.msra.mxu0 0
  %1158 = vmatprep.subr.bf16.mxu0 0
  %1159 = vmatpush2.bf16.msra.mxu0 0
  %1160 = vmatprep.subr.bf16.mxu0 0
  %1161 = vmatpush2.bf16.msra.mxu0 0
  %1162 = vmatprep.subr.bf16.mxu0 0
  %1163 = vmatpush2.bf16.msra.mxu0 0
  %1164 = vmatprep.subr.bf16.mxu0 0
  %1165 = vmatpush2.bf16.msra.mxu0 0
  %1166 = vmatprep.subr.bf16.mxu0 0
  %1167 = vmatpush2.bf16.msra.mxu0 0
  %1168 = vmatprep.subr.bf16.mxu0 0
  %1169 = vmatpush2.bf16.msra.mxu0 0
  %1170 = vmatprep.mubr.bf16.mxu0 0
  %1171 = vmatmul.mubr.bf16.gmra.mxu0 %v1090
  %v1172 = vpop.f32.mrf.mxu0
  %v1173 = vadd.f32 %v639, %v1172
  %v1174 = vpop.f32.mrf.mxu0
  %v1175 = vpop.f32.mrf.mxu0
  %v1176 = vpop.f32.mrf.mxu0
  %1177 = vdwg.mxu0
  %v1178 = vadd.f32 %v1094, %v1132
  %v1179 = vxor.u32 %v1178, 2147483648
  %v1180 = vmul.f32 %v1179, 1.442695
  %v1181 = vpow.pop %v1180
  %v1182 = vadd.f32 %v1181, 1.0
  %v1183 = vrcp.pop %v1182
  %v1184 = vmul.f32 1.0, %v1183
  %v1185 = vadd.f32 %v1095, %v1134
  %v1186 = vxor.u32 %v1185, 2147483648
  %v1187 = vmul.f32 %v1186, 1.442695
  %v1188 = vpow.pop %v1187
  %v1189 = vadd.f32 %v1188, 1.0
  %v1190 = vrcp.pop %v1189
  %v1191 = vmul.f32 1.0, %v1190
  %v1192 = vmul.f32 %v1184, %v1173
  %v1193 = vadd.f32 %v1096, %v1192
  %v1194 = vtanh.pop %v1193
  %v1195 = vsub.f32 1.0, %v1191
  %v1196 = vmul.f32 %v1195, %v1194
  %v1197 = vmul.f32 %v1191, %v1089
  %v1198 = vadd.f32 %v1196, %v1197
  %v1199 = vpack.c.bf16 %v1198, %v1198
  %s1200 = scalar_lea.vmem %s7, 12
  %1201 = vst [vmem:[%s1200] sm:$0xf] %v1199
  %s1202 = scalar_lea.vmem [#allocation4], 96
  %v1203 = vld [vmem:[%s1202] sm:$0xff]
  %v1204 = vld [vmem:[%s1202 + $0x8] sm:$0xff]
  %v1205 = vld [vmem:[%s1202 + $0x10] sm:$0xff]
  %1206 = vmatprep.subr.bf16.mxu0 %v745
  %1207 = vmatpush1.bf16.msra.mxu0 %v744
  %1208 = vmatprep.subr.bf16.mxu0 %v742
  %1209 = vmatpush1.bf16.msra.mxu0 %v741
  %1210 = vmatprep.subr.bf16.mxu0 %v739
  %1211 = vmatpush1.bf16.msra.mxu0 %v738
  %1212 = vmatprep.subr.bf16.mxu0 %v736
  %1213 = vmatpush1.bf16.msra.mxu0 %v735
  %1214 = vmatprep.subr.bf16.mxu0 %v733
  %1215 = vmatpush1.bf16.msra.mxu0 %v732
  %1216 = vmatprep.subr.bf16.mxu0 %v730
  %1217 = vmatpush1.bf16.msra.mxu0 %v729
  %1218 = vmatprep.subr.bf16.mxu0 %v727
  %1219 = vmatpush1.bf16.msra.mxu0 %v726
  %1220 = vmatprep.subr.bf16.mxu0 %v724
  %1221 = vmatpush1.bf16.msra.mxu0 %v723
  %1222 = vmatprep.subr.bf16.mxu0 0
  %1223 = vmatpush2.bf16.msra.mxu0 0
  %1224 = vmatprep.subr.bf16.mxu0 0
  %1225 = vmatpush2.bf16.msra.mxu0 0
  %1226 = vmatprep.subr.bf16.mxu0 0
  %1227 = vmatpush2.bf16.msra.mxu0 0
  %1228 = vmatprep.subr.bf16.mxu0 0
  %1229 = vmatpush2.bf16.msra.mxu0 0
  %1230 = vmatprep.subr.bf16.mxu0 0
  %1231 = vmatpush2.bf16.msra.mxu0 0
  %1232 = vmatprep.subr.bf16.mxu0 0
  %1233 = vmatpush2.bf16.msra.mxu0 0
  %1234 = vmatprep.subr.bf16.mxu0 0
  %1235 = vmatpush2.bf16.msra.mxu0 0
  %1236 = vmatprep.subr.bf16.mxu0 0
  %1237 = vmatpush2.bf16.msra.mxu0 0
  %1238 = vmatprep.mubr.bf16.mxu0 0
  %1239 = vmatmul.mubr.bf16.gmra.mxu0 %v1199
  %v1240 = vpop.f32.mrf.mxu0
  %v1241 = vadd.f32 %v631, %v1240
  %v1242 = vpop.f32.mrf.mxu0
  %v1243 = vadd.f32 %v635, %v1242
  %v1244 = vpop.f32.mrf.mxu0
  %v1245 = vpop.f32.mrf.mxu0
  %1246 = vdwg.mxu0
  %1247 = vmatprep.subr.bf16.mxu0 0
  %1248 = vmatpush1.bf16.msra.mxu0 %v746
  %1249 = vmatprep.subr.bf16.mxu0 0
  %1250 = vmatpush1.bf16.msra.mxu0 %v743
  %1251 = vmatprep.subr.bf16.mxu0 0
  %1252 = vmatpush1.bf16.msra.mxu0 %v740
  %1253 = vmatprep.subr.bf16.mxu0 0
  %1254 = vmatpush1.bf16.msra.mxu0 %v737
  %1255 = vmatprep.subr.bf16.mxu0 0
  %1256 = vmatpush1.bf16.msra.mxu0 %v734
  %1257 = vmatprep.subr.bf16.mxu0 0
  %1258 = vmatpush1.bf16.msra.mxu0 %v731
  %1259 = vmatprep.subr.bf16.mxu0 0
  %1260 = vmatpush1.bf16.msra.mxu0 %v728
  %1261 = vmatprep.subr.bf16.mxu0 0
  %1262 = vmatpush1.bf16.msra.mxu0 %v725
  %1263 = vmatprep.subr.bf16.mxu0 0
  %1264 = vmatpush2.bf16.msra.mxu0 0
  %1265 = vmatprep.subr.bf16.mxu0 0
  %1266 = vmatpush2.bf16.msra.mxu0 0
  %1267 = vmatprep.subr.bf16.mxu0 0
  %1268 = vmatpush2.bf16.msra.mxu0 0
  %1269 = vmatprep.subr.bf16.mxu0 0
  %1270 = vmatpush2.bf16.msra.mxu0 0
  %1271 = vmatprep.subr.bf16.mxu0 0
  %1272 = vmatpush2.bf16.msra.mxu0 0
  %1273 = vmatprep.subr.bf16.mxu0 0
  %1274 = vmatpush2.bf16.msra.mxu0 0
  %1275 = vmatprep.subr.bf16.mxu0 0
  %1276 = vmatpush2.bf16.msra.mxu0 0
  %1277 = vmatprep.subr.bf16.mxu0 0
  %1278 = vmatpush2.bf16.msra.mxu0 0
  %1279 = vmatprep.mubr.bf16.mxu0 0
  %1280 = vmatmul.mubr.bf16.gmra.mxu0 %v1199
  %v1281 = vpop.f32.mrf.mxu0
  %v1282 = vadd.f32 %v639, %v1281
  %v1283 = vpop.f32.mrf.mxu0
  %v1284 = vpop.f32.mrf.mxu0
  %v1285 = vpop.f32.mrf.mxu0
  %1286 = vdwg.mxu0
  %v1287 = vadd.f32 %v1203, %v1241
  %v1288 = vxor.u32 %v1287, 2147483648
  %v1289 = vmul.f32 %v1288, 1.442695
  %v1290 = vpow.pop %v1289
  %v1291 = vadd.f32 %v1290, 1.0
  %v1292 = vrcp.pop %v1291
  %v1293 = vmul.f32 1.0, %v1292
  %v1294 = vadd.f32 %v1204, %v1243
  %v1295 = vxor.u32 %v1294, 2147483648
  %v1296 = vmul.f32 %v1295, 1.442695
  %v1297 = vpow.pop %v1296
  %v1298 = vadd.f32 %v1297, 1.0
  %v1299 = vrcp.pop %v1298
  %v1300 = vmul.f32 1.0, %v1299
  %v1301 = vmul.f32 %v1293, %v1282
  %v1302 = vadd.f32 %v1205, %v1301
  %v1303 = vtanh.pop %v1302
  %v1304 = vsub.f32 1.0, %v1300
  %v1305 = vmul.f32 %v1304, %v1303
  %v1306 = vmul.f32 %v1300, %v1198
  %v1307 = vadd.f32 %v1305, %v1306
  %v1308 = vpack.c.bf16 %v1307, %v1307
  %s1309 = scalar_lea.vmem %s7, 16
  %1310 = vst [vmem:[%s1309] sm:$0xf] %v1308
  %s1311 = scalar_lea.vmem [#allocation4], 120
  %v1312 = vld [vmem:[%s1311] sm:$0xff]
  %v1313 = vld [vmem:[%s1311 + $0x8] sm:$0xff]
  %v1314 = vld [vmem:[%s1311 + $0x10] sm:$0xff]
  %1315 = vmatprep.subr.bf16.mxu0 %v745
  %1316 = vmatpush1.bf16.msra.mxu0 %v744
  %1317 = vmatprep.subr.bf16.mxu0 %v742
  %1318 = vmatpush1.bf16.msra.mxu0 %v741
  %1319 = vmatprep.subr.bf16.mxu0 %v739
  %1320 = vmatpush1.bf16.msra.mxu0 %v738
  %1321 = vmatprep.subr.bf16.mxu0 %v736
  %1322 = vmatpush1.bf16.msra.mxu0 %v735
  %1323 = vmatprep.subr.bf16.mxu0 %v733
  %1324 = vmatpush1.bf16.msra.mxu0 %v732
  %1325 = vmatprep.subr.bf16.mxu0 %v730
  %1326 = vmatpush1.bf16.msra.mxu0 %v729
  %1327 = vmatprep.subr.bf16.mxu0 %v727
  %1328 = vmatpush1.bf16.msra.mxu0 %v726
  %1329 = vmatprep.subr.bf16.mxu0 %v724
  %1330 = vmatpush1.bf16.msra.mxu0 %v723
  %1331 = vmatprep.subr.bf16.mxu0 0
  %1332 = vmatpush2.bf16.msra.mxu0 0
  %1333 = vmatprep.subr.bf16.mxu0 0
  %1334 = vmatpush2.bf16.msra.mxu0 0
  %1335 = vmatprep.subr.bf16.mxu0 0
  %1336 = vmatpush2.bf16.msra.mxu0 0
  %1337 = vmatprep.subr.bf16.mxu0 0
  %1338 = vmatpush2.bf16.msra.mxu0 0
  %1339 = vmatprep.subr.bf16.mxu0 0
  %1340 = vmatpush2.bf16.msra.mxu0 0
  %1341 = vmatprep.subr.bf16.mxu0 0
  %1342 = vmatpush2.bf16.msra.mxu0 0
  %1343 = vmatprep.subr.bf16.mxu0 0
  %1344 = vmatpush2.bf16.msra.mxu0 0
  %1345 = vmatprep.subr.bf16.mxu0 0
  %1346 = vmatpush2.bf16.msra.mxu0 0
  %1347 = vmatprep.mubr.bf16.mxu0 0
  %1348 = vmatmul.mubr.bf16.gmra.mxu0 %v1308
  %v1349 = vpop.f32.mrf.mxu0
  %v1350 = vadd.f32 %v631, %v1349
  %v1351 = vpop.f32.mrf.mxu0
  %v1352 = vadd.f32 %v635, %v1351
  %v1353 = vpop.f32.mrf.mxu0
  %v1354 = vpop.f32.mrf.mxu0
  %1355 = vdwg.mxu0
  %1356 = vmatprep.subr.bf16.mxu0 0
  %1357 = vmatpush1.bf16.msra.mxu0 %v746
  %1358 = vmatprep.subr.bf16.mxu0 0
  %1359 = vmatpush1.bf16.msra.mxu0 %v743
  %1360 = vmatprep.subr.bf16.mxu0 0
  %1361 = vmatpush1.bf16.msra.mxu0 %v740
  %1362 = vmatprep.subr.bf16.mxu0 0
  %1363 = vmatpush1.bf16.msra.mxu0 %v737
  %1364 = vmatprep.subr.bf16.mxu0 0
  %1365 = vmatpush1.bf16.msra.mxu0 %v734
  %1366 = vmatprep.subr.bf16.mxu0 0
  %1367 = vmatpush1.bf16.msra.mxu0 %v731
  %1368 = vmatprep.subr.bf16.mxu0 0
  %1369 = vmatpush1.bf16.msra.mxu0 %v728
  %1370 = vmatprep.subr.bf16.mxu0 0
  %1371 = vmatpush1.bf16.msra.mxu0 %v725
  %1372 = vmatprep.subr.bf16.mxu0 0
  %1373 = vmatpush2.bf16.msra.mxu0 0
  %1374 = vmatprep.subr.bf16.mxu0 0
  %1375 = vmatpush2.bf16.msra.mxu0 0
  %1376 = vmatprep.subr.bf16.mxu0 0
  %1377 = vmatpush2.bf16.msra.mxu0 0
  %1378 = vmatprep.subr.bf16.mxu0 0
  %1379 = vmatpush2.bf16.msra.mxu0 0
  %1380 = vmatprep.subr.bf16.mxu0 0
  %1381 = vmatpush2.bf16.msra.mxu0 0
  %1382 = vmatprep.subr.bf16.mxu0 0
  %1383 = vmatpush2.bf16.msra.mxu0 0
  %1384 = vmatprep.subr.bf16.mxu0 0
  %1385 = vmatpush2.bf16.msra.mxu0 0
  %1386 = vmatprep.subr.bf16.mxu0 0
  %1387 = vmatpush2.bf16.msra.mxu0 0
  %1388 = vmatprep.mubr.bf16.mxu0 0
  %1389 = vmatmul.mubr.bf16.gmra.mxu0 %v1308
  %v1390 = vpop.f32.mrf.mxu0
  %v1391 = vadd.f32 %v639, %v1390
  %v1392 = vpop.f32.mrf.mxu0
  %v1393 = vpop.f32.mrf.mxu0
  %v1394 = vpop.f32.mrf.mxu0
  %1395 = vdwg.mxu0
  %v1396 = vadd.f32 %v1312, %v1350
  %v1397 = vxor.u32 %v1396, 2147483648
  %v1398 = vmul.f32 %v1397, 1.442695
  %v1399 = vpow.pop %v1398
  %v1400 = vadd.f32 %v1399, 1.0
  %v1401 = vrcp.pop %v1400
  %v1402 = vmul.f32 1.0, %v1401
  %v1403 = vadd.f32 %v1313, %v1352
  %v1404 = vxor.u32 %v1403, 2147483648
  %v1405 = vmul.f32 %v1404, 1.442695
  %v1406 = vpow.pop %v1405
  %v1407 = vadd.f32 %v1406, 1.0
  %v1408 = vrcp.pop %v1407
  %v1409 = vmul.f32 1.0, %v1408
  %v1410 = vmul.f32 %v1402, %v1391
  %v1411 = vadd.f32 %v1314, %v1410
  %v1412 = vtanh.pop %v1411
  %v1413 = vsub.f32 1.0, %v1409
  %v1414 = vmul.f32 %v1413, %v1412
  %v1415 = vmul.f32 %v1409, %v1307
  %v1416 = vadd.f32 %v1414, %v1415
  %v1417 = vpack.c.bf16 %v1416, %v1416
  %s1418 = scalar_lea.vmem %s7, 20
  %1419 = vst [vmem:[%s1418] sm:$0xf] %v1417
  %s1420 = scalar_lea.vmem [#allocation4], 144
  %v1421 = vld [vmem:[%s1420] sm:$0xff]
  %v1422 = vld [vmem:[%s1420 + $0x8] sm:$0xff]
  %v1423 = vld [vmem:[%s1420 + $0x10] sm:$0xff]
  %1424 = vmatprep.subr.bf16.mxu0 %v745
  %1425 = vmatpush1.bf16.msra.mxu0 %v744
  %1426 = vmatprep.subr.bf16.mxu0 %v742
  %1427 = vmatpush1.bf16.msra.mxu0 %v741
  %1428 = vmatprep.subr.bf16.mxu0 %v739
  %1429 = vmatpush1.bf16.msra.mxu0 %v738
  %1430 = vmatprep.subr.bf16.mxu0 %v736
  %1431 = vmatpush1.bf16.msra.mxu0 %v735
  %1432 = vmatprep.subr.bf16.mxu0 %v733
  %1433 = vmatpush1.bf16.msra.mxu0 %v732
  %1434 = vmatprep.subr.bf16.mxu0 %v730
  %1435 = vmatpush1.bf16.msra.mxu0 %v729
  %1436 = vmatprep.subr.bf16.mxu0 %v727
  %1437 = vmatpush1.bf16.msra.mxu0 %v726
  %1438 = vmatprep.subr.bf16.mxu0 %v724
  %1439 = vmatpush1.bf16.msra.mxu0 %v723
  %1440 = vmatprep.subr.bf16.mxu0 0
  %1441 = vmatpush2.bf16.msra.mxu0 0
  %1442 = vmatprep.subr.bf16.mxu0 0
  %1443 = vmatpush2.bf16.msra.mxu0 0
  %1444 = vmatprep.subr.bf16.mxu0 0
  %1445 = vmatpush2.bf16.msra.mxu0 0
  %1446 = vmatprep.subr.bf16.mxu0 0
  %1447 = vmatpush2.bf16.msra.mxu0 0
  %1448 = vmatprep.subr.bf16.mxu0 0
  %1449 = vmatpush2.bf16.msra.mxu0 0
  %1450 = vmatprep.subr.bf16.mxu0 0
  %1451 = vmatpush2.bf16.msra.mxu0 0
  %1452 = vmatprep.subr.bf16.mxu0 0
  %1453 = vmatpush2.bf16.msra.mxu0 0
  %1454 = vmatprep.subr.bf16.mxu0 0
  %1455 = vmatpush2.bf16.msra.mxu0 0
  %1456 = vmatprep.mubr.bf16.mxu0 0
  %1457 = vmatmul.mubr.bf16.gmra.mxu0 %v1417
  %v1458 = vpop.f32.mrf.mxu0
  %v1459 = vadd.f32 %v631, %v1458
  %v1460 = vpop.f32.mrf.mxu0
  %v1461 = vadd.f32 %v635, %v1460
  %v1462 = vpop.f32.mrf.mxu0
  %v1463 = vpop.f32.mrf.mxu0
  %1464 = vdwg.mxu0
  %1465 = vmatprep.subr.bf16.mxu0 0
  %1466 = vmatpush1.bf16.msra.mxu0 %v746
  %1467 = vmatprep.subr.bf16.mxu0 0
  %1468 = vmatpush1.bf16.msra.mxu0 %v743
  %1469 = vmatprep.subr.bf16.mxu0 0
  %1470 = vmatpush1.bf16.msra.mxu0 %v740
  %1471 = vmatprep.subr.bf16.mxu0 0
  %1472 = vmatpush1.bf16.msra.mxu0 %v737
  %1473 = vmatprep.subr.bf16.mxu0 0
  %1474 = vmatpush1.bf16.msra.mxu0 %v734
  %1475 = vmatprep.subr.bf16.mxu0 0
  %1476 = vmatpush1.bf16.msra.mxu0 %v731
  %1477 = vmatprep.subr.bf16.mxu0 0
  %1478 = vmatpush1.bf16.msra.mxu0 %v728
  %1479 = vmatprep.subr.bf16.mxu0 0
  %1480 = vmatpush1.bf16.msra.mxu0 %v725
  %1481 = vmatprep.subr.bf16.mxu0 0
  %1482 = vmatpush2.bf16.msra.mxu0 0
  %1483 = vmatprep.subr.bf16.mxu0 0
  %1484 = vmatpush2.bf16.msra.mxu0 0
  %1485 = vmatprep.subr.bf16.mxu0 0
  %1486 = vmatpush2.bf16.msra.mxu0 0
  %1487 = vmatprep.subr.bf16.mxu0 0
  %1488 = vmatpush2.bf16.msra.mxu0 0
  %1489 = vmatprep.subr.bf16.mxu0 0
  %1490 = vmatpush2.bf16.msra.mxu0 0
  %1491 = vmatprep.subr.bf16.mxu0 0
  %1492 = vmatpush2.bf16.msra.mxu0 0
  %1493 = vmatprep.subr.bf16.mxu0 0
  %1494 = vmatpush2.bf16.msra.mxu0 0
  %1495 = vmatprep.subr.bf16.mxu0 0
  %1496 = vmatpush2.bf16.msra.mxu0 0
  %1497 = vmatprep.mubr.bf16.mxu0 0
  %1498 = vmatmul.mubr.bf16.gmra.mxu0 %v1417
  %v1499 = vpop.f32.mrf.mxu0
  %v1500 = vadd.f32 %v639, %v1499
  %v1501 = vpop.f32.mrf.mxu0
  %v1502 = vpop.f32.mrf.mxu0
  %v1503 = vpop.f32.mrf.mxu0
  %1504 = vdwg.mxu0
  %v1505 = vadd.f32 %v1421, %v1459
  %v1506 = vxor.u32 %v1505, 2147483648
  %v1507 = vmul.f32 %v1506, 1.442695
  %v1508 = vpow.pop %v1507
  %v1509 = vadd.f32 %v1508, 1.0
  %v1510 = vrcp.pop %v1509
  %v1511 = vmul.f32 1.0, %v1510
  %v1512 = vadd.f32 %v1422, %v1461
  %v1513 = vxor.u32 %v1512, 2147483648
  %v1514 = vmul.f32 %v1513, 1.442695
  %v1515 = vpow.pop %v1514
  %v1516 = vadd.f32 %v1515, 1.0
  %v1517 = vrcp.pop %v1516
  %v1518 = vmul.f32 1.0, %v1517
  %v1519 = vmul.f32 %v1511, %v1500
  %v1520 = vadd.f32 %v1423, %v1519
  %v1521 = vtanh.pop %v1520
  %v1522 = vsub.f32 1.0, %v1518
  %v1523 = vmul.f32 %v1522, %v1521
  %v1524 = vmul.f32 %v1518, %v1416
  %v1525 = vadd.f32 %v1523, %v1524
  %v1526 = vpack.c.bf16 %v1525, %v1525
  %s1527 = scalar_lea.vmem %s7, 24
  %1528 = vst [vmem:[%s1527] sm:$0xf] %v1526
  %s1529 = scalar_lea.vmem [#allocation4], 168
  %v1530 = vld [vmem:[%s1529] sm:$0xff]
  %v1531 = vld [vmem:[%s1529 + $0x8] sm:$0xff]
  %v1532 = vld [vmem:[%s1529 + $0x10] sm:$0xff]
  %1533 = vmatprep.subr.bf16.mxu0 %v745
  %1534 = vmatpush1.bf16.msra.mxu0 %v744
  %1535 = vmatprep.subr.bf16.mxu0 %v742
  %1536 = vmatpush1.bf16.msra.mxu0 %v741
  %1537 = vmatprep.subr.bf16.mxu0 %v739
  %1538 = vmatpush1.bf16.msra.mxu0 %v738
  %1539 = vmatprep.subr.bf16.mxu0 %v736
  %1540 = vmatpush1.bf16.msra.mxu0 %v735
  %1541 = vmatprep.subr.bf16.mxu0 %v733
  %1542 = vmatpush1.bf16.msra.mxu0 %v732
  %1543 = vmatprep.subr.bf16.mxu0 %v730
  %1544 = vmatpush1.bf16.msra.mxu0 %v729
  %1545 = vmatprep.subr.bf16.mxu0 %v727
  %1546 = vmatpush1.bf16.msra.mxu0 %v726
  %1547 = vmatprep.subr.bf16.mxu0 %v724
  %1548 = vmatpush1.bf16.msra.mxu0 %v723
  %1549 = vmatprep.subr.bf16.mxu0 0
  %1550 = vmatpush2.bf16.msra.mxu0 0
  %1551 = vmatprep.subr.bf16.mxu0 0
  %1552 = vmatpush2.bf16.msra.mxu0 0
  %1553 = vmatprep.subr.bf16.mxu0 0
  %1554 = vmatpush2.bf16.msra.mxu0 0
  %1555 = vmatprep.subr.bf16.mxu0 0
  %1556 = vmatpush2.bf16.msra.mxu0 0
  %1557 = vmatprep.subr.bf16.mxu0 0
  %1558 = vmatpush2.bf16.msra.mxu0 0
  %1559 = vmatprep.subr.bf16.mxu0 0
  %1560 = vmatpush2.bf16.msra.mxu0 0
  %1561 = vmatprep.subr.bf16.mxu0 0
  %1562 = vmatpush2.bf16.msra.mxu0 0
  %1563 = vmatprep.subr.bf16.mxu0 0
  %1564 = vmatpush2.bf16.msra.mxu0 0
  %1565 = vmatprep.mubr.bf16.mxu0 0
  %1566 = vmatmul.mubr.bf16.gmra.mxu0 %v1526
  %v1567 = vpop.f32.mrf.mxu0
  %v1568 = vadd.f32 %v631, %v1567
  %v1569 = vpop.f32.mrf.mxu0
  %v1570 = vadd.f32 %v635, %v1569
  %v1571 = vpop.f32.mrf.mxu0
  %v1572 = vpop.f32.mrf.mxu0
  %1573 = vdwg.mxu0
  %1574 = vmatprep.subr.bf16.mxu0 0
  %1575 = vmatpush1.bf16.msra.mxu0 %v746
  %1576 = vmatprep.subr.bf16.mxu0 0
  %1577 = vmatpush1.bf16.msra.mxu0 %v743
  %1578 = vmatprep.subr.bf16.mxu0 0
  %1579 = vmatpush1.bf16.msra.mxu0 %v740
  %1580 = vmatprep.subr.bf16.mxu0 0
  %1581 = vmatpush1.bf16.msra.mxu0 %v737
  %1582 = vmatprep.subr.bf16.mxu0 0
  %1583 = vmatpush1.bf16.msra.mxu0 %v734
  %1584 = vmatprep.subr.bf16.mxu0 0
  %1585 = vmatpush1.bf16.msra.mxu0 %v731
  %1586 = vmatprep.subr.bf16.mxu0 0
  %1587 = vmatpush1.bf16.msra.mxu0 %v728
  %1588 = vmatprep.subr.bf16.mxu0 0
  %1589 = vmatpush1.bf16.msra.mxu0 %v725
  %1590 = vmatprep.subr.bf16.mxu0 0
  %1591 = vmatpush2.bf16.msra.mxu0 0
  %1592 = vmatprep.subr.bf16.mxu0 0
  %1593 = vmatpush2.bf16.msra.mxu0 0
  %1594 = vmatprep.subr.bf16.mxu0 0
  %1595 = vmatpush2.bf16.msra.mxu0 0
  %1596 = vmatprep.subr.bf16.mxu0 0
  %1597 = vmatpush2.bf16.msra.mxu0 0
  %1598 = vmatprep.subr.bf16.mxu0 0
  %1599 = vmatpush2.bf16.msra.mxu0 0
  %1600 = vmatprep.subr.bf16.mxu0 0
  %1601 = vmatpush2.bf16.msra.mxu0 0
  %1602 = vmatprep.subr.bf16.mxu0 0
  %1603 = vmatpush2.bf16.msra.mxu0 0
  %1604 = vmatprep.subr.bf16.mxu0 0
  %1605 = vmatpush2.bf16.msra.mxu0 0
  %1606 = vmatprep.mubr.bf16.mxu0 0
  %1607 = vmatmul.mubr.bf16.gmra.mxu0 %v1526
  %v1608 = vpop.f32.mrf.mxu0
  %v1609 = vadd.f32 %v639, %v1608
  %v1610 = vpop.f32.mrf.mxu0
  %v1611 = vpop.f32.mrf.mxu0
  %v1612 = vpop.f32.mrf.mxu0
  %1613 = vdwg.mxu0
  %v1614 = vadd.f32 %v1530, %v1568
  %v1615 = vxor.u32 %v1614, 2147483648
  %v1616 = vmul.f32 %v1615, 1.442695
  %v1617 = vpow.pop %v1616
  %v1618 = vadd.f32 %v1617, 1.0
  %v1619 = vrcp.pop %v1618
  %v1620 = vmul.f32 1.0, %v1619
  %v1621 = vadd.f32 %v1531, %v1570
  %v1622 = vxor.u32 %v1621, 2147483648
  %v1623 = vmul.f32 %v1622, 1.442695
  %v1624 = vpow.pop %v1623
  %v1625 = vadd.f32 %v1624, 1.0
  %v1626 = vrcp.pop %v1625
  %v1627 = vmul.f32 1.0, %v1626
  %v1628 = vmul.f32 %v1620, %v1609
  %v1629 = vadd.f32 %v1532, %v1628
  %v1630 = vtanh.pop %v1629
  %v1631 = vsub.f32 1.0, %v1627
  %v1632 = vmul.f32 %v1631, %v1630
  %v1633 = vmul.f32 %v1627, %v1525
  %v1634 = vadd.f32 %v1632, %v1633
  %v1635 = vpack.c.bf16 %v1634, %v1634
  %s1636 = scalar_lea.vmem %s7, 28
  %1637 = vst [vmem:[%s1636] sm:$0xf] %v1635
  %1638 = vst [vmem:[#allocation2] sm:$0xff] %v1634
  // Predicated region
  $region34: #{encoder_decoder_forward.4} parent=0 // pred_check
    _
  $region35: #{encoder_decoder_forward.4} parent=0 // pred_check_branch
    %1640 = sbr.rel (0) target = $region37
  $region36: #{encoder_decoder_forward.4} parent=0 // pred_region
    _
  $region37: #{encoder_decoder_forward.4} parent=0 // pred_fallthru
    _
  // Predicated region
  $region38: #{encoder_decoder_forward.4} parent=0 // pred_check
    _
  $region39: #{encoder_decoder_forward.4} parent=0 // pred_check_branch
    %1642 = sbr.rel (0) target = $region41
  $region40: #{encoder_decoder_forward.4} parent=0 // pred_region
    _
  $region41: #{encoder_decoder_forward.4} parent=0 // pred_fallthru
    _

</llo_original>
